<compile_context>
chip_gen: v7x
topology: tpu7x:2x2x1
jax: 0.10.0
libtpu: 0.0.40
codegen_flags: <defaults>
</compile_context>

<pallas_src>
import numpy as np
import jax
import jax.numpy as jnp
from jax.experimental import pallas as pl
from jax.experimental.pallas import tpu as pltpu

VMEM = pltpu.MemorySpace.VMEM


# ------------------------------ fused kernel --------------------------------

def fused_net_kernel(x1_ref, b1_ref, bt1_ref, b2_ref, bt2_ref,
                     w1f_ref, b1f_ref, w2f_ref, b2f_ref, w3f_ref, b3f_ref,
                     o_ref):
    """Whole forward pass, whole batch, single invocation.

    x1_ref : (8, N*7, 128) bf16   conv1 LHS row-windows: slab s holds input
                                  rows {4u+s}, lanes = w*3+ci (pad 96->128)
    b1_ref : (5, 128, 256) bf16   conv1 band per kh; out lanes dj*128+j*6+co
    b2_ref : (2, 5, 256, 256) bf16  conv2 band per (row-parity p, kh);
                                  K lanes pe*128+j*6+c, out lanes dj*128+j2*16+co
    w1f    : (640, l1) bf16       fc1 with NCHW flatten folded in (K = r*128+j2*16+c)
    """
    f32, bf16 = jnp.float32, jnp.bfloat16
    m1 = x1_ref.shape[1]            # N*7
    n_img = m1 // 7
    m2 = n_img * 5
    kk = b1_ref.shape[0]            # 5 kernel rows

    x1 = x1_ref[...]                # 28 KB, load once

    # ---- conv1 + bias + relu + 2x2 maxpool -----------------------------------
    # pooled row i = 2u+pi; conv row 2i+di needs input row 4u + (2pi+di+kh),
    # i.e. prebuilt window slab s = 2pi+di+kh.  dj is fused into the RHS lanes.
    halves = []
    for pi in range(2):
        acc = [jnp.zeros((m1, 256), f32) for _ in range(2)]
        for kh in range(kk):
            b = b1_ref[kh]                                   # (128, 256) bf16
            for di in range(2):
                acc[di] = acc[di] + jnp.dot(x1[2 * pi + di + kh], b,
                                            preferred_element_type=f32)
        a = jnp.maximum(acc[0], acc[1])                      # max over di
        halves.append(jnp.maximum(a[:, :128], a[:, 128:]))   # max over dj
    # paired layout: even pooled row in lanes [0:128], odd in [128:256]
    pre = jnp.concatenate(halves, axis=1)                    # (N*7, 256)
    p1 = jnp.maximum(pre + bt1_ref[...], 0.0).astype(bf16)

    # ---- conv2 + bias + relu + 2x2 maxpool (batched over images in M) --------
    # pooled row i2, phase di', kernel row kh need p1 row 2i2 + s (s = di'+kh):
    # paired row i2 + s//2, parity s%2 (parity selects the band's K half).
    lhs = [jnp.concatenate([p1[n * 7 + m:n * 7 + m + 5, :] for n in range(n_img)],
                           axis=0) for m in range(3)]        # each (N*5, 256)
    acc2 = [jnp.zeros((m2, 256), f32) for _ in range(2)]
    for kh in range(kk):
        for di in range(2):
            s = di + kh
            acc2[di] = acc2[di] + jnp.dot(lhs[s // 2], b2_ref[s % 2, kh],
                                          preferred_element_type=f32)
    a2 = jnp.maximum(acc2[0], acc2[1])                       # max over di'
    a2 = jnp.maximum(a2[:, :128], a2[:, 128:])               # max over dj'
    p2 = jnp.maximum(a2 + bt2_ref[...], 0.0)                 # (N*5, 128), [0:80] valid

    # ---- flatten (NCHW order folded into w1f) + fc1/fc2/fc3 -------------------
    imgs = []
    for n in range(n_img):
        rows = [p2[n * 5 + r:n * 5 + r + 1, :] for r in range(5)]
        imgs.append(jnp.concatenate(rows, axis=1))           # (1, 640), 128-aligned
    fc_in = jnp.concatenate(imgs, axis=0).astype(bf16)       # (N, 640)

    h = jnp.maximum(jnp.dot(fc_in, w1f_ref[...],
                            preferred_element_type=f32) + b1f_ref[...], 0.0)
    h = jnp.maximum(jnp.dot(h.astype(bf16), w2f_ref[...],
                            preferred_element_type=f32) + b2f_ref[...], 0.0)
    o_ref[...] = (jnp.dot(h.astype(bf16), w3f_ref[...],
                          preferred_element_type=f32) + b3f_ref[...]
                  ).astype(o_ref.dtype)


# ------------------------------ entry point ---------------------------------

@jax.jit
def net_forward(x_nchw, prep):
    n, c, h, w = x_nchw.shape                                # (N, 3, 32, 32)
    # NCHW -> rows x (w*Cin) lanes, pad 96 -> 128 lanes; then prebuild the 8
    # stride-4 row windows (rows 4u+s, u=0..6) the kernel needs.  Tiny XLA glue.
    x = jnp.transpose(x_nchw, (0, 2, 3, 1)).reshape(n, h, w * c)
    x = jnp.pad(x, ((0, 0), (0, 0), (0, 128 - w * c)))
    wins = [x[:, s:s + 25:4, :].reshape(n * 7, 128) for s in range(8)]
    x1 = jnp.stack(wins, axis=0).astype(jnp.bfloat16)        # (8, N*7, 128)

    n_cls = prep["w3f"].shape[1]
    return pl.pallas_call(
        fused_net_kernel,
        out_shape=jax.ShapeDtypeStruct((n, n_cls), jnp.float32),
        in_specs=[pl.BlockSpec(memory_space=VMEM)] * 11,
        out_specs=pl.BlockSpec(memory_space=VMEM),
    )(x1, prep["b1"], prep["bt1"], prep["b2"], prep["bt2"],
      prep["w1f"], prep["b1f"], prep["w2f"], prep["b2f"],
      prep["w3f"], prep["b3f"])


# ------------------------- one-time weight repacking -------------------------

def prepare_params(params):
    """Repack PyTorch-layout weights into the fused kernel's layouts (host)."""
    w1 = np.asarray(params["conv1_w"], np.float32)   # (6, 3, 5, 5)
    b1 = np.asarray(params["conv1_b"], np.float32)
    w2 = np.asarray(params["conv2_w"], np.float32)   # (16, 6, 5, 5)
    b2 = np.asarray(params["conv2_b"], np.float32)
    wf1 = np.asarray(params["fc1_w"], np.float32)    # (l1, 400)
    wf2 = np.asarray(params["fc2_w"], np.float32)    # (l2, l1)
    wf3 = np.asarray(params["fc3_w"], np.float32)    # (10, l2)
    l1 = wf1.shape[0]

    # conv1 band (5, 128, 256): K lanes = w*3+ci (96 valid), out = dj*128+j*6+co.
    band1 = np.zeros((5, 128, 256), np.float32)
    for kh in range(5):
        for dj in range(2):
            for j in range(14):
                for kw in range(5):
                    wi = 2 * j + dj + kw                      # input col, < 32
                    band1[kh, wi * 3:(wi + 1) * 3,
                          dj * 128 + j * 6:dj * 128 + (j + 1) * 6] = w1[:, :, kh, kw].T
    bt1 = np.zeros((1, 256), np.float32)
    bt1[0, 0:84] = np.tile(b1, 14)
    bt1[0, 128:212] = np.tile(b1, 14)

    # conv2 band (2, 5, 256, 256): p = which half (even/odd paired p1 row) of the
    # K lanes carries weights; K lanes = p*128 + j*6 + c, out = dj*128 + j2*16 + co.
    band2 = np.zeros((2, 5, 256, 256), np.float32)
    for p in range(2):
        for kh in range(5):
            for dj in range(2):
                for j2 in range(5):
                    for kw in range(5):
                        j = 2 * j2 + dj + kw                  # p1 col, < 14
                        band2[p, kh, p * 128 + j * 6:p * 128 + (j + 1) * 6,
                              dj * 128 + j2 * 16:dj * 128 + (j2 + 1) * 16] = \
                            w2[:, :, kh, kw].T
    bt2 = np.zeros((1, 128), np.float32)
    bt2[0, 0:80] = np.tile(b2, 5)

    # fc1: fold PyTorch's NCHW flatten (c*25 + r*5 + j2) into a (640, l1) weight
    # matching the kernel's lane-concatenated p2 rows (K index = r*128 + j2*16 + c).
    w1f = np.zeros((640, l1), np.float32)
    for r in range(5):
        for j2 in range(5):
            for c in range(16):
                w1f[r * 128 + j2 * 16 + c, :] = wf1[:, c * 25 + r * 5 + j2]

    bf16 = jnp.bfloat16
    return {
        "b1": jnp.asarray(band1, bf16),
        "bt1": jnp.asarray(bt1, jnp.float32),
        "b2": jnp.asarray(band2, bf16),
        "bt2": jnp.asarray(bt2, jnp.float32),
        "w1f": jnp.asarray(w1f, bf16),
        "b1f": jnp.asarray(np.asarray(params["fc1_b"], np.float32)[None, :]),
        "w2f": jnp.asarray(wf2.T, bf16),
        "b2f": jnp.asarray(np.asarray(params["fc2_b"], np.float32)[None, :]),
        "w3f": jnp.asarray(wf3.T, bf16),
        "b3f": jnp.asarray(np.asarray(params["fc3_b"], np.float32)[None, :]),
    }


# ------------------------------ params & reference ---------------------------

def init_params(key, l1=8, l2=16):
    ks = jax.random.split(key, 10)

    def u(k, shape, fan_in):
        bound = 1.0 / (fan_in ** 0.5)
        return jax.random.uniform(k, shape, jnp.float32, -bound, bound)

    return {  # PyTorch layouts: conv (Cout,Cin,kh,kw), fc (out,in)
        "conv1_w": u(ks[0], (6, 3, 5, 5), 3 * 25),
        "conv1_b": u(ks[1], (6,), 3 * 25),
        "conv2_w": u(ks[2], (16, 6, 5, 5), 6 * 25),
        "conv2_b": u(ks[3], (16,), 6 * 25),
        "fc1_w": u(ks[4], (l1, 400), 400),
        "fc1_b": u(ks[5], (l1,), 400),
        "fc2_w": u(ks[6], (l2, l1), l1),
        "fc2_b": u(ks[7], (l2,), l1),
        "fc3_w": u(ks[8], (10, l2), l2),
        "fc3_b": u(ks[9], (10,), l2),
    }


def reference_forward(x, params):
    hp = jax.lax.Precision.HIGHEST

    def conv(x, w, b):
        y = jax.lax.conv_general_dilated(
            x, w, window_strides=(1, 1), padding="VALID",
            dimension_numbers=("NCHW", "OIHW", "NCHW"), precision=hp)
        return y + b[None, :, None, None]

    def pool(x):
        return jax.lax.reduce_window(x, -jnp.inf, jax.lax.max,
                                     (1, 1, 2, 2), (1, 1, 2, 2), "VALID")

    x = pool(jax.nn.relu(conv(x, params["conv1_w"], params["conv1_b"])))
    x = pool(jax.nn.relu(conv(x, params["conv2_w"], params["conv2_b"])))
    x = x.reshape(x.shape[0], -1)
    x = jax.nn.relu(jnp.dot(x, params["fc1_w"].T, precision=hp) + params["fc1_b"])
    x = jax.nn.relu(jnp.dot(x, params["fc2_w"].T, precision=hp) + params["fc2_b"])
    return jnp.dot(x, params["fc3_w"].T, precision=hp) + params["fc3_b"]


# ---------------------------------- main -------------------------------------

if __name__ == "__main__":
    key = jax.random.PRNGKey(0)
    k_x, k_p = jax.random.split(key)
    # smallest shape consistent with the forward (16*5*5 flatten => 32x32 input)
    x = jax.random.normal(k_x, (2, 3, 32, 32), jnp.float32)
    params = init_params(k_p, l1=8, l2=16)
    prep = prepare_params(params)          # one-time host-side weight repack

    out = jax.block_until_ready(net_forward(x, prep))
    assert out.shape == (2, 10) and out.dtype == jnp.float32, (out.shape, out.dtype)

    ref = jax.block_until_ready(reference_forward(x, params))
    max_err = float(jnp.max(jnp.abs(out - ref)))
    assert jnp.allclose(out, ref, rtol=5e-2, atol=5e-2), f"max |diff| = {max_err}"
    print("KERNEL_OK")
</pallas_src>

<mosaic_0001>
module attributes {stable_mosaic.version = 11 : i64} {
  func.func @fused_net_kernel(%arg0: memref<8x14x128xbf16, #tpu.memory_space<vmem>>, %arg1: memref<5x128x256xbf16, #tpu.memory_space<vmem>>, %arg2: memref<1x256xf32, #tpu.memory_space<vmem>>, %arg3: memref<2x5x256x256xbf16, #tpu.memory_space<vmem>>, %arg4: memref<1x128xf32, #tpu.memory_space<vmem>>, %arg5: memref<640x8xbf16, #tpu.memory_space<vmem>>, %arg6: memref<1x8xf32, #tpu.memory_space<vmem>>, %arg7: memref<8x16xbf16, #tpu.memory_space<vmem>>, %arg8: memref<1x16xf32, #tpu.memory_space<vmem>>, %arg9: memref<16x10xbf16, #tpu.memory_space<vmem>>, %arg10: memref<1x10xf32, #tpu.memory_space<vmem>>, %arg11: memref<2x10xf32, #tpu.memory_space<vmem>>) attributes {dimension_semantics = [], scalar_prefetch = 0 : i64, scratch_operands = 0 : i64, tpu.core_type = #tpu.core_type<tc>} {
    %c0 = arith.constant 0 : index
    %c0_0 = arith.constant 0 : index
    %c0_1 = arith.constant 0 : index
    %0 = vector.load %arg0[%c0, %c0_0, %c0_1] : memref<8x14x128xbf16, #tpu.memory_space<vmem>>, vector<8x14x128xbf16>
    %cst = arith.constant 0.000000e+00 : f32
    %1 = vector.broadcast %cst : f32 to vector<14x256xf32>
    %cst_2 = arith.constant 0.000000e+00 : f32
    %2 = vector.broadcast %cst_2 : f32 to vector<14x256xf32>
    %c0_3 = arith.constant 0 : index
    %c0_4 = arith.constant 0 : index
    %c0_5 = arith.constant 0 : index
    %3 = vector.load %arg1[%c0_3, %c0_4, %c0_5] : memref<5x128x256xbf16, #tpu.memory_space<vmem>>, vector<1x128x256xbf16>
    %4 = vector.shape_cast %3 : vector<1x128x256xbf16> to vector<128x256xbf16>
    %5 = vector.extract_strided_slice %0 {offsets = [0, 0, 0], sizes = [1, 14, 128], strides = [1, 1, 1]} : vector<8x14x128xbf16> to vector<1x14x128xbf16>
    %6 = vector.shape_cast %5 : vector<1x14x128xbf16> to vector<14x128xbf16>
    %cst_6 = arith.constant dense<0.000000e+00> : vector<14x256xf32>
    %7 = tpu.matmul %6, %4, %cst_6 {dimension_numbers = #tpu.dot_dimension_numbers<[1], [0], [0], [1], [0, 0, 1, 1], [], []>} : vector<14x128xbf16>, vector<128x256xbf16>, vector<14x256xf32> -> vector<14x256xf32>
    %8 = arith.addf %1, %7 : vector<14x256xf32>
    %9 = vector.extract_strided_slice %0 {offsets = [1, 0, 0], sizes = [1, 14, 128], strides = [1, 1, 1]} : vector<8x14x128xbf16> to vector<1x14x128xbf16>
    %10 = vector.shape_cast %9 : vector<1x14x128xbf16> to vector<14x128xbf16>
    %cst_7 = arith.constant dense<0.000000e+00> : vector<14x256xf32>
    %11 = tpu.matmul %10, %4, %cst_7 {dimension_numbers = #tpu.dot_dimension_numbers<[1], [0], [0], [1], [0, 0, 1, 1], [], []>} : vector<14x128xbf16>, vector<128x256xbf16>, vector<14x256xf32> -> vector<14x256xf32>
    %12 = arith.addf %2, %11 : vector<14x256xf32>
    %c1 = arith.constant 1 : index
    %c0_8 = arith.constant 0 : index
    %c0_9 = arith.constant 0 : index
    %13 = vector.load %arg1[%c1, %c0_8, %c0_9] : memref<5x128x256xbf16, #tpu.memory_space<vmem>>, vector<1x128x256xbf16>
    %14 = vector.shape_cast %13 : vector<1x128x256xbf16> to vector<128x256xbf16>
    %15 = vector.extract_strided_slice %0 {offsets = [1, 0, 0], sizes = [1, 14, 128], strides = [1, 1, 1]} : vector<8x14x128xbf16> to vector<1x14x128xbf16>
    %16 = vector.shape_cast %15 : vector<1x14x128xbf16> to vector<14x128xbf16>
    %cst_10 = arith.constant dense<0.000000e+00> : vector<14x256xf32>
    %17 = tpu.matmul %16, %14, %cst_10 {dimension_numbers = #tpu.dot_dimension_numbers<[1], [0], [0], [1], [0, 0, 1, 1], [], []>} : vector<14x128xbf16>, vector<128x256xbf16>, vector<14x256xf32> -> vector<14x256xf32>
    %18 = arith.addf %8, %17 : vector<14x256xf32>
    %19 = vector.extract_strided_slice %0 {offsets = [2, 0, 0], sizes = [1, 14, 128], strides = [1, 1, 1]} : vector<8x14x128xbf16> to vector<1x14x128xbf16>
    %20 = vector.shape_cast %19 : vector<1x14x128xbf16> to vector<14x128xbf16>
    %cst_11 = arith.constant dense<0.000000e+00> : vector<14x256xf32>
    %21 = tpu.matmul %20, %14, %cst_11 {dimension_numbers = #tpu.dot_dimension_numbers<[1], [0], [0], [1], [0, 0, 1, 1], [], []>} : vector<14x128xbf16>, vector<128x256xbf16>, vector<14x256xf32> -> vector<14x256xf32>
    %22 = arith.addf %12, %21 : vector<14x256xf32>
    %c2 = arith.constant 2 : index
    %c0_12 = arith.constant 0 : index
    %c0_13 = arith.constant 0 : index
    %23 = vector.load %arg1[%c2, %c0_12, %c0_13] : memref<5x128x256xbf16, #tpu.memory_space<vmem>>, vector<1x128x256xbf16>
    %24 = vector.shape_cast %23 : vector<1x128x256xbf16> to vector<128x256xbf16>
    %25 = vector.extract_strided_slice %0 {offsets = [2, 0, 0], sizes = [1, 14, 128], strides = [1, 1, 1]} : vector<8x14x128xbf16> to vector<1x14x128xbf16>
    %26 = vector.shape_cast %25 : vector<1x14x128xbf16> to vector<14x128xbf16>
    %cst_14 = arith.constant dense<0.000000e+00> : vector<14x256xf32>
    %27 = tpu.matmul %26, %24, %cst_14 {dimension_numbers = #tpu.dot_dimension_numbers<[1], [0], [0], [1], [0, 0, 1, 1], [], []>} : vector<14x128xbf16>, vector<128x256xbf16>, vector<14x256xf32> -> vector<14x256xf32>
    %28 = arith.addf %18, %27 : vector<14x256xf32>
    %29 = vector.extract_strided_slice %0 {offsets = [3, 0, 0], sizes = [1, 14, 128], strides = [1, 1, 1]} : vector<8x14x128xbf16> to vector<1x14x128xbf16>
    %30 = vector.shape_cast %29 : vector<1x14x128xbf16> to vector<14x128xbf16>
    %cst_15 = arith.constant dense<0.000000e+00> : vector<14x256xf32>
    %31 = tpu.matmul %30, %24, %cst_15 {dimension_numbers = #tpu.dot_dimension_numbers<[1], [0], [0], [1], [0, 0, 1, 1], [], []>} : vector<14x128xbf16>, vector<128x256xbf16>, vector<14x256xf32> -> vector<14x256xf32>
    %32 = arith.addf %22, %31 : vector<14x256xf32>
    %c3 = arith.constant 3 : index
    %c0_16 = arith.constant 0 : index
    %c0_17 = arith.constant 0 : index
    %33 = vector.load %arg1[%c3, %c0_16, %c0_17] : memref<5x128x256xbf16, #tpu.memory_space<vmem>>, vector<1x128x256xbf16>
    %34 = vector.shape_cast %33 : vector<1x128x256xbf16> to vector<128x256xbf16>
    %35 = vector.extract_strided_slice %0 {offsets = [3, 0, 0], sizes = [1, 14, 128], strides = [1, 1, 1]} : vector<8x14x128xbf16> to vector<1x14x128xbf16>
    %36 = vector.shape_cast %35 : vector<1x14x128xbf16> to vector<14x128xbf16>
    %cst_18 = arith.constant dense<0.000000e+00> : vector<14x256xf32>
    %37 = tpu.matmul %36, %34, %cst_18 {dimension_numbers = #tpu.dot_dimension_numbers<[1], [0], [0], [1], [0, 0, 1, 1], [], []>} : vector<14x128xbf16>, vector<128x256xbf16>, vector<14x256xf32> -> vector<14x256xf32>
    %38 = arith.addf %28, %37 : vector<14x256xf32>
    %39 = vector.extract_strided_slice %0 {offsets = [4, 0, 0], sizes = [1, 14, 128], strides = [1, 1, 1]} : vector<8x14x128xbf16> to vector<1x14x128xbf16>
    %40 = vector.shape_cast %39 : vector<1x14x128xbf16> to vector<14x128xbf16>
    %cst_19 = arith.constant dense<0.000000e+00> : vector<14x256xf32>
    %41 = tpu.matmul %40, %34, %cst_19 {dimension_numbers = #tpu.dot_dimension_numbers<[1], [0], [0], [1], [0, 0, 1, 1], [], []>} : vector<14x128xbf16>, vector<128x256xbf16>, vector<14x256xf32> -> vector<14x256xf32>
    %42 = arith.addf %32, %41 : vector<14x256xf32>
    %c4 = arith.constant 4 : index
    %c0_20 = arith.constant 0 : index
    %c0_21 = arith.constant 0 : index
    %43 = vector.load %arg1[%c4, %c0_20, %c0_21] : memref<5x128x256xbf16, #tpu.memory_space<vmem>>, vector<1x128x256xbf16>
    %44 = vector.shape_cast %43 : vector<1x128x256xbf16> to vector<128x256xbf16>
    %45 = vector.extract_strided_slice %0 {offsets = [4, 0, 0], sizes = [1, 14, 128], strides = [1, 1, 1]} : vector<8x14x128xbf16> to vector<1x14x128xbf16>
    %46 = vector.shape_cast %45 : vector<1x14x128xbf16> to vector<14x128xbf16>
    %cst_22 = arith.constant dense<0.000000e+00> : vector<14x256xf32>
    %47 = tpu.matmul %46, %44, %cst_22 {dimension_numbers = #tpu.dot_dimension_numbers<[1], [0], [0], [1], [0, 0, 1, 1], [], []>} : vector<14x128xbf16>, vector<128x256xbf16>, vector<14x256xf32> -> vector<14x256xf32>
    %48 = arith.addf %38, %47 : vector<14x256xf32>
    %49 = vector.extract_strided_slice %0 {offsets = [5, 0, 0], sizes = [1, 14, 128], strides = [1, 1, 1]} : vector<8x14x128xbf16> to vector<1x14x128xbf16>
    %50 = vector.shape_cast %49 : vector<1x14x128xbf16> to vector<14x128xbf16>
    %cst_23 = arith.constant dense<0.000000e+00> : vector<14x256xf32>
    %51 = tpu.matmul %50, %44, %cst_23 {dimension_numbers = #tpu.dot_dimension_numbers<[1], [0], [0], [1], [0, 0, 1, 1], [], []>} : vector<14x128xbf16>, vector<128x256xbf16>, vector<14x256xf32> -> vector<14x256xf32>
    %52 = arith.addf %42, %51 : vector<14x256xf32>
    %53 = arith.maximumf %48, %52 : vector<14x256xf32>
    %54 = vector.extract_strided_slice %53 {offsets = [0, 0], sizes = [14, 128], strides = [1, 1]} : vector<14x256xf32> to vector<14x128xf32>
    %55 = vector.extract_strided_slice %53 {offsets = [0, 128], sizes = [14, 128], strides = [1, 1]} : vector<14x256xf32> to vector<14x128xf32>
    %56 = arith.maximumf %54, %55 : vector<14x128xf32>
    %cst_24 = arith.constant 0.000000e+00 : f32
    %57 = vector.broadcast %cst_24 : f32 to vector<14x256xf32>
    %cst_25 = arith.constant 0.000000e+00 : f32
    %58 = vector.broadcast %cst_25 : f32 to vector<14x256xf32>
    %c0_26 = arith.constant 0 : index
    %c0_27 = arith.constant 0 : index
    %c0_28 = arith.constant 0 : index
    %59 = vector.load %arg1[%c0_26, %c0_27, %c0_28] : memref<5x128x256xbf16, #tpu.memory_space<vmem>>, vector<1x128x256xbf16>
    %60 = vector.shape_cast %59 : vector<1x128x256xbf16> to vector<128x256xbf16>
    %61 = vector.extract_strided_slice %0 {offsets = [2, 0, 0], sizes = [1, 14, 128], strides = [1, 1, 1]} : vector<8x14x128xbf16> to vector<1x14x128xbf16>
    %62 = vector.shape_cast %61 : vector<1x14x128xbf16> to vector<14x128xbf16>
    %cst_29 = arith.constant dense<0.000000e+00> : vector<14x256xf32>
    %63 = tpu.matmul %62, %60, %cst_29 {dimension_numbers = #tpu.dot_dimension_numbers<[1], [0], [0], [1], [0, 0, 1, 1], [], []>} : vector<14x128xbf16>, vector<128x256xbf16>, vector<14x256xf32> -> vector<14x256xf32>
    %64 = arith.addf %57, %63 : vector<14x256xf32>
    %65 = vector.extract_strided_slice %0 {offsets = [3, 0, 0], sizes = [1, 14, 128], strides = [1, 1, 1]} : vector<8x14x128xbf16> to vector<1x14x128xbf16>
    %66 = vector.shape_cast %65 : vector<1x14x128xbf16> to vector<14x128xbf16>
    %cst_30 = arith.constant dense<0.000000e+00> : vector<14x256xf32>
    %67 = tpu.matmul %66, %60, %cst_30 {dimension_numbers = #tpu.dot_dimension_numbers<[1], [0], [0], [1], [0, 0, 1, 1], [], []>} : vector<14x128xbf16>, vector<128x256xbf16>, vector<14x256xf32> -> vector<14x256xf32>
    %68 = arith.addf %58, %67 : vector<14x256xf32>
    %c1_31 = arith.constant 1 : index
    %c0_32 = arith.constant 0 : index
    %c0_33 = arith.constant 0 : index
    %69 = vector.load %arg1[%c1_31, %c0_32, %c0_33] : memref<5x128x256xbf16, #tpu.memory_space<vmem>>, vector<1x128x256xbf16>
    %70 = vector.shape_cast %69 : vector<1x128x256xbf16> to vector<128x256xbf16>
    %71 = vector.extract_strided_slice %0 {offsets = [3, 0, 0], sizes = [1, 14, 128], strides = [1, 1, 1]} : vector<8x14x128xbf16> to vector<1x14x128xbf16>
    %72 = vector.shape_cast %71 : vector<1x14x128xbf16> to vector<14x128xbf16>
    %cst_34 = arith.constant dense<0.000000e+00> : vector<14x256xf32>
    %73 = tpu.matmul %72, %70, %cst_34 {dimension_numbers = #tpu.dot_dimension_numbers<[1], [0], [0], [1], [0, 0, 1, 1], [], []>} : vector<14x128xbf16>, vector<128x256xbf16>, vector<14x256xf32> -> vector<14x256xf32>
    %74 = arith.addf %64, %73 : vector<14x256xf32>
    %75 = vector.extract_strided_slice %0 {offsets = [4, 0, 0], sizes = [1, 14, 128], strides = [1, 1, 1]} : vector<8x14x128xbf16> to vector<1x14x128xbf16>
    %76 = vector.shape_cast %75 : vector<1x14x128xbf16> to vector<14x128xbf16>
    %cst_35 = arith.constant dense<0.000000e+00> : vector<14x256xf32>
    %77 = tpu.matmul %76, %70, %cst_35 {dimension_numbers = #tpu.dot_dimension_numbers<[1], [0], [0], [1], [0, 0, 1, 1], [], []>} : vector<14x128xbf16>, vector<128x256xbf16>, vector<14x256xf32> -> vector<14x256xf32>
    %78 = arith.addf %68, %77 : vector<14x256xf32>
    %c2_36 = arith.constant 2 : index
    %c0_37 = arith.constant 0 : index
    %c0_38 = arith.constant 0 : index
    %79 = vector.load %arg1[%c2_36, %c0_37, %c0_38] : memref<5x128x256xbf16, #tpu.memory_space<vmem>>, vector<1x128x256xbf16>
    %80 = vector.shape_cast %79 : vector<1x128x256xbf16> to vector<128x256xbf16>
    %81 = vector.extract_strided_slice %0 {offsets = [4, 0, 0], sizes = [1, 14, 128], strides = [1, 1, 1]} : vector<8x14x128xbf16> to vector<1x14x128xbf16>
    %82 = vector.shape_cast %81 : vector<1x14x128xbf16> to vector<14x128xbf16>
    %cst_39 = arith.constant dense<0.000000e+00> : vector<14x256xf32>
    %83 = tpu.matmul %82, %80, %cst_39 {dimension_numbers = #tpu.dot_dimension_numbers<[1], [0], [0], [1], [0, 0, 1, 1], [], []>} : vector<14x128xbf16>, vector<128x256xbf16>, vector<14x256xf32> -> vector<14x256xf32>
    %84 = arith.addf %74, %83 : vector<14x256xf32>
    %85 = vector.extract_strided_slice %0 {offsets = [5, 0, 0], sizes = [1, 14, 128], strides = [1, 1, 1]} : vector<8x14x128xbf16> to vector<1x14x128xbf16>
    %86 = vector.shape_cast %85 : vector<1x14x128xbf16> to vector<14x128xbf16>
    %cst_40 = arith.constant dense<0.000000e+00> : vector<14x256xf32>
    %87 = tpu.matmul %86, %80, %cst_40 {dimension_numbers = #tpu.dot_dimension_numbers<[1], [0], [0], [1], [0, 0, 1, 1], [], []>} : vector<14x128xbf16>, vector<128x256xbf16>, vector<14x256xf32> -> vector<14x256xf32>
    %88 = arith.addf %78, %87 : vector<14x256xf32>
    %c3_41 = arith.constant 3 : index
    %c0_42 = arith.constant 0 : index
    %c0_43 = arith.constant 0 : index
    %89 = vector.load %arg1[%c3_41, %c0_42, %c0_43] : memref<5x128x256xbf16, #tpu.memory_space<vmem>>, vector<1x128x256xbf16>
    %90 = vector.shape_cast %89 : vector<1x128x256xbf16> to vector<128x256xbf16>
    %91 = vector.extract_strided_slice %0 {offsets = [5, 0, 0], sizes = [1, 14, 128], strides = [1, 1, 1]} : vector<8x14x128xbf16> to vector<1x14x128xbf16>
    %92 = vector.shape_cast %91 : vector<1x14x128xbf16> to vector<14x128xbf16>
    %cst_44 = arith.constant dense<0.000000e+00> : vector<14x256xf32>
    %93 = tpu.matmul %92, %90, %cst_44 {dimension_numbers = #tpu.dot_dimension_numbers<[1], [0], [0], [1], [0, 0, 1, 1], [], []>} : vector<14x128xbf16>, vector<128x256xbf16>, vector<14x256xf32> -> vector<14x256xf32>
    %94 = arith.addf %84, %93 : vector<14x256xf32>
    %95 = vector.extract_strided_slice %0 {offsets = [6, 0, 0], sizes = [1, 14, 128], strides = [1, 1, 1]} : vector<8x14x128xbf16> to vector<1x14x128xbf16>
    %96 = vector.shape_cast %95 : vector<1x14x128xbf16> to vector<14x128xbf16>
    %cst_45 = arith.constant dense<0.000000e+00> : vector<14x256xf32>
    %97 = tpu.matmul %96, %90, %cst_45 {dimension_numbers = #tpu.dot_dimension_numbers<[1], [0], [0], [1], [0, 0, 1, 1], [], []>} : vector<14x128xbf16>, vector<128x256xbf16>, vector<14x256xf32> -> vector<14x256xf32>
    %98 = arith.addf %88, %97 : vector<14x256xf32>
    %c4_46 = arith.constant 4 : index
    %c0_47 = arith.constant 0 : index
    %c0_48 = arith.constant 0 : index
    %99 = vector.load %arg1[%c4_46, %c0_47, %c0_48] : memref<5x128x256xbf16, #tpu.memory_space<vmem>>, vector<1x128x256xbf16>
    %100 = vector.shape_cast %99 : vector<1x128x256xbf16> to vector<128x256xbf16>
    %101 = vector.extract_strided_slice %0 {offsets = [6, 0, 0], sizes = [1, 14, 128], strides = [1, 1, 1]} : vector<8x14x128xbf16> to vector<1x14x128xbf16>
    %102 = vector.shape_cast %101 : vector<1x14x128xbf16> to vector<14x128xbf16>
    %cst_49 = arith.constant dense<0.000000e+00> : vector<14x256xf32>
    %103 = tpu.matmul %102, %100, %cst_49 {dimension_numbers = #tpu.dot_dimension_numbers<[1], [0], [0], [1], [0, 0, 1, 1], [], []>} : vector<14x128xbf16>, vector<128x256xbf16>, vector<14x256xf32> -> vector<14x256xf32>
    %104 = arith.addf %94, %103 : vector<14x256xf32>
    %105 = vector.extract_strided_slice %0 {offsets = [7, 0, 0], sizes = [1, 14, 128], strides = [1, 1, 1]} : vector<8x14x128xbf16> to vector<1x14x128xbf16>
    %106 = vector.shape_cast %105 : vector<1x14x128xbf16> to vector<14x128xbf16>
    %cst_50 = arith.constant dense<0.000000e+00> : vector<14x256xf32>
    %107 = tpu.matmul %106, %100, %cst_50 {dimension_numbers = #tpu.dot_dimension_numbers<[1], [0], [0], [1], [0, 0, 1, 1], [], []>} : vector<14x128xbf16>, vector<128x256xbf16>, vector<14x256xf32> -> vector<14x256xf32>
    %108 = arith.addf %98, %107 : vector<14x256xf32>
    %109 = arith.maximumf %104, %108 : vector<14x256xf32>
    %110 = vector.extract_strided_slice %109 {offsets = [0, 0], sizes = [14, 128], strides = [1, 1]} : vector<14x256xf32> to vector<14x128xf32>
    %111 = vector.extract_strided_slice %109 {offsets = [0, 128], sizes = [14, 128], strides = [1, 1]} : vector<14x256xf32> to vector<14x128xf32>
    %112 = arith.maximumf %110, %111 : vector<14x128xf32>
    %113 = tpu.concatenate %56, %112 in 1 : vector<14x128xf32>, vector<14x128xf32> -> vector<14x256xf32>
    %c0_51 = arith.constant 0 : index
    %c0_52 = arith.constant 0 : index
    %114 = vector.load %arg2[%c0_51, %c0_52] : memref<1x256xf32, #tpu.memory_space<vmem>>, vector<1x256xf32>
    %115 = vector.broadcast %114 : vector<1x256xf32> to vector<14x256xf32>
    %116 = arith.addf %113, %115 : vector<14x256xf32>
    %cst_53 = arith.constant 0.000000e+00 : f32
    %117 = vector.broadcast %cst_53 : f32 to vector<14x256xf32>
    %118 = arith.maximumf %116, %117 : vector<14x256xf32>
    %119 = arith.truncf %118 : vector<14x256xf32> to vector<14x256xbf16>
    %120 = vector.extract_strided_slice %119 {offsets = [0, 0], sizes = [5, 256], strides = [1, 1]} : vector<14x256xbf16> to vector<5x256xbf16>
    %121 = vector.extract_strided_slice %119 {offsets = [7, 0], sizes = [5, 256], strides = [1, 1]} : vector<14x256xbf16> to vector<5x256xbf16>
    %122 = tpu.concatenate %120, %121 in 0 : vector<5x256xbf16>, vector<5x256xbf16> -> vector<10x256xbf16>
    %123 = vector.extract_strided_slice %119 {offsets = [1, 0], sizes = [5, 256], strides = [1, 1]} : vector<14x256xbf16> to vector<5x256xbf16>
    %124 = vector.extract_strided_slice %119 {offsets = [8, 0], sizes = [5, 256], strides = [1, 1]} : vector<14x256xbf16> to vector<5x256xbf16>
    %125 = tpu.concatenate %123, %124 in 0 : vector<5x256xbf16>, vector<5x256xbf16> -> vector<10x256xbf16>
    %126 = vector.extract_strided_slice %119 {offsets = [2, 0], sizes = [5, 256], strides = [1, 1]} : vector<14x256xbf16> to vector<5x256xbf16>
    %127 = vector.extract_strided_slice %119 {offsets = [9, 0], sizes = [5, 256], strides = [1, 1]} : vector<14x256xbf16> to vector<5x256xbf16>
    %128 = tpu.concatenate %126, %127 in 0 : vector<5x256xbf16>, vector<5x256xbf16> -> vector<10x256xbf16>
    %cst_54 = arith.constant 0.000000e+00 : f32
    %129 = vector.broadcast %cst_54 : f32 to vector<10x256xf32>
    %cst_55 = arith.constant 0.000000e+00 : f32
    %130 = vector.broadcast %cst_55 : f32 to vector<10x256xf32>
    %c0_56 = arith.constant 0 : index
    %c0_57 = arith.constant 0 : index
    %c0_58 = arith.constant 0 : index
    %c0_59 = arith.constant 0 : index
    %131 = vector.load %arg3[%c0_56, %c0_57, %c0_58, %c0_59] : memref<2x5x256x256xbf16, #tpu.memory_space<vmem>>, vector<1x1x256x256xbf16>
    %132 = vector.shape_cast %131 : vector<1x1x256x256xbf16> to vector<256x256xbf16>
    %cst_60 = arith.constant dense<0.000000e+00> : vector<10x256xf32>
    %133 = tpu.matmul %122, %132, %cst_60 {dimension_numbers = #tpu.dot_dimension_numbers<[1], [0], [0], [1], [0, 0, 1, 1], [], []>} : vector<10x256xbf16>, vector<256x256xbf16>, vector<10x256xf32> -> vector<10x256xf32>
    %134 = arith.addf %129, %133 : vector<10x256xf32>
    %c1_61 = arith.constant 1 : index
    %c0_62 = arith.constant 0 : index
    %c0_63 = arith.constant 0 : index
    %c0_64 = arith.constant 0 : index
    %135 = vector.load %arg3[%c1_61, %c0_62, %c0_63, %c0_64] : memref<2x5x256x256xbf16, #tpu.memory_space<vmem>>, vector<1x1x256x256xbf16>
    %136 = vector.shape_cast %135 : vector<1x1x256x256xbf16> to vector<256x256xbf16>
    %cst_65 = arith.constant dense<0.000000e+00> : vector<10x256xf32>
    %137 = tpu.matmul %122, %136, %cst_65 {dimension_numbers = #tpu.dot_dimension_numbers<[1], [0], [0], [1], [0, 0, 1, 1], [], []>} : vector<10x256xbf16>, vector<256x256xbf16>, vector<10x256xf32> -> vector<10x256xf32>
    %138 = arith.addf %130, %137 : vector<10x256xf32>
    %c1_66 = arith.constant 1 : index
    %c1_67 = arith.constant 1 : index
    %c0_68 = arith.constant 0 : index
    %c0_69 = arith.constant 0 : index
    %139 = vector.load %arg3[%c1_66, %c1_67, %c0_68, %c0_69] : memref<2x5x256x256xbf16, #tpu.memory_space<vmem>>, vector<1x1x256x256xbf16>
    %140 = vector.shape_cast %139 : vector<1x1x256x256xbf16> to vector<256x256xbf16>
    %cst_70 = arith.constant dense<0.000000e+00> : vector<10x256xf32>
    %141 = tpu.matmul %122, %140, %cst_70 {dimension_numbers = #tpu.dot_dimension_numbers<[1], [0], [0], [1], [0, 0, 1, 1], [], []>} : vector<10x256xbf16>, vector<256x256xbf16>, vector<10x256xf32> -> vector<10x256xf32>
    %142 = arith.addf %134, %141 : vector<10x256xf32>
    %c0_71 = arith.constant 0 : index
    %c1_72 = arith.constant 1 : index
    %c0_73 = arith.constant 0 : index
    %c0_74 = arith.constant 0 : index
    %143 = vector.load %arg3[%c0_71, %c1_72, %c0_73, %c0_74] : memref<2x5x256x256xbf16, #tpu.memory_space<vmem>>, vector<1x1x256x256xbf16>
    %144 = vector.shape_cast %143 : vector<1x1x256x256xbf16> to vector<256x256xbf16>
    %cst_75 = arith.constant dense<0.000000e+00> : vector<10x256xf32>
    %145 = tpu.matmul %125, %144, %cst_75 {dimension_numbers = #tpu.dot_dimension_numbers<[1], [0], [0], [1], [0, 0, 1, 1], [], []>} : vector<10x256xbf16>, vector<256x256xbf16>, vector<10x256xf32> -> vector<10x256xf32>
    %146 = arith.addf %138, %145 : vector<10x256xf32>
    %c0_76 = arith.constant 0 : index
    %c2_77 = arith.constant 2 : index
    %c0_78 = arith.constant 0 : index
    %c0_79 = arith.constant 0 : index
    %147 = vector.load %arg3[%c0_76, %c2_77, %c0_78, %c0_79] : memref<2x5x256x256xbf16, #tpu.memory_space<vmem>>, vector<1x1x256x256xbf16>
    %148 = vector.shape_cast %147 : vector<1x1x256x256xbf16> to vector<256x256xbf16>
    %cst_80 = arith.constant dense<0.000000e+00> : vector<10x256xf32>
    %149 = tpu.matmul %125, %148, %cst_80 {dimension_numbers = #tpu.dot_dimension_numbers<[1], [0], [0], [1], [0, 0, 1, 1], [], []>} : vector<10x256xbf16>, vector<256x256xbf16>, vector<10x256xf32> -> vector<10x256xf32>
    %150 = arith.addf %142, %149 : vector<10x256xf32>
    %c1_81 = arith.constant 1 : index
    %c2_82 = arith.constant 2 : index
    %c0_83 = arith.constant 0 : index
    %c0_84 = arith.constant 0 : index
    %151 = vector.load %arg3[%c1_81, %c2_82, %c0_83, %c0_84] : memref<2x5x256x256xbf16, #tpu.memory_space<vmem>>, vector<1x1x256x256xbf16>
    %152 = vector.shape_cast %151 : vector<1x1x256x256xbf16> to vector<256x256xbf16>
    %cst_85 = arith.constant dense<0.000000e+00> : vector<10x256xf32>
    %153 = tpu.matmul %125, %152, %cst_85 {dimension_numbers = #tpu.dot_dimension_numbers<[1], [0], [0], [1], [0, 0, 1, 1], [], []>} : vector<10x256xbf16>, vector<256x256xbf16>, vector<10x256xf32> -> vector<10x256xf32>
    %154 = arith.addf %146, %153 : vector<10x256xf32>
    %c1_86 = arith.constant 1 : index
    %c3_87 = arith.constant 3 : index
    %c0_88 = arith.constant 0 : index
    %c0_89 = arith.constant 0 : index
    %155 = vector.load %arg3[%c1_86, %c3_87, %c0_88, %c0_89] : memref<2x5x256x256xbf16, #tpu.memory_space<vmem>>, vector<1x1x256x256xbf16>
    %156 = vector.shape_cast %155 : vector<1x1x256x256xbf16> to vector<256x256xbf16>
    %cst_90 = arith.constant dense<0.000000e+00> : vector<10x256xf32>
    %157 = tpu.matmul %125, %156, %cst_90 {dimension_numbers = #tpu.dot_dimension_numbers<[1], [0], [0], [1], [0, 0, 1, 1], [], []>} : vector<10x256xbf16>, vector<256x256xbf16>, vector<10x256xf32> -> vector<10x256xf32>
    %158 = arith.addf %150, %157 : vector<10x256xf32>
    %c0_91 = arith.constant 0 : index
    %c3_92 = arith.constant 3 : index
    %c0_93 = arith.constant 0 : index
    %c0_94 = arith.constant 0 : index
    %159 = vector.load %arg3[%c0_91, %c3_92, %c0_93, %c0_94] : memref<2x5x256x256xbf16, #tpu.memory_space<vmem>>, vector<1x1x256x256xbf16>
    %160 = vector.shape_cast %159 : vector<1x1x256x256xbf16> to vector<256x256xbf16>
    %cst_95 = arith.constant dense<0.000000e+00> : vector<10x256xf32>
    %161 = tpu.matmul %128, %160, %cst_95 {dimension_numbers = #tpu.dot_dimension_numbers<[1], [0], [0], [1], [0, 0, 1, 1], [], []>} : vector<10x256xbf16>, vector<256x256xbf16>, vector<10x256xf32> -> vector<10x256xf32>
    %162 = arith.addf %154, %161 : vector<10x256xf32>
    %c0_96 = arith.constant 0 : index
    %c4_97 = arith.constant 4 : index
    %c0_98 = arith.constant 0 : index
    %c0_99 = arith.constant 0 : index
    %163 = vector.load %arg3[%c0_96, %c4_97, %c0_98, %c0_99] : memref<2x5x256x256xbf16, #tpu.memory_space<vmem>>, vector<1x1x256x256xbf16>
    %164 = vector.shape_cast %163 : vector<1x1x256x256xbf16> to vector<256x256xbf16>
    %cst_100 = arith.constant dense<0.000000e+00> : vector<10x256xf32>
    %165 = tpu.matmul %128, %164, %cst_100 {dimension_numbers = #tpu.dot_dimension_numbers<[1], [0], [0], [1], [0, 0, 1, 1], [], []>} : vector<10x256xbf16>, vector<256x256xbf16>, vector<10x256xf32> -> vector<10x256xf32>
    %166 = arith.addf %158, %165 : vector<10x256xf32>
    %c1_101 = arith.constant 1 : index
    %c4_102 = arith.constant 4 : index
    %c0_103 = arith.constant 0 : index
    %c0_104 = arith.constant 0 : index
    %167 = vector.load %arg3[%c1_101, %c4_102, %c0_103, %c0_104] : memref<2x5x256x256xbf16, #tpu.memory_space<vmem>>, vector<1x1x256x256xbf16>
    %168 = vector.shape_cast %167 : vector<1x1x256x256xbf16> to vector<256x256xbf16>
    %cst_105 = arith.constant dense<0.000000e+00> : vector<10x256xf32>
    %169 = tpu.matmul %128, %168, %cst_105 {dimension_numbers = #tpu.dot_dimension_numbers<[1], [0], [0], [1], [0, 0, 1, 1], [], []>} : vector<10x256xbf16>, vector<256x256xbf16>, vector<10x256xf32> -> vector<10x256xf32>
    %170 = arith.addf %162, %169 : vector<10x256xf32>
    %171 = arith.maximumf %166, %170 : vector<10x256xf32>
    %172 = vector.extract_strided_slice %171 {offsets = [0, 0], sizes = [10, 128], strides = [1, 1]} : vector<10x256xf32> to vector<10x128xf32>
    %173 = vector.extract_strided_slice %171 {offsets = [0, 128], sizes = [10, 128], strides = [1, 1]} : vector<10x256xf32> to vector<10x128xf32>
    %174 = arith.maximumf %172, %173 : vector<10x128xf32>
    %c0_106 = arith.constant 0 : index
    %c0_107 = arith.constant 0 : index
    %175 = vector.load %arg4[%c0_106, %c0_107] : memref<1x128xf32, #tpu.memory_space<vmem>>, vector<1x128xf32>
    %176 = vector.broadcast %175 : vector<1x128xf32> to vector<10x128xf32>
    %177 = arith.addf %174, %176 : vector<10x128xf32>
    %cst_108 = arith.constant 0.000000e+00 : f32
    %178 = vector.broadcast %cst_108 : f32 to vector<10x128xf32>
    %179 = arith.maximumf %177, %178 : vector<10x128xf32>
    %180 = vector.extract_strided_slice %179 {offsets = [0, 0], sizes = [1, 128], strides = [1, 1]} : vector<10x128xf32> to vector<1x128xf32>
    %181 = vector.extract_strided_slice %179 {offsets = [1, 0], sizes = [1, 128], strides = [1, 1]} : vector<10x128xf32> to vector<1x128xf32>
    %182 = vector.extract_strided_slice %179 {offsets = [2, 0], sizes = [1, 128], strides = [1, 1]} : vector<10x128xf32> to vector<1x128xf32>
    %183 = vector.extract_strided_slice %179 {offsets = [3, 0], sizes = [1, 128], strides = [1, 1]} : vector<10x128xf32> to vector<1x128xf32>
    %184 = vector.extract_strided_slice %179 {offsets = [4, 0], sizes = [1, 128], strides = [1, 1]} : vector<10x128xf32> to vector<1x128xf32>
    %185 = tpu.concatenate %180, %181, %182, %183, %184 in 1 : vector<1x128xf32>, vector<1x128xf32>, vector<1x128xf32>, vector<1x128xf32>, vector<1x128xf32> -> vector<1x640xf32>
    %186 = vector.extract_strided_slice %179 {offsets = [5, 0], sizes = [1, 128], strides = [1, 1]} : vector<10x128xf32> to vector<1x128xf32>
    %187 = vector.extract_strided_slice %179 {offsets = [6, 0], sizes = [1, 128], strides = [1, 1]} : vector<10x128xf32> to vector<1x128xf32>
    %188 = vector.extract_strided_slice %179 {offsets = [7, 0], sizes = [1, 128], strides = [1, 1]} : vector<10x128xf32> to vector<1x128xf32>
    %189 = vector.extract_strided_slice %179 {offsets = [8, 0], sizes = [1, 128], strides = [1, 1]} : vector<10x128xf32> to vector<1x128xf32>
    %190 = vector.extract_strided_slice %179 {offsets = [9, 0], sizes = [1, 128], strides = [1, 1]} : vector<10x128xf32> to vector<1x128xf32>
    %191 = tpu.concatenate %186, %187, %188, %189, %190 in 1 : vector<1x128xf32>, vector<1x128xf32>, vector<1x128xf32>, vector<1x128xf32>, vector<1x128xf32> -> vector<1x640xf32>
    %192 = tpu.concatenate %185, %191 in 0 : vector<1x640xf32>, vector<1x640xf32> -> vector<2x640xf32>
    %193 = arith.truncf %192 : vector<2x640xf32> to vector<2x640xbf16>
    %c0_109 = arith.constant 0 : index
    %c0_110 = arith.constant 0 : index
    %194 = vector.load %arg5[%c0_109, %c0_110] : memref<640x8xbf16, #tpu.memory_space<vmem>>, vector<640x8xbf16>
    %cst_111 = arith.constant dense<0.000000e+00> : vector<2x8xf32>
    %195 = tpu.matmul %193, %194, %cst_111 {dimension_numbers = #tpu.dot_dimension_numbers<[1], [0], [0], [1], [0, 0, 1, 1], [], []>} : vector<2x640xbf16>, vector<640x8xbf16>, vector<2x8xf32> -> vector<2x8xf32>
    %c0_112 = arith.constant 0 : index
    %c0_113 = arith.constant 0 : index
    %196 = vector.load %arg6[%c0_112, %c0_113] : memref<1x8xf32, #tpu.memory_space<vmem>>, vector<1x8xf32>
    %197 = vector.broadcast %196 : vector<1x8xf32> to vector<2x8xf32>
    %198 = arith.addf %195, %197 : vector<2x8xf32>
    %cst_114 = arith.constant 0.000000e+00 : f32
    %199 = vector.broadcast %cst_114 : f32 to vector<2x8xf32>
    %200 = arith.maximumf %198, %199 : vector<2x8xf32>
    %201 = arith.truncf %200 : vector<2x8xf32> to vector<2x8xbf16>
    %c0_115 = arith.constant 0 : index
    %c0_116 = arith.constant 0 : index
    %202 = vector.load %arg7[%c0_115, %c0_116] : memref<8x16xbf16, #tpu.memory_space<vmem>>, vector<8x16xbf16>
    %cst_117 = arith.constant dense<0.000000e+00> : vector<2x16xf32>
    %203 = tpu.matmul %201, %202, %cst_117 {dimension_numbers = #tpu.dot_dimension_numbers<[1], [0], [0], [1], [0, 0, 1, 1], [], []>} : vector<2x8xbf16>, vector<8x16xbf16>, vector<2x16xf32> -> vector<2x16xf32>
    %c0_118 = arith.constant 0 : index
    %c0_119 = arith.constant 0 : index
    %204 = vector.load %arg8[%c0_118, %c0_119] : memref<1x16xf32, #tpu.memory_space<vmem>>, vector<1x16xf32>
    %205 = vector.broadcast %204 : vector<1x16xf32> to vector<2x16xf32>
    %206 = arith.addf %203, %205 : vector<2x16xf32>
    %cst_120 = arith.constant 0.000000e+00 : f32
    %207 = vector.broadcast %cst_120 : f32 to vector<2x16xf32>
    %208 = arith.maximumf %206, %207 : vector<2x16xf32>
    %209 = arith.truncf %208 : vector<2x16xf32> to vector<2x16xbf16>
    %c0_121 = arith.constant 0 : index
    %c0_122 = arith.constant 0 : index
    %210 = vector.load %arg9[%c0_121, %c0_122] : memref<16x10xbf16, #tpu.memory_space<vmem>>, vector<16x10xbf16>
    %cst_123 = arith.constant dense<0.000000e+00> : vector<2x10xf32>
    %211 = tpu.matmul %209, %210, %cst_123 {dimension_numbers = #tpu.dot_dimension_numbers<[1], [0], [0], [1], [0, 0, 1, 1], [], []>} : vector<2x16xbf16>, vector<16x10xbf16>, vector<2x10xf32> -> vector<2x10xf32>
    %c0_124 = arith.constant 0 : index
    %c0_125 = arith.constant 0 : index
    %212 = vector.load %arg10[%c0_124, %c0_125] : memref<1x10xf32, #tpu.memory_space<vmem>>, vector<1x10xf32>
    %213 = vector.broadcast %212 : vector<1x10xf32> to vector<2x10xf32>
    %214 = arith.addf %211, %213 : vector<2x10xf32>
    %c0_126 = arith.constant 0 : index
    %c0_127 = arith.constant 0 : index
    %215 = vector.load %arg11[%c0_126, %c0_127] : memref<2x10xf32, #tpu.memory_space<vmem>>, vector<2x10xf32>
    tpu.vector_store %arg11[%c0_126, %c0_127], %214 {strides = array<i32>} : memref<2x10xf32, #tpu.memory_space<vmem>>, vector<2x10xf32>,
    return
  }
}

</mosaic_0001>

<llo_original>
// kernel: net_forward.1
$region0: #{net_forward.1}
  #allocation0 [shape = 'u32[]', space=smem, size = 0x4, offset = 0x4, fixed_abs, tag = 'smem constant byte address 0x4 - core index']
  #allocation1 [shape = 'u32[144,128]{1,0:T(1,128)}', space=vmem, size = 0x12000, scoped, tag = 'internal scratch']
  %s0 = inlined_call_operand.vmem [shape: bf16[8,14,128], index: 0, kind: input, shape index: {}]
  %s1 = inlined_call_operand.vmem [shape: bf16[5,128,256], index: 1, kind: input, shape index: {}]
  %s2 = inlined_call_operand.vmem [shape: f32[1,256], index: 2, kind: input, shape index: {}]
  %s3 = inlined_call_operand.vmem [shape: bf16[2,5,256,256], index: 3, kind: input, shape index: {}]
  %s4 = inlined_call_operand.vmem [shape: f32[1,128], index: 4, kind: input, shape index: {}]
  %s5 = inlined_call_operand.vmem [shape: bf16[640,8], index: 5, kind: input, shape index: {}]
  %s6 = inlined_call_operand.vmem [shape: f32[1,8], index: 6, kind: input, shape index: {}]
  %s7 = inlined_call_operand.vmem [shape: bf16[8,16], index: 7, kind: input, shape index: {}]
  %s8 = inlined_call_operand.vmem [shape: f32[1,16], index: 8, kind: input, shape index: {}]
  %s9 = inlined_call_operand.vmem [shape: bf16[16,10], index: 9, kind: input, shape index: {}]
  %s10 = inlined_call_operand.vmem [shape: f32[1,10], index: 10, kind: input, shape index: {}]
  %s11 = inlined_call_operand.hbm [shape: f32[2,10], index: 11, kind: output, shape index: {}]
  %s12 = sld [smem:[#allocation0]]
  $region54: #{net_forward.1} parent=0
    _
  %s14 = ssub.s32 1, %s12
  %s15 = scalar_select 0, %s14, %s12
  $region1: #{net_forward.1} parent=0
    #allocation2 [shape = 'u8[1024]{0}', space=vmem, size = 0x400, scoped, tag = 'output window, operand 0, single buffered']
    #allocation3 [shape = 's32[1]{0}', space=sflag, size = 0x4, scoped, tag = 'scoped memory for net_forward.1']
    %16 = vsyncpa [#allocation3], 0
    // Predicated region
    $region2: #{net_forward.1} parent=1 // pred_check
      _
    $region3: #{net_forward.1} parent=1 // pred_check_branch
      %18 = sbr.rel (0) target = $region5
    $region4: #{net_forward.1} parent=1 // pred_region
      _
    $region5: #{net_forward.1} parent=1 // pred_fallthru
      _
    // Predicated region
    $region6: #{net_forward.1} parent=1 // pred_check
      _
    $region7: #{net_forward.1} parent=1 // pred_check_branch
      %20 = sbr.rel (0) target = $region9
    $region8: #{net_forward.1} parent=1 // pred_region
      _
    $region9: #{net_forward.1} parent=1 // pred_fallthru
      _
    // Predicated region
    $region10: #{net_forward.1} parent=1 // pred_check
      _
    $region11: #{net_forward.1} parent=1 // pred_check_branch
      %22 = sbr.rel (0) target = $region13
    $region12: #{net_forward.1} parent=1 // pred_region
      _
    $region13: #{net_forward.1} parent=1 // pred_fallthru
      _
    // Predicated region
    $region14: #{net_forward.1} parent=1 // pred_check
      _
    $region15: #{net_forward.1} parent=1 // pred_check_branch
      %24 = sbr.rel (0) target = $region17
    $region16: #{net_forward.1} parent=1 // pred_region
      _
    $region17: #{net_forward.1} parent=1 // pred_fallthru
      _
    // Predicated region
    $region18: #{net_forward.1} parent=1 // pred_check
      _
    $region19: #{net_forward.1} parent=1 // pred_check_branch
      %26 = sbr.rel (0) target = $region21
    $region20: #{net_forward.1} parent=1 // pred_region
      _
    $region21: #{net_forward.1} parent=1 // pred_fallthru
      _
    // Predicated region
    $region22: #{net_forward.1} parent=1 // pred_check
      _
    $region23: #{net_forward.1} parent=1 // pred_check_branch
      %28 = sbr.rel (0) target = $region25
    $region24: #{net_forward.1} parent=1 // pred_region
      _
    $region25: #{net_forward.1} parent=1 // pred_fallthru
      _
    // Predicated region
    $region26: #{net_forward.1} parent=1 // pred_check
      _
    $region27: #{net_forward.1} parent=1 // pred_check_branch
      %30 = sbr.rel (0) target = $region29
    $region28: #{net_forward.1} parent=1 // pred_region
      _
    $region29: #{net_forward.1} parent=1 // pred_fallthru
      _
    // Predicated region
    $region30: #{net_forward.1} parent=1 // pred_check
      _
    $region31: #{net_forward.1} parent=1 // pred_check_branch
      %32 = sbr.rel (0) target = $region33
    $region32: #{net_forward.1} parent=1 // pred_region
      _
    $region33: #{net_forward.1} parent=1 // pred_fallthru
      _
    // Predicated region
    $region34: #{net_forward.1} parent=1 // pred_check
      _
    $region35: #{net_forward.1} parent=1 // pred_check_branch
      %34 = sbr.rel (0) target = $region37
    $region36: #{net_forward.1} parent=1 // pred_region
      _
    $region37: #{net_forward.1} parent=1 // pred_fallthru
      _
    // Predicated region
    $region38: #{net_forward.1} parent=1 // pred_check
      _
    $region39: #{net_forward.1} parent=1 // pred_check_branch
      %36 = sbr.rel (0) target = $region41
    $region40: #{net_forward.1} parent=1 // pred_region
      _
    $region41: #{net_forward.1} parent=1 // pred_fallthru
      _
    // Predicated region
    $region42: #{net_forward.1} parent=1 // pred_check
      _
    $region43: #{net_forward.1} parent=1 // pred_check_branch
      %38 = sbr.rel (0) target = $region45
    $region44: #{net_forward.1} parent=1 // pred_region
      _
    $region45: #{net_forward.1} parent=1 // pred_fallthru
      _
    %v40 = vld [vmem:[%s0] sm:$0xf]
    %v41 = vld [vmem:[%s0 + $0x4] sm:$0x7]
    %v42 = vld [vmem:[%s0 + $0x8] sm:$0xf]
    %v43 = vld [vmem:[%s0 + $0xc] sm:$0x7]
    %v44 = vld [vmem:[%s0 + $0x10] sm:$0xf]
    %v45 = vld [vmem:[%s0 + $0x14] sm:$0x7]
    %v46 = vld [vmem:[%s0 + $0x18] sm:$0xf]
    %v47 = vld [vmem:[%s0 + $0x1c] sm:$0x7]
    %v48 = vld [vmem:[%s0 + $0x20] sm:$0xf]
    %v49 = vld [vmem:[%s0 + $0x24] sm:$0x7]
    %v50 = vld [vmem:[%s0 + $0x28] sm:$0xf]
    %v51 = vld [vmem:[%s0 + $0x2c] sm:$0x7]
    %v52 = vld [vmem:[%s0 + $0x30] sm:$0xf]
    %v53 = vld [vmem:[%s0 + $0x34] sm:$0x7]
    %v54 = vld [vmem:[%s0 + $0x38] sm:$0xf]
    %v55 = vld [vmem:[%s0 + $0x3c] sm:$0x7]
    %v56 = vld [vmem:[%s1] sm:$0xff]
    %v57 = vld [vmem:[%s1 + $0x8] sm:$0xff]
    %v58 = vld [vmem:[%s1 + $0x10] sm:$0xff]
    %v59 = vld [vmem:[%s1 + $0x18] sm:$0xff]
    %v60 = vld [vmem:[%s1 + $0x20] sm:$0xff]
    %v61 = vld [vmem:[%s1 + $0x28] sm:$0xff]
    %v62 = vld [vmem:[%s1 + $0x30] sm:$0xff]
    %v63 = vld [vmem:[%s1 + $0x38] sm:$0xff]
    %v64 = vld [vmem:[%s1 + $0x40] sm:$0xff]
    %v65 = vld [vmem:[%s1 + $0x48] sm:$0xff]
    %v66 = vld [vmem:[%s1 + $0x50] sm:$0xff]
    %v67 = vld [vmem:[%s1 + $0x58] sm:$0xff]
    %v68 = vld [vmem:[%s1 + $0x60] sm:$0xff]
    %v69 = vld [vmem:[%s1 + $0x68] sm:$0xff]
    %v70 = vld [vmem:[%s1 + $0x70] sm:$0xff]
    %v71 = vld [vmem:[%s1 + $0x78] sm:$0xff]
    %s72 = scalar_lea.vmem %s1, 128
    %v73 = vld [vmem:[%s72] sm:$0xff]
    %v74 = vld [vmem:[%s72 + $0x8] sm:$0xff]
    %v75 = vld [vmem:[%s72 + $0x10] sm:$0xff]
    %v76 = vld [vmem:[%s72 + $0x18] sm:$0xff]
    %v77 = vld [vmem:[%s72 + $0x20] sm:$0xff]
    %v78 = vld [vmem:[%s72 + $0x28] sm:$0xff]
    %v79 = vld [vmem:[%s72 + $0x30] sm:$0xff]
    %v80 = vld [vmem:[%s72 + $0x38] sm:$0xff]
    %v81 = vld [vmem:[%s72 + $0x40] sm:$0xff]
    %v82 = vld [vmem:[%s72 + $0x48] sm:$0xff]
    %v83 = vld [vmem:[%s72 + $0x50] sm:$0xff]
    %v84 = vld [vmem:[%s72 + $0x58] sm:$0xff]
    %v85 = vld [vmem:[%s72 + $0x60] sm:$0xff]
    %v86 = vld [vmem:[%s72 + $0x68] sm:$0xff]
    %v87 = vld [vmem:[%s72 + $0x70] sm:$0xff]
    %v88 = vld [vmem:[%s72 + $0x78] sm:$0xff]
    %v91 = vunpack.c.l.b16 %v42
    %v92 = vunpack.c.l.b16 %v43
    %v93 = vpack.c.b16 %v92, %v91
    %v111 = vunpack.c.l.b16 %v73
    %v112 = vunpack.c.h.b16 %v73
    %v113 = vunpack.c.l.b16 %v74
    %v114 = vunpack.c.h.b16 %v74
    %v115 = vunpack.c.l.b16 %v75
    %v116 = vunpack.c.h.b16 %v75
    %v117 = vunpack.c.l.b16 %v76
    %v118 = vunpack.c.h.b16 %v76
    %v119 = vunpack.c.l.b16 %v77
    %v120 = vunpack.c.h.b16 %v77
    %v121 = vunpack.c.l.b16 %v78
    %v122 = vunpack.c.h.b16 %v78
    %v123 = vunpack.c.l.b16 %v79
    %v124 = vunpack.c.h.b16 %v79
    %v125 = vunpack.c.l.b16 %v80
    %v126 = vunpack.c.h.b16 %v80
    %v127 = vunpack.c.l.b16 %v81
    %v128 = vunpack.c.h.b16 %v81
    %v129 = vunpack.c.l.b16 %v82
    %v130 = vunpack.c.h.b16 %v82
    %v131 = vunpack.c.l.b16 %v83
    %v132 = vunpack.c.h.b16 %v83
    %v133 = vunpack.c.l.b16 %v84
    %v134 = vunpack.c.h.b16 %v84
    %v135 = vunpack.c.l.b16 %v85
    %v136 = vunpack.c.h.b16 %v85
    %v137 = vunpack.c.l.b16 %v86
    %v138 = vunpack.c.h.b16 %v86
    %v139 = vunpack.c.l.b16 %v87
    %v140 = vunpack.c.h.b16 %v87
    %v141 = vunpack.c.l.b16 %v88
    %v142 = vunpack.c.h.b16 %v88
    %v143 = vpack.c.b16 %v113, %v111
    %v144 = vpack.c.b16 %v114, %v112
    %v145 = vpack.c.b16 %v117, %v115
    %v146 = vpack.c.b16 %v118, %v116
    %v147 = vpack.c.b16 %v121, %v119
    %v148 = vpack.c.b16 %v122, %v120
    %v149 = vpack.c.b16 %v125, %v123
    %v150 = vpack.c.b16 %v126, %v124
    %v151 = vpack.c.b16 %v129, %v127
    %v152 = vpack.c.b16 %v130, %v128
    %v153 = vpack.c.b16 %v133, %v131
    %v154 = vpack.c.b16 %v134, %v132
    %v155 = vpack.c.b16 %v137, %v135
    %v156 = vpack.c.b16 %v138, %v136
    %v157 = vpack.c.b16 %v141, %v139
    %v158 = vpack.c.b16 %v142, %v140
    %175 = vmatprep.subr.bf16.mxu0 %v144
    %176 = vmatpush1.bf16.msra.mxu0 %v143
    %177 = vmatprep.subr.bf16.mxu0 %v146
    %178 = vmatpush1.bf16.msra.mxu0 %v145
    %179 = vmatprep.subr.bf16.mxu0 %v148
    %180 = vmatpush1.bf16.msra.mxu0 %v147
    %181 = vmatprep.subr.bf16.mxu0 %v150
    %182 = vmatpush1.bf16.msra.mxu0 %v149
    %183 = vmatprep.subr.bf16.mxu0 %v152
    %184 = vmatpush1.bf16.msra.mxu0 %v151
    %185 = vmatprep.subr.bf16.mxu0 %v154
    %186 = vmatpush1.bf16.msra.mxu0 %v153
    %187 = vmatprep.subr.bf16.mxu0 %v156
    %188 = vmatpush1.bf16.msra.mxu0 %v155
    %189 = vmatprep.subr.bf16.mxu0 %v158
    %190 = vmatpush1.bf16.msra.mxu0 %v157
    %191 = vmatprep.subr.bf16.mxu0 0
    %192 = vmatpush1.bf16.msra.mxu0 0
    %193 = vmatprep.subr.bf16.mxu0 0
    %194 = vmatpush1.bf16.msra.mxu0 0
    %195 = vmatprep.subr.bf16.mxu0 0
    %196 = vmatpush1.bf16.msra.mxu0 0
    %197 = vmatprep.subr.bf16.mxu0 0
    %198 = vmatpush1.bf16.msra.mxu0 0
    %199 = vmatprep.subr.bf16.mxu0 0
    %200 = vmatpush1.bf16.msra.mxu0 0
    %201 = vmatprep.subr.bf16.mxu0 0
    %202 = vmatpush1.bf16.msra.mxu0 0
    %203 = vmatprep.subr.bf16.mxu0 0
    %204 = vmatpush1.bf16.msra.mxu0 0
    %205 = vmatprep.subr.bf16.mxu0 0
    %206 = vmatpush1.bf16.msra.mxu0 0
    %207 = vmatprep.mubr.bf16.mxu0 0
    %208 = vmatmul.mubr.bf16.gmra.mrb[0].mxu0 %v93
    %v209 = vpop.f32.mrb[0].mxu0
    %v210 = vadd.f32 0.0, %v209
    %v211 = vpop.f32.mrb[0].mxu0
    %v212 = vadd.f32 0.0, %v211
    %v213 = vpop.f32.mrb[0].mxu0
    %v214 = vadd.f32 0.0, %v213
    %v215 = vpop.f32.mrb[0].mxu0
    %v216 = vadd.f32 0.0, %v215
    %217 = vdwg.mxu0
    %v220 = vunpack.c.l.b16 %v40
    %v221 = vunpack.c.l.b16 %v41
    %v222 = vpack.c.b16 %v221, %v220
    %v240 = vunpack.c.l.b16 %v56
    %v241 = vunpack.c.h.b16 %v56
    %v242 = vunpack.c.l.b16 %v57
    %v243 = vunpack.c.h.b16 %v57
    %v244 = vunpack.c.l.b16 %v58
    %v245 = vunpack.c.h.b16 %v58
    %v246 = vunpack.c.l.b16 %v59
    %v247 = vunpack.c.h.b16 %v59
    %v248 = vunpack.c.l.b16 %v60
    %v249 = vunpack.c.h.b16 %v60
    %v250 = vunpack.c.l.b16 %v61
    %v251 = vunpack.c.h.b16 %v61
    %v252 = vunpack.c.l.b16 %v62
    %v253 = vunpack.c.h.b16 %v62
    %v254 = vunpack.c.l.b16 %v63
    %v255 = vunpack.c.h.b16 %v63
    %v256 = vunpack.c.l.b16 %v64
    %v257 = vunpack.c.h.b16 %v64
    %v258 = vunpack.c.l.b16 %v65
    %v259 = vunpack.c.h.b16 %v65
    %v260 = vunpack.c.l.b16 %v66
    %v261 = vunpack.c.h.b16 %v66
    %v262 = vunpack.c.l.b16 %v67
    %v263 = vunpack.c.h.b16 %v67
    %v264 = vunpack.c.l.b16 %v68
    %v265 = vunpack.c.h.b16 %v68
    %v266 = vunpack.c.l.b16 %v69
    %v267 = vunpack.c.h.b16 %v69
    %v268 = vunpack.c.l.b16 %v70
    %v269 = vunpack.c.h.b16 %v70
    %v270 = vunpack.c.l.b16 %v71
    %v271 = vunpack.c.h.b16 %v71
    %v272 = vpack.c.b16 %v242, %v240
    %v273 = vpack.c.b16 %v243, %v241
    %v274 = vpack.c.b16 %v246, %v244
    %v275 = vpack.c.b16 %v247, %v245
    %v276 = vpack.c.b16 %v250, %v248
    %v277 = vpack.c.b16 %v251, %v249
    %v278 = vpack.c.b16 %v254, %v252
    %v279 = vpack.c.b16 %v255, %v253
    %v280 = vpack.c.b16 %v258, %v256
    %v281 = vpack.c.b16 %v259, %v257
    %v282 = vpack.c.b16 %v262, %v260
    %v283 = vpack.c.b16 %v263, %v261
    %v284 = vpack.c.b16 %v266, %v264
    %v285 = vpack.c.b16 %v267, %v265
    %v286 = vpack.c.b16 %v270, %v268
    %v287 = vpack.c.b16 %v271, %v269
    %304 = vmatprep.subr.bf16.mxu0 %v273
    %305 = vmatpush1.bf16.msra.mxu0 %v272
    %306 = vmatprep.subr.bf16.mxu0 %v275
    %307 = vmatpush1.bf16.msra.mxu0 %v274
    %308 = vmatprep.subr.bf16.mxu0 %v277
    %309 = vmatpush1.bf16.msra.mxu0 %v276
    %310 = vmatprep.subr.bf16.mxu0 %v279
    %311 = vmatpush1.bf16.msra.mxu0 %v278
    %312 = vmatprep.subr.bf16.mxu0 %v281
    %313 = vmatpush1.bf16.msra.mxu0 %v280
    %314 = vmatprep.subr.bf16.mxu0 %v283
    %315 = vmatpush1.bf16.msra.mxu0 %v282
    %316 = vmatprep.subr.bf16.mxu0 %v285
    %317 = vmatpush1.bf16.msra.mxu0 %v284
    %318 = vmatprep.subr.bf16.mxu0 %v287
    %319 = vmatpush1.bf16.msra.mxu0 %v286
    %320 = vmatprep.subr.bf16.mxu0 0
    %321 = vmatpush1.bf16.msra.mxu0 0
    %322 = vmatprep.subr.bf16.mxu0 0
    %323 = vmatpush1.bf16.msra.mxu0 0
    %324 = vmatprep.subr.bf16.mxu0 0
    %325 = vmatpush1.bf16.msra.mxu0 0
    %326 = vmatprep.subr.bf16.mxu0 0
    %327 = vmatpush1.bf16.msra.mxu0 0
    %328 = vmatprep.subr.bf16.mxu0 0
    %329 = vmatpush1.bf16.msra.mxu0 0
    %330 = vmatprep.subr.bf16.mxu0 0
    %331 = vmatpush1.bf16.msra.mxu0 0
    %332 = vmatprep.subr.bf16.mxu0 0
    %333 = vmatpush1.bf16.msra.mxu0 0
    %334 = vmatprep.subr.bf16.mxu0 0
    %335 = vmatpush1.bf16.msra.mxu0 0
    %336 = vmatprep.mubr.bf16.mxu0 0
    %337 = vmatmul.mubr.bf16.gmra.mrb[0].mxu0 %v222
    %v338 = vpop.f32.mrb[0].mxu0
    %v339 = vadd.f32 %v210, %v338
    %v340 = vpop.f32.mrb[0].mxu0
    %v341 = vadd.f32 %v212, %v340
    %v342 = vpop.f32.mrb[0].mxu0
    %v343 = vadd.f32 %v214, %v342
    %v344 = vpop.f32.mrb[0].mxu0
    %v345 = vadd.f32 %v216, %v344
    %346 = vdwg.mxu0
    %v349 = vunpack.c.l.b16 %v44
    %v350 = vunpack.c.l.b16 %v45
    %v351 = vpack.c.b16 %v350, %v349
    %353 = vmatprep.subr.bf16.mxu0 %v144
    %354 = vmatpush1.bf16.msra.mxu0 %v143
    %355 = vmatprep.subr.bf16.mxu0 %v146
    %356 = vmatpush1.bf16.msra.mxu0 %v145
    %357 = vmatprep.subr.bf16.mxu0 %v148
    %358 = vmatpush1.bf16.msra.mxu0 %v147
    %359 = vmatprep.subr.bf16.mxu0 %v150
    %360 = vmatpush1.bf16.msra.mxu0 %v149
    %361 = vmatprep.subr.bf16.mxu0 %v152
    %362 = vmatpush1.bf16.msra.mxu0 %v151
    %363 = vmatprep.subr.bf16.mxu0 %v154
    %364 = vmatpush1.bf16.msra.mxu0 %v153
    %365 = vmatprep.subr.bf16.mxu0 %v156
    %366 = vmatpush1.bf16.msra.mxu0 %v155
    %367 = vmatprep.subr.bf16.mxu0 %v158
    %368 = vmatpush1.bf16.msra.mxu0 %v157
    %369 = vmatprep.subr.bf16.mxu0 0
    %370 = vmatpush1.bf16.msra.mxu0 0
    %371 = vmatprep.subr.bf16.mxu0 0
    %372 = vmatpush1.bf16.msra.mxu0 0
    %373 = vmatprep.subr.bf16.mxu0 0
    %374 = vmatpush1.bf16.msra.mxu0 0
    %375 = vmatprep.subr.bf16.mxu0 0
    %376 = vmatpush1.bf16.msra.mxu0 0
    %377 = vmatprep.subr.bf16.mxu0 0
    %378 = vmatpush1.bf16.msra.mxu0 0
    %379 = vmatprep.subr.bf16.mxu0 0
    %380 = vmatpush1.bf16.msra.mxu0 0
    %381 = vmatprep.subr.bf16.mxu0 0
    %382 = vmatpush1.bf16.msra.mxu0 0
    %383 = vmatprep.subr.bf16.mxu0 0
    %384 = vmatpush1.bf16.msra.mxu0 0
    %385 = vmatprep.mubr.bf16.mxu0 0
    %386 = vmatmul.mubr.bf16.gmra.mrb[0].mxu0 %v351
    %v387 = vpop.f32.mrb[0].mxu0
    %v388 = vadd.f32 0.0, %v387
    %v389 = vpop.f32.mrb[0].mxu0
    %v390 = vadd.f32 0.0, %v389
    %v391 = vpop.f32.mrb[0].mxu0
    %v392 = vadd.f32 0.0, %v391
    %v393 = vpop.f32.mrb[0].mxu0
    %v394 = vadd.f32 0.0, %v393
    %395 = vdwg.mxu0
    %396 = vmatprep.subr.bf16.mxu0 %v273
    %397 = vmatpush1.bf16.msra.mxu0 %v272
    %398 = vmatprep.subr.bf16.mxu0 %v275
    %399 = vmatpush1.bf16.msra.mxu0 %v274
    %400 = vmatprep.subr.bf16.mxu0 %v277
    %401 = vmatpush1.bf16.msra.mxu0 %v276
    %402 = vmatprep.subr.bf16.mxu0 %v279
    %403 = vmatpush1.bf16.msra.mxu0 %v278
    %404 = vmatprep.subr.bf16.mxu0 %v281
    %405 = vmatpush1.bf16.msra.mxu0 %v280
    %406 = vmatprep.subr.bf16.mxu0 %v283
    %407 = vmatpush1.bf16.msra.mxu0 %v282
    %408 = vmatprep.subr.bf16.mxu0 %v285
    %409 = vmatpush1.bf16.msra.mxu0 %v284
    %410 = vmatprep.subr.bf16.mxu0 %v287
    %411 = vmatpush1.bf16.msra.mxu0 %v286
    %412 = vmatprep.subr.bf16.mxu0 0
    %413 = vmatpush1.bf16.msra.mxu0 0
    %414 = vmatprep.subr.bf16.mxu0 0
    %415 = vmatpush1.bf16.msra.mxu0 0
    %416 = vmatprep.subr.bf16.mxu0 0
    %417 = vmatpush1.bf16.msra.mxu0 0
    %418 = vmatprep.subr.bf16.mxu0 0
    %419 = vmatpush1.bf16.msra.mxu0 0
    %420 = vmatprep.subr.bf16.mxu0 0
    %421 = vmatpush1.bf16.msra.mxu0 0
    %422 = vmatprep.subr.bf16.mxu0 0
    %423 = vmatpush1.bf16.msra.mxu0 0
    %424 = vmatprep.subr.bf16.mxu0 0
    %425 = vmatpush1.bf16.msra.mxu0 0
    %426 = vmatprep.subr.bf16.mxu0 0
    %427 = vmatpush1.bf16.msra.mxu0 0
    %428 = vmatprep.mubr.bf16.mxu0 0
    %429 = vmatmul.mubr.bf16.gmra.mrb[0].mxu0 %v93
    %v430 = vpop.f32.mrb[0].mxu0
    %v431 = vadd.f32 %v388, %v430
    %v432 = vpop.f32.mrb[0].mxu0
    %v433 = vadd.f32 %v390, %v432
    %v434 = vpop.f32.mrb[0].mxu0
    %v435 = vadd.f32 %v392, %v434
    %v436 = vpop.f32.mrb[0].mxu0
    %v437 = vadd.f32 %v394, %v436
    %438 = vdwg.mxu0
    %s439 = scalar_lea.vmem %s1, 256
    %v440 = vld [vmem:[%s439] sm:$0xff]
    %v441 = vld [vmem:[%s439 + $0x8] sm:$0xff]
    %v442 = vld [vmem:[%s439 + $0x10] sm:$0xff]
    %v443 = vld [vmem:[%s439 + $0x18] sm:$0xff]
    %v444 = vld [vmem:[%s439 + $0x20] sm:$0xff]
    %v445 = vld [vmem:[%s439 + $0x28] sm:$0xff]
    %v446 = vld [vmem:[%s439 + $0x30] sm:$0xff]
    %v447 = vld [vmem:[%s439 + $0x38] sm:$0xff]
    %v448 = vld [vmem:[%s439 + $0x40] sm:$0xff]
    %v449 = vld [vmem:[%s439 + $0x48] sm:$0xff]
    %v450 = vld [vmem:[%s439 + $0x50] sm:$0xff]
    %v451 = vld [vmem:[%s439 + $0x58] sm:$0xff]
    %v452 = vld [vmem:[%s439 + $0x60] sm:$0xff]
    %v453 = vld [vmem:[%s439 + $0x68] sm:$0xff]
    %v454 = vld [vmem:[%s439 + $0x70] sm:$0xff]
    %v455 = vld [vmem:[%s439 + $0x78] sm:$0xff]
    %v472 = vunpack.c.l.b16 %v440
    %v473 = vunpack.c.h.b16 %v440
    %v474 = vunpack.c.l.b16 %v441
    %v475 = vunpack.c.h.b16 %v441
    %v476 = vunpack.c.l.b16 %v442
    %v477 = vunpack.c.h.b16 %v442
    %v478 = vunpack.c.l.b16 %v443
    %v479 = vunpack.c.h.b16 %v443
    %v480 = vunpack.c.l.b16 %v444
    %v481 = vunpack.c.h.b16 %v444
    %v482 = vunpack.c.l.b16 %v445
    %v483 = vunpack.c.h.b16 %v445
    %v484 = vunpack.c.l.b16 %v446
    %v485 = vunpack.c.h.b16 %v446
    %v486 = vunpack.c.l.b16 %v447
    %v487 = vunpack.c.h.b16 %v447
    %v488 = vunpack.c.l.b16 %v448
    %v489 = vunpack.c.h.b16 %v448
    %v490 = vunpack.c.l.b16 %v449
    %v491 = vunpack.c.h.b16 %v449
    %v492 = vunpack.c.l.b16 %v450
    %v493 = vunpack.c.h.b16 %v450
    %v494 = vunpack.c.l.b16 %v451
    %v495 = vunpack.c.h.b16 %v451
    %v496 = vunpack.c.l.b16 %v452
    %v497 = vunpack.c.h.b16 %v452
    %v498 = vunpack.c.l.b16 %v453
    %v499 = vunpack.c.h.b16 %v453
    %v500 = vunpack.c.l.b16 %v454
    %v501 = vunpack.c.h.b16 %v454
    %v502 = vunpack.c.l.b16 %v455
    %v503 = vunpack.c.h.b16 %v455
    %v504 = vpack.c.b16 %v474, %v472
    %v505 = vpack.c.b16 %v475, %v473
    %v506 = vpack.c.b16 %v478, %v476
    %v507 = vpack.c.b16 %v479, %v477
    %v508 = vpack.c.b16 %v482, %v480
    %v509 = vpack.c.b16 %v483, %v481
    %v510 = vpack.c.b16 %v486, %v484
    %v511 = vpack.c.b16 %v487, %v485
    %v512 = vpack.c.b16 %v490, %v488
    %v513 = vpack.c.b16 %v491, %v489
    %v514 = vpack.c.b16 %v494, %v492
    %v515 = vpack.c.b16 %v495, %v493
    %v516 = vpack.c.b16 %v498, %v496
    %v517 = vpack.c.b16 %v499, %v497
    %v518 = vpack.c.b16 %v502, %v500
    %v519 = vpack.c.b16 %v503, %v501
    %536 = vmatprep.subr.bf16.mxu0 %v505
    %537 = vmatpush1.bf16.msra.mxu0 %v504
    %538 = vmatprep.subr.bf16.mxu0 %v507
    %539 = vmatpush1.bf16.msra.mxu0 %v506
    %540 = vmatprep.subr.bf16.mxu0 %v509
    %541 = vmatpush1.bf16.msra.mxu0 %v508
    %542 = vmatprep.subr.bf16.mxu0 %v511
    %543 = vmatpush1.bf16.msra.mxu0 %v510
    %544 = vmatprep.subr.bf16.mxu0 %v513
    %545 = vmatpush1.bf16.msra.mxu0 %v512
    %546 = vmatprep.subr.bf16.mxu0 %v515
    %547 = vmatpush1.bf16.msra.mxu0 %v514
    %548 = vmatprep.subr.bf16.mxu0 %v517
    %549 = vmatpush1.bf16.msra.mxu0 %v516
    %550 = vmatprep.subr.bf16.mxu0 %v519
    %551 = vmatpush1.bf16.msra.mxu0 %v518
    %552 = vmatprep.subr.bf16.mxu0 0
    %553 = vmatpush1.bf16.msra.mxu0 0
    %554 = vmatprep.subr.bf16.mxu0 0
    %555 = vmatpush1.bf16.msra.mxu0 0
    %556 = vmatprep.subr.bf16.mxu0 0
    %557 = vmatpush1.bf16.msra.mxu0 0
    %558 = vmatprep.subr.bf16.mxu0 0
    %559 = vmatpush1.bf16.msra.mxu0 0
    %560 = vmatprep.subr.bf16.mxu0 0
    %561 = vmatpush1.bf16.msra.mxu0 0
    %562 = vmatprep.subr.bf16.mxu0 0
    %563 = vmatpush1.bf16.msra.mxu0 0
    %564 = vmatprep.subr.bf16.mxu0 0
    %565 = vmatpush1.bf16.msra.mxu0 0
    %566 = vmatprep.subr.bf16.mxu0 0
    %567 = vmatpush1.bf16.msra.mxu0 0
    %568 = vmatprep.mubr.bf16.mxu0 0
    %569 = vmatmul.mubr.bf16.gmra.mrb[0].mxu0 %v351
    %v570 = vpop.f32.mrb[0].mxu0
    %v571 = vadd.f32 0.0, %v570
    %v572 = vpop.f32.mrb[0].mxu0
    %v573 = vadd.f32 0.0, %v572
    %v574 = vpop.f32.mrb[0].mxu0
    %v575 = vadd.f32 0.0, %v574
    %v576 = vpop.f32.mrb[0].mxu0
    %v577 = vadd.f32 0.0, %v576
    %578 = vdwg.mxu0
    %v579 = vadd.f32 %v339, %v571
    %v580 = vadd.f32 %v341, %v573
    %v581 = vadd.f32 %v343, %v575
    %v582 = vadd.f32 %v345, %v577
    %v585 = vunpack.c.l.b16 %v46
    %v586 = vunpack.c.l.b16 %v47
    %v587 = vpack.c.b16 %v586, %v585
    %589 = vmatprep.subr.bf16.mxu0 %v505
    %590 = vmatpush1.bf16.msra.mxu0 %v504
    %591 = vmatprep.subr.bf16.mxu0 %v507
    %592 = vmatpush1.bf16.msra.mxu0 %v506
    %593 = vmatprep.subr.bf16.mxu0 %v509
    %594 = vmatpush1.bf16.msra.mxu0 %v508
    %595 = vmatprep.subr.bf16.mxu0 %v511
    %596 = vmatpush1.bf16.msra.mxu0 %v510
    %597 = vmatprep.subr.bf16.mxu0 %v513
    %598 = vmatpush1.bf16.msra.mxu0 %v512
    %599 = vmatprep.subr.bf16.mxu0 %v515
    %600 = vmatpush1.bf16.msra.mxu0 %v514
    %601 = vmatprep.subr.bf16.mxu0 %v517
    %602 = vmatpush1.bf16.msra.mxu0 %v516
    %603 = vmatprep.subr.bf16.mxu0 %v519
    %604 = vmatpush1.bf16.msra.mxu0 %v518
    %605 = vmatprep.subr.bf16.mxu0 0
    %606 = vmatpush1.bf16.msra.mxu0 0
    %607 = vmatprep.subr.bf16.mxu0 0
    %608 = vmatpush1.bf16.msra.mxu0 0
    %609 = vmatprep.subr.bf16.mxu0 0
    %610 = vmatpush1.bf16.msra.mxu0 0
    %611 = vmatprep.subr.bf16.mxu0 0
    %612 = vmatpush1.bf16.msra.mxu0 0
    %613 = vmatprep.subr.bf16.mxu0 0
    %614 = vmatpush1.bf16.msra.mxu0 0
    %615 = vmatprep.subr.bf16.mxu0 0
    %616 = vmatpush1.bf16.msra.mxu0 0
    %617 = vmatprep.subr.bf16.mxu0 0
    %618 = vmatpush1.bf16.msra.mxu0 0
    %619 = vmatprep.subr.bf16.mxu0 0
    %620 = vmatpush1.bf16.msra.mxu0 0
    %621 = vmatprep.mubr.bf16.mxu0 0
    %622 = vmatmul.mubr.bf16.gmra.mrb[0].mxu0 %v587
    %v623 = vpop.f32.mrb[0].mxu0
    %v624 = vadd.f32 0.0, %v623
    %v625 = vpop.f32.mrb[0].mxu0
    %v626 = vadd.f32 0.0, %v625
    %v627 = vpop.f32.mrb[0].mxu0
    %v628 = vadd.f32 0.0, %v627
    %v629 = vpop.f32.mrb[0].mxu0
    %v630 = vadd.f32 0.0, %v629
    %631 = vdwg.mxu0
    %v632 = vadd.f32 %v431, %v624
    %v633 = vadd.f32 %v433, %v626
    %v634 = vadd.f32 %v435, %v628
    %v635 = vadd.f32 %v437, %v630
    %s636 = scalar_lea.vmem %s1, 384
    %v637 = vld [vmem:[%s636] sm:$0xff]
    %v638 = vld [vmem:[%s636 + $0x8] sm:$0xff]
    %v639 = vld [vmem:[%s636 + $0x10] sm:$0xff]
    %v640 = vld [vmem:[%s636 + $0x18] sm:$0xff]
    %v641 = vld [vmem:[%s636 + $0x20] sm:$0xff]
    %v642 = vld [vmem:[%s636 + $0x28] sm:$0xff]
    %v643 = vld [vmem:[%s636 + $0x30] sm:$0xff]
    %v644 = vld [vmem:[%s636 + $0x38] sm:$0xff]
    %v645 = vld [vmem:[%s636 + $0x40] sm:$0xff]
    %v646 = vld [vmem:[%s636 + $0x48] sm:$0xff]
    %v647 = vld [vmem:[%s636 + $0x50] sm:$0xff]
    %v648 = vld [vmem:[%s636 + $0x58] sm:$0xff]
    %v649 = vld [vmem:[%s636 + $0x60] sm:$0xff]
    %v650 = vld [vmem:[%s636 + $0x68] sm:$0xff]
    %v651 = vld [vmem:[%s636 + $0x70] sm:$0xff]
    %v652 = vld [vmem:[%s636 + $0x78] sm:$0xff]
    %v669 = vunpack.c.l.b16 %v637
    %v670 = vunpack.c.h.b16 %v637
    %v671 = vunpack.c.l.b16 %v638
    %v672 = vunpack.c.h.b16 %v638
    %v673 = vunpack.c.l.b16 %v639
    %v674 = vunpack.c.h.b16 %v639
    %v675 = vunpack.c.l.b16 %v640
    %v676 = vunpack.c.h.b16 %v640
    %v677 = vunpack.c.l.b16 %v641
    %v678 = vunpack.c.h.b16 %v641
    %v679 = vunpack.c.l.b16 %v642
    %v680 = vunpack.c.h.b16 %v642
    %v681 = vunpack.c.l.b16 %v643
    %v682 = vunpack.c.h.b16 %v643
    %v683 = vunpack.c.l.b16 %v644
    %v684 = vunpack.c.h.b16 %v644
    %v685 = vunpack.c.l.b16 %v645
    %v686 = vunpack.c.h.b16 %v645
    %v687 = vunpack.c.l.b16 %v646
    %v688 = vunpack.c.h.b16 %v646
    %v689 = vunpack.c.l.b16 %v647
    %v690 = vunpack.c.h.b16 %v647
    %v691 = vunpack.c.l.b16 %v648
    %v692 = vunpack.c.h.b16 %v648
    %v693 = vunpack.c.l.b16 %v649
    %v694 = vunpack.c.h.b16 %v649
    %v695 = vunpack.c.l.b16 %v650
    %v696 = vunpack.c.h.b16 %v650
    %v697 = vunpack.c.l.b16 %v651
    %v698 = vunpack.c.h.b16 %v651
    %v699 = vunpack.c.l.b16 %v652
    %v700 = vunpack.c.h.b16 %v652
    %v701 = vpack.c.b16 %v671, %v669
    %v702 = vpack.c.b16 %v672, %v670
    %v703 = vpack.c.b16 %v675, %v673
    %v704 = vpack.c.b16 %v676, %v674
    %v705 = vpack.c.b16 %v679, %v677
    %v706 = vpack.c.b16 %v680, %v678
    %v707 = vpack.c.b16 %v683, %v681
    %v708 = vpack.c.b16 %v684, %v682
    %v709 = vpack.c.b16 %v687, %v685
    %v710 = vpack.c.b16 %v688, %v686
    %v711 = vpack.c.b16 %v691, %v689
    %v712 = vpack.c.b16 %v692, %v690
    %v713 = vpack.c.b16 %v695, %v693
    %v714 = vpack.c.b16 %v696, %v694
    %v715 = vpack.c.b16 %v699, %v697
    %v716 = vpack.c.b16 %v700, %v698
    %733 = vmatprep.subr.bf16.mxu0 %v702
    %734 = vmatpush1.bf16.msra.mxu0 %v701
    %735 = vmatprep.subr.bf16.mxu0 %v704
    %736 = vmatpush1.bf16.msra.mxu0 %v703
    %737 = vmatprep.subr.bf16.mxu0 %v706
    %738 = vmatpush1.bf16.msra.mxu0 %v705
    %739 = vmatprep.subr.bf16.mxu0 %v708
    %740 = vmatpush1.bf16.msra.mxu0 %v707
    %741 = vmatprep.subr.bf16.mxu0 %v710
    %742 = vmatpush1.bf16.msra.mxu0 %v709
    %743 = vmatprep.subr.bf16.mxu0 %v712
    %744 = vmatpush1.bf16.msra.mxu0 %v711
    %745 = vmatprep.subr.bf16.mxu0 %v714
    %746 = vmatpush1.bf16.msra.mxu0 %v713
    %747 = vmatprep.subr.bf16.mxu0 %v716
    %748 = vmatpush1.bf16.msra.mxu0 %v715
    %749 = vmatprep.subr.bf16.mxu0 0
    %750 = vmatpush1.bf16.msra.mxu0 0
    %751 = vmatprep.subr.bf16.mxu0 0
    %752 = vmatpush1.bf16.msra.mxu0 0
    %753 = vmatprep.subr.bf16.mxu0 0
    %754 = vmatpush1.bf16.msra.mxu0 0
    %755 = vmatprep.subr.bf16.mxu0 0
    %756 = vmatpush1.bf16.msra.mxu0 0
    %757 = vmatprep.subr.bf16.mxu0 0
    %758 = vmatpush1.bf16.msra.mxu0 0
    %759 = vmatprep.subr.bf16.mxu0 0
    %760 = vmatpush1.bf16.msra.mxu0 0
    %761 = vmatprep.subr.bf16.mxu0 0
    %762 = vmatpush1.bf16.msra.mxu0 0
    %763 = vmatprep.subr.bf16.mxu0 0
    %764 = vmatpush1.bf16.msra.mxu0 0
    %765 = vmatprep.mubr.bf16.mxu0 0
    %766 = vmatmul.mubr.bf16.gmra.mrb[0].mxu0 %v587
    %v767 = vpop.f32.mrb[0].mxu0
    %v768 = vadd.f32 0.0, %v767
    %v769 = vpop.f32.mrb[0].mxu0
    %v770 = vadd.f32 0.0, %v769
    %v771 = vpop.f32.mrb[0].mxu0
    %v772 = vadd.f32 0.0, %v771
    %v773 = vpop.f32.mrb[0].mxu0
    %v774 = vadd.f32 0.0, %v773
    %775 = vdwg.mxu0
    %v776 = vadd.f32 %v579, %v768
    %v777 = vadd.f32 %v580, %v770
    %v778 = vadd.f32 %v581, %v772
    %v779 = vadd.f32 %v582, %v774
    %v782 = vunpack.c.l.b16 %v48
    %v783 = vunpack.c.l.b16 %v49
    %v784 = vpack.c.b16 %v783, %v782
    %786 = vmatprep.subr.bf16.mxu0 %v702
    %787 = vmatpush1.bf16.msra.mxu0 %v701
    %788 = vmatprep.subr.bf16.mxu0 %v704
    %789 = vmatpush1.bf16.msra.mxu0 %v703
    %790 = vmatprep.subr.bf16.mxu0 %v706
    %791 = vmatpush1.bf16.msra.mxu0 %v705
    %792 = vmatprep.subr.bf16.mxu0 %v708
    %793 = vmatpush1.bf16.msra.mxu0 %v707
    %794 = vmatprep.subr.bf16.mxu0 %v710
    %795 = vmatpush1.bf16.msra.mxu0 %v709
    %796 = vmatprep.subr.bf16.mxu0 %v712
    %797 = vmatpush1.bf16.msra.mxu0 %v711
    %798 = vmatprep.subr.bf16.mxu0 %v714
    %799 = vmatpush1.bf16.msra.mxu0 %v713
    %800 = vmatprep.subr.bf16.mxu0 %v716
    %801 = vmatpush1.bf16.msra.mxu0 %v715
    %802 = vmatprep.subr.bf16.mxu0 0
    %803 = vmatpush1.bf16.msra.mxu0 0
    %804 = vmatprep.subr.bf16.mxu0 0
    %805 = vmatpush1.bf16.msra.mxu0 0
    %806 = vmatprep.subr.bf16.mxu0 0
    %807 = vmatpush1.bf16.msra.mxu0 0
    %808 = vmatprep.subr.bf16.mxu0 0
    %809 = vmatpush1.bf16.msra.mxu0 0
    %810 = vmatprep.subr.bf16.mxu0 0
    %811 = vmatpush1.bf16.msra.mxu0 0
    %812 = vmatprep.subr.bf16.mxu0 0
    %813 = vmatpush1.bf16.msra.mxu0 0
    %814 = vmatprep.subr.bf16.mxu0 0
    %815 = vmatpush1.bf16.msra.mxu0 0
    %816 = vmatprep.subr.bf16.mxu0 0
    %817 = vmatpush1.bf16.msra.mxu0 0
    %818 = vmatprep.mubr.bf16.mxu0 0
    %819 = vmatmul.mubr.bf16.gmra.mrb[0].mxu0 %v784
    %v820 = vpop.f32.mrb[0].mxu0
    %v821 = vadd.f32 0.0, %v820
    %v822 = vpop.f32.mrb[0].mxu0
    %v823 = vadd.f32 0.0, %v822
    %v824 = vpop.f32.mrb[0].mxu0
    %v825 = vadd.f32 0.0, %v824
    %v826 = vpop.f32.mrb[0].mxu0
    %v827 = vadd.f32 0.0, %v826
    %828 = vdwg.mxu0
    %v829 = vadd.f32 %v632, %v821
    %v830 = vadd.f32 %v633, %v823
    %v831 = vadd.f32 %v634, %v825
    %v832 = vadd.f32 %v635, %v827
    %s833 = scalar_lea.vmem %s1, 512
    %v834 = vld [vmem:[%s833] sm:$0xff]
    %v835 = vld [vmem:[%s833 + $0x8] sm:$0xff]
    %v836 = vld [vmem:[%s833 + $0x10] sm:$0xff]
    %v837 = vld [vmem:[%s833 + $0x18] sm:$0xff]
    %v838 = vld [vmem:[%s833 + $0x20] sm:$0xff]
    %v839 = vld [vmem:[%s833 + $0x28] sm:$0xff]
    %v840 = vld [vmem:[%s833 + $0x30] sm:$0xff]
    %v841 = vld [vmem:[%s833 + $0x38] sm:$0xff]
    %v842 = vld [vmem:[%s833 + $0x40] sm:$0xff]
    %v843 = vld [vmem:[%s833 + $0x48] sm:$0xff]
    %v844 = vld [vmem:[%s833 + $0x50] sm:$0xff]
    %v845 = vld [vmem:[%s833 + $0x58] sm:$0xff]
    %v846 = vld [vmem:[%s833 + $0x60] sm:$0xff]
    %v847 = vld [vmem:[%s833 + $0x68] sm:$0xff]
    %v848 = vld [vmem:[%s833 + $0x70] sm:$0xff]
    %v849 = vld [vmem:[%s833 + $0x78] sm:$0xff]
    %v866 = vunpack.c.l.b16 %v834
    %v867 = vunpack.c.h.b16 %v834
    %v868 = vunpack.c.l.b16 %v835
    %v869 = vunpack.c.h.b16 %v835
    %v870 = vunpack.c.l.b16 %v836
    %v871 = vunpack.c.h.b16 %v836
    %v872 = vunpack.c.l.b16 %v837
    %v873 = vunpack.c.h.b16 %v837
    %v874 = vunpack.c.l.b16 %v838
    %v875 = vunpack.c.h.b16 %v838
    %v876 = vunpack.c.l.b16 %v839
    %v877 = vunpack.c.h.b16 %v839
    %v878 = vunpack.c.l.b16 %v840
    %v879 = vunpack.c.h.b16 %v840
    %v880 = vunpack.c.l.b16 %v841
    %v881 = vunpack.c.h.b16 %v841
    %v882 = vunpack.c.l.b16 %v842
    %v883 = vunpack.c.h.b16 %v842
    %v884 = vunpack.c.l.b16 %v843
    %v885 = vunpack.c.h.b16 %v843
    %v886 = vunpack.c.l.b16 %v844
    %v887 = vunpack.c.h.b16 %v844
    %v888 = vunpack.c.l.b16 %v845
    %v889 = vunpack.c.h.b16 %v845
    %v890 = vunpack.c.l.b16 %v846
    %v891 = vunpack.c.h.b16 %v846
    %v892 = vunpack.c.l.b16 %v847
    %v893 = vunpack.c.h.b16 %v847
    %v894 = vunpack.c.l.b16 %v848
    %v895 = vunpack.c.h.b16 %v848
    %v896 = vunpack.c.l.b16 %v849
    %v897 = vunpack.c.h.b16 %v849
    %v898 = vpack.c.b16 %v868, %v866
    %v899 = vpack.c.b16 %v869, %v867
    %v900 = vpack.c.b16 %v872, %v870
    %v901 = vpack.c.b16 %v873, %v871
    %v902 = vpack.c.b16 %v876, %v874
    %v903 = vpack.c.b16 %v877, %v875
    %v904 = vpack.c.b16 %v880, %v878
    %v905 = vpack.c.b16 %v881, %v879
    %v906 = vpack.c.b16 %v884, %v882
    %v907 = vpack.c.b16 %v885, %v883
    %v908 = vpack.c.b16 %v888, %v886
    %v909 = vpack.c.b16 %v889, %v887
    %v910 = vpack.c.b16 %v892, %v890
    %v911 = vpack.c.b16 %v893, %v891
    %v912 = vpack.c.b16 %v896, %v894
    %v913 = vpack.c.b16 %v897, %v895
    %930 = vmatprep.subr.bf16.mxu0 %v899
    %931 = vmatpush1.bf16.msra.mxu0 %v898
    %932 = vmatprep.subr.bf16.mxu0 %v901
    %933 = vmatpush1.bf16.msra.mxu0 %v900
    %934 = vmatprep.subr.bf16.mxu0 %v903
    %935 = vmatpush1.bf16.msra.mxu0 %v902
    %936 = vmatprep.subr.bf16.mxu0 %v905
    %937 = vmatpush1.bf16.msra.mxu0 %v904
    %938 = vmatprep.subr.bf16.mxu0 %v907
    %939 = vmatpush1.bf16.msra.mxu0 %v906
    %940 = vmatprep.subr.bf16.mxu0 %v909
    %941 = vmatpush1.bf16.msra.mxu0 %v908
    %942 = vmatprep.subr.bf16.mxu0 %v911
    %943 = vmatpush1.bf16.msra.mxu0 %v910
    %944 = vmatprep.subr.bf16.mxu0 %v913
    %945 = vmatpush1.bf16.msra.mxu0 %v912
    %946 = vmatprep.subr.bf16.mxu0 0
    %947 = vmatpush1.bf16.msra.mxu0 0
    %948 = vmatprep.subr.bf16.mxu0 0
    %949 = vmatpush1.bf16.msra.mxu0 0
    %950 = vmatprep.subr.bf16.mxu0 0
    %951 = vmatpush1.bf16.msra.mxu0 0
    %952 = vmatprep.subr.bf16.mxu0 0
    %953 = vmatpush1.bf16.msra.mxu0 0
    %954 = vmatprep.subr.bf16.mxu0 0
    %955 = vmatpush1.bf16.msra.mxu0 0
    %956 = vmatprep.subr.bf16.mxu0 0
    %957 = vmatpush1.bf16.msra.mxu0 0
    %958 = vmatprep.subr.bf16.mxu0 0
    %959 = vmatpush1.bf16.msra.mxu0 0
    %960 = vmatprep.subr.bf16.mxu0 0
    %961 = vmatpush1.bf16.msra.mxu0 0
    %962 = vmatprep.mubr.bf16.mxu0 0
    %963 = vmatmul.mubr.bf16.gmra.mrb[0].mxu0 %v784
    %v964 = vpop.f32.mrb[0].mxu0
    %v965 = vadd.f32 0.0, %v964
    %v966 = vpop.f32.mrb[0].mxu0
    %v967 = vadd.f32 0.0, %v966
    %v968 = vpop.f32.mrb[0].mxu0
    %v969 = vadd.f32 0.0, %v968
    %v970 = vpop.f32.mrb[0].mxu0
    %v971 = vadd.f32 0.0, %v970
    %972 = vdwg.mxu0
    %v973 = vadd.f32 %v776, %v965
    %v974 = vadd.f32 %v777, %v967
    %v975 = vadd.f32 %v778, %v969
    %v976 = vadd.f32 %v779, %v971
    %v979 = vunpack.c.l.b16 %v50
    %v980 = vunpack.c.l.b16 %v51
    %v981 = vpack.c.b16 %v980, %v979
    %983 = vmatprep.subr.bf16.mxu0 %v899
    %984 = vmatpush1.bf16.msra.mxu0 %v898
    %985 = vmatprep.subr.bf16.mxu0 %v901
    %986 = vmatpush1.bf16.msra.mxu0 %v900
    %987 = vmatprep.subr.bf16.mxu0 %v903
    %988 = vmatpush1.bf16.msra.mxu0 %v902
    %989 = vmatprep.subr.bf16.mxu0 %v905
    %990 = vmatpush1.bf16.msra.mxu0 %v904
    %991 = vmatprep.subr.bf16.mxu0 %v907
    %992 = vmatpush1.bf16.msra.mxu0 %v906
    %993 = vmatprep.subr.bf16.mxu0 %v909
    %994 = vmatpush1.bf16.msra.mxu0 %v908
    %995 = vmatprep.subr.bf16.mxu0 %v911
    %996 = vmatpush1.bf16.msra.mxu0 %v910
    %997 = vmatprep.subr.bf16.mxu0 %v913
    %998 = vmatpush1.bf16.msra.mxu0 %v912
    %999 = vmatprep.subr.bf16.mxu0 0
    %1000 = vmatpush1.bf16.msra.mxu0 0
    %1001 = vmatprep.subr.bf16.mxu0 0
    %1002 = vmatpush1.bf16.msra.mxu0 0
    %1003 = vmatprep.subr.bf16.mxu0 0
    %1004 = vmatpush1.bf16.msra.mxu0 0
    %1005 = vmatprep.subr.bf16.mxu0 0
    %1006 = vmatpush1.bf16.msra.mxu0 0
    %1007 = vmatprep.subr.bf16.mxu0 0
    %1008 = vmatpush1.bf16.msra.mxu0 0
    %1009 = vmatprep.subr.bf16.mxu0 0
    %1010 = vmatpush1.bf16.msra.mxu0 0
    %1011 = vmatprep.subr.bf16.mxu0 0
    %1012 = vmatpush1.bf16.msra.mxu0 0
    %1013 = vmatprep.subr.bf16.mxu0 0
    %1014 = vmatpush1.bf16.msra.mxu0 0
    %1015 = vmatprep.mubr.bf16.mxu0 0
    %1016 = vmatmul.mubr.bf16.gmra.mrb[0].mxu0 %v981
    %v1017 = vpop.f32.mrb[0].mxu0
    %v1018 = vadd.f32 0.0, %v1017
    %v1019 = vpop.f32.mrb[0].mxu0
    %v1020 = vadd.f32 0.0, %v1019
    %v1021 = vpop.f32.mrb[0].mxu0
    %v1022 = vadd.f32 0.0, %v1021
    %v1023 = vpop.f32.mrb[0].mxu0
    %v1024 = vadd.f32 0.0, %v1023
    %1025 = vdwg.mxu0
    %v1026 = vadd.f32 %v829, %v1018
    %v1027 = vadd.f32 %v830, %v1020
    %v1028 = vadd.f32 %v831, %v1022
    %v1029 = vadd.f32 %v832, %v1024
    %v1030 = vmax.f32 %v973, %v1026
    %v1031 = vmax.f32 %v974, %v1027
    %v1032 = vmax.f32 %v975, %v1028
    %v1033 = vmax.f32 %v976, %v1029
    %v1034 = vmax.f32 %v1030, %v1031
    %v1035 = vmax.f32 %v1032, %v1033
    %1036 = vmatprep.subr.bf16.mxu0 %v144
    %1037 = vmatpush1.bf16.msra.mxu0 %v143
    %1038 = vmatprep.subr.bf16.mxu0 %v146
    %1039 = vmatpush1.bf16.msra.mxu0 %v145
    %1040 = vmatprep.subr.bf16.mxu0 %v148
    %1041 = vmatpush1.bf16.msra.mxu0 %v147
    %1042 = vmatprep.subr.bf16.mxu0 %v150
    %1043 = vmatpush1.bf16.msra.mxu0 %v149
    %1044 = vmatprep.subr.bf16.mxu0 %v152
    %1045 = vmatpush1.bf16.msra.mxu0 %v151
    %1046 = vmatprep.subr.bf16.mxu0 %v154
    %1047 = vmatpush1.bf16.msra.mxu0 %v153
    %1048 = vmatprep.subr.bf16.mxu0 %v156
    %1049 = vmatpush1.bf16.msra.mxu0 %v155
    %1050 = vmatprep.subr.bf16.mxu0 %v158
    %1051 = vmatpush1.bf16.msra.mxu0 %v157
    %1052 = vmatprep.subr.bf16.mxu0 0
    %1053 = vmatpush1.bf16.msra.mxu0 0
    %1054 = vmatprep.subr.bf16.mxu0 0
    %1055 = vmatpush1.bf16.msra.mxu0 0
    %1056 = vmatprep.subr.bf16.mxu0 0
    %1057 = vmatpush1.bf16.msra.mxu0 0
    %1058 = vmatprep.subr.bf16.mxu0 0
    %1059 = vmatpush1.bf16.msra.mxu0 0
    %1060 = vmatprep.subr.bf16.mxu0 0
    %1061 = vmatpush1.bf16.msra.mxu0 0
    %1062 = vmatprep.subr.bf16.mxu0 0
    %1063 = vmatpush1.bf16.msra.mxu0 0
    %1064 = vmatprep.subr.bf16.mxu0 0
    %1065 = vmatpush1.bf16.msra.mxu0 0
    %1066 = vmatprep.subr.bf16.mxu0 0
    %1067 = vmatpush1.bf16.msra.mxu0 0
    %1068 = vmatprep.mubr.bf16.mxu0 0
    %1069 = vmatmul.mubr.bf16.gmra.mrb[0].mxu0 %v587
    %v1070 = vpop.f32.mrb[0].mxu0
    %v1071 = vadd.f32 0.0, %v1070
    %v1072 = vpop.f32.mrb[0].mxu0
    %v1073 = vadd.f32 0.0, %v1072
    %v1074 = vpop.f32.mrb[0].mxu0
    %v1075 = vadd.f32 0.0, %v1074
    %v1076 = vpop.f32.mrb[0].mxu0
    %v1077 = vadd.f32 0.0, %v1076
    %1078 = vdwg.mxu0
    %1079 = vmatprep.subr.bf16.mxu0 %v273
    %1080 = vmatpush1.bf16.msra.mxu0 %v272
    %1081 = vmatprep.subr.bf16.mxu0 %v275
    %1082 = vmatpush1.bf16.msra.mxu0 %v274
    %1083 = vmatprep.subr.bf16.mxu0 %v277
    %1084 = vmatpush1.bf16.msra.mxu0 %v276
    %1085 = vmatprep.subr.bf16.mxu0 %v279
    %1086 = vmatpush1.bf16.msra.mxu0 %v278
    %1087 = vmatprep.subr.bf16.mxu0 %v281
    %1088 = vmatpush1.bf16.msra.mxu0 %v280
    %1089 = vmatprep.subr.bf16.mxu0 %v283
    %1090 = vmatpush1.bf16.msra.mxu0 %v282
    %1091 = vmatprep.subr.bf16.mxu0 %v285
    %1092 = vmatpush1.bf16.msra.mxu0 %v284
    %1093 = vmatprep.subr.bf16.mxu0 %v287
    %1094 = vmatpush1.bf16.msra.mxu0 %v286
    %1095 = vmatprep.subr.bf16.mxu0 0
    %1096 = vmatpush1.bf16.msra.mxu0 0
    %1097 = vmatprep.subr.bf16.mxu0 0
    %1098 = vmatpush1.bf16.msra.mxu0 0
    %1099 = vmatprep.subr.bf16.mxu0 0
    %1100 = vmatpush1.bf16.msra.mxu0 0
    %1101 = vmatprep.subr.bf16.mxu0 0
    %1102 = vmatpush1.bf16.msra.mxu0 0
    %1103 = vmatprep.subr.bf16.mxu0 0
    %1104 = vmatpush1.bf16.msra.mxu0 0
    %1105 = vmatprep.subr.bf16.mxu0 0
    %1106 = vmatpush1.bf16.msra.mxu0 0
    %1107 = vmatprep.subr.bf16.mxu0 0
    %1108 = vmatpush1.bf16.msra.mxu0 0
    %1109 = vmatprep.subr.bf16.mxu0 0
    %1110 = vmatpush1.bf16.msra.mxu0 0
    %1111 = vmatprep.mubr.bf16.mxu0 0
    %1112 = vmatmul.mubr.bf16.gmra.mrb[0].mxu0 %v351
    %v1113 = vpop.f32.mrb[0].mxu0
    %v1114 = vadd.f32 %v1071, %v1113
    %v1115 = vpop.f32.mrb[0].mxu0
    %v1116 = vadd.f32 %v1073, %v1115
    %v1117 = vpop.f32.mrb[0].mxu0
    %v1118 = vadd.f32 %v1075, %v1117
    %v1119 = vpop.f32.mrb[0].mxu0
    %v1120 = vadd.f32 %v1077, %v1119
    %1121 = vdwg.mxu0
    %1122 = vmatprep.subr.bf16.mxu0 %v144
    %1123 = vmatpush1.bf16.msra.mxu0 %v143
    %1124 = vmatprep.subr.bf16.mxu0 %v146
    %1125 = vmatpush1.bf16.msra.mxu0 %v145
    %1126 = vmatprep.subr.bf16.mxu0 %v148
    %1127 = vmatpush1.bf16.msra.mxu0 %v147
    %1128 = vmatprep.subr.bf16.mxu0 %v150
    %1129 = vmatpush1.bf16.msra.mxu0 %v149
    %1130 = vmatprep.subr.bf16.mxu0 %v152
    %1131 = vmatpush1.bf16.msra.mxu0 %v151
    %1132 = vmatprep.subr.bf16.mxu0 %v154
    %1133 = vmatpush1.bf16.msra.mxu0 %v153
    %1134 = vmatprep.subr.bf16.mxu0 %v156
    %1135 = vmatpush1.bf16.msra.mxu0 %v155
    %1136 = vmatprep.subr.bf16.mxu0 %v158
    %1137 = vmatpush1.bf16.msra.mxu0 %v157
    %1138 = vmatprep.subr.bf16.mxu0 0
    %1139 = vmatpush1.bf16.msra.mxu0 0
    %1140 = vmatprep.subr.bf16.mxu0 0
    %1141 = vmatpush1.bf16.msra.mxu0 0
    %1142 = vmatprep.subr.bf16.mxu0 0
    %1143 = vmatpush1.bf16.msra.mxu0 0
    %1144 = vmatprep.subr.bf16.mxu0 0
    %1145 = vmatpush1.bf16.msra.mxu0 0
    %1146 = vmatprep.subr.bf16.mxu0 0
    %1147 = vmatpush1.bf16.msra.mxu0 0
    %1148 = vmatprep.subr.bf16.mxu0 0
    %1149 = vmatpush1.bf16.msra.mxu0 0
    %1150 = vmatprep.subr.bf16.mxu0 0
    %1151 = vmatpush1.bf16.msra.mxu0 0
    %1152 = vmatprep.subr.bf16.mxu0 0
    %1153 = vmatpush1.bf16.msra.mxu0 0
    %1154 = vmatprep.mubr.bf16.mxu0 0
    %1155 = vmatmul.mubr.bf16.gmra.mrb[0].mxu0 %v784
    %v1156 = vpop.f32.mrb[0].mxu0
    %v1157 = vadd.f32 0.0, %v1156
    %v1158 = vpop.f32.mrb[0].mxu0
    %v1159 = vadd.f32 0.0, %v1158
    %v1160 = vpop.f32.mrb[0].mxu0
    %v1161 = vadd.f32 0.0, %v1160
    %v1162 = vpop.f32.mrb[0].mxu0
    %v1163 = vadd.f32 0.0, %v1162
    %1164 = vdwg.mxu0
    %1165 = vmatprep.subr.bf16.mxu0 %v273
    %1166 = vmatpush1.bf16.msra.mxu0 %v272
    %1167 = vmatprep.subr.bf16.mxu0 %v275
    %1168 = vmatpush1.bf16.msra.mxu0 %v274
    %1169 = vmatprep.subr.bf16.mxu0 %v277
    %1170 = vmatpush1.bf16.msra.mxu0 %v276
    %1171 = vmatprep.subr.bf16.mxu0 %v279
    %1172 = vmatpush1.bf16.msra.mxu0 %v278
    %1173 = vmatprep.subr.bf16.mxu0 %v281
    %1174 = vmatpush1.bf16.msra.mxu0 %v280
    %1175 = vmatprep.subr.bf16.mxu0 %v283
    %1176 = vmatpush1.bf16.msra.mxu0 %v282
    %1177 = vmatprep.subr.bf16.mxu0 %v285
    %1178 = vmatpush1.bf16.msra.mxu0 %v284
    %1179 = vmatprep.subr.bf16.mxu0 %v287
    %1180 = vmatpush1.bf16.msra.mxu0 %v286
    %1181 = vmatprep.subr.bf16.mxu0 0
    %1182 = vmatpush1.bf16.msra.mxu0 0
    %1183 = vmatprep.subr.bf16.mxu0 0
    %1184 = vmatpush1.bf16.msra.mxu0 0
    %1185 = vmatprep.subr.bf16.mxu0 0
    %1186 = vmatpush1.bf16.msra.mxu0 0
    %1187 = vmatprep.subr.bf16.mxu0 0
    %1188 = vmatpush1.bf16.msra.mxu0 0
    %1189 = vmatprep.subr.bf16.mxu0 0
    %1190 = vmatpush1.bf16.msra.mxu0 0
    %1191 = vmatprep.subr.bf16.mxu0 0
    %1192 = vmatpush1.bf16.msra.mxu0 0
    %1193 = vmatprep.subr.bf16.mxu0 0
    %1194 = vmatpush1.bf16.msra.mxu0 0
    %1195 = vmatprep.subr.bf16.mxu0 0
    %1196 = vmatpush1.bf16.msra.mxu0 0
    %1197 = vmatprep.mubr.bf16.mxu0 0
    %1198 = vmatmul.mubr.bf16.gmra.mrb[0].mxu0 %v587
    %v1199 = vpop.f32.mrb[0].mxu0
    %v1200 = vadd.f32 %v1157, %v1199
    %v1201 = vpop.f32.mrb[0].mxu0
    %v1202 = vadd.f32 %v1159, %v1201
    %v1203 = vpop.f32.mrb[0].mxu0
    %v1204 = vadd.f32 %v1161, %v1203
    %v1205 = vpop.f32.mrb[0].mxu0
    %v1206 = vadd.f32 %v1163, %v1205
    %1207 = vdwg.mxu0
    %1208 = vmatprep.subr.bf16.mxu0 %v505
    %1209 = vmatpush1.bf16.msra.mxu0 %v504
    %1210 = vmatprep.subr.bf16.mxu0 %v507
    %1211 = vmatpush1.bf16.msra.mxu0 %v506
    %1212 = vmatprep.subr.bf16.mxu0 %v509
    %1213 = vmatpush1.bf16.msra.mxu0 %v508
    %1214 = vmatprep.subr.bf16.mxu0 %v511
    %1215 = vmatpush1.bf16.msra.mxu0 %v510
    %1216 = vmatprep.subr.bf16.mxu0 %v513
    %1217 = vmatpush1.bf16.msra.mxu0 %v512
    %1218 = vmatprep.subr.bf16.mxu0 %v515
    %1219 = vmatpush1.bf16.msra.mxu0 %v514
    %1220 = vmatprep.subr.bf16.mxu0 %v517
    %1221 = vmatpush1.bf16.msra.mxu0 %v516
    %1222 = vmatprep.subr.bf16.mxu0 %v519
    %1223 = vmatpush1.bf16.msra.mxu0 %v518
    %1224 = vmatprep.subr.bf16.mxu0 0
    %1225 = vmatpush1.bf16.msra.mxu0 0
    %1226 = vmatprep.subr.bf16.mxu0 0
    %1227 = vmatpush1.bf16.msra.mxu0 0
    %1228 = vmatprep.subr.bf16.mxu0 0
    %1229 = vmatpush1.bf16.msra.mxu0 0
    %1230 = vmatprep.subr.bf16.mxu0 0
    %1231 = vmatpush1.bf16.msra.mxu0 0
    %1232 = vmatprep.subr.bf16.mxu0 0
    %1233 = vmatpush1.bf16.msra.mxu0 0
    %1234 = vmatprep.subr.bf16.mxu0 0
    %1235 = vmatpush1.bf16.msra.mxu0 0
    %1236 = vmatprep.subr.bf16.mxu0 0
    %1237 = vmatpush1.bf16.msra.mxu0 0
    %1238 = vmatprep.subr.bf16.mxu0 0
    %1239 = vmatpush1.bf16.msra.mxu0 0
    %1240 = vmatprep.mubr.bf16.mxu0 0
    %1241 = vmatmul.mubr.bf16.gmra.mrb[0].mxu0 %v784
    %v1242 = vpop.f32.mrb[0].mxu0
    %v1243 = vadd.f32 0.0, %v1242
    %v1244 = vpop.f32.mrb[0].mxu0
    %v1245 = vadd.f32 0.0, %v1244
    %v1246 = vpop.f32.mrb[0].mxu0
    %v1247 = vadd.f32 0.0, %v1246
    %v1248 = vpop.f32.mrb[0].mxu0
    %v1249 = vadd.f32 0.0, %v1248
    %1250 = vdwg.mxu0
    %v1251 = vadd.f32 %v1114, %v1243
    %v1252 = vadd.f32 %v1116, %v1245
    %v1253 = vadd.f32 %v1118, %v1247
    %v1254 = vadd.f32 %v1120, %v1249
    %1255 = vmatprep.subr.bf16.mxu0 %v505
    %1256 = vmatpush1.bf16.msra.mxu0 %v504
    %1257 = vmatprep.subr.bf16.mxu0 %v507
    %1258 = vmatpush1.bf16.msra.mxu0 %v506
    %1259 = vmatprep.subr.bf16.mxu0 %v509
    %1260 = vmatpush1.bf16.msra.mxu0 %v508
    %1261 = vmatprep.subr.bf16.mxu0 %v511
    %1262 = vmatpush1.bf16.msra.mxu0 %v510
    %1263 = vmatprep.subr.bf16.mxu0 %v513
    %1264 = vmatpush1.bf16.msra.mxu0 %v512
    %1265 = vmatprep.subr.bf16.mxu0 %v515
    %1266 = vmatpush1.bf16.msra.mxu0 %v514
    %1267 = vmatprep.subr.bf16.mxu0 %v517
    %1268 = vmatpush1.bf16.msra.mxu0 %v516
    %1269 = vmatprep.subr.bf16.mxu0 %v519
    %1270 = vmatpush1.bf16.msra.mxu0 %v518
    %1271 = vmatprep.subr.bf16.mxu0 0
    %1272 = vmatpush1.bf16.msra.mxu0 0
    %1273 = vmatprep.subr.bf16.mxu0 0
    %1274 = vmatpush1.bf16.msra.mxu0 0
    %1275 = vmatprep.subr.bf16.mxu0 0
    %1276 = vmatpush1.bf16.msra.mxu0 0
    %1277 = vmatprep.subr.bf16.mxu0 0
    %1278 = vmatpush1.bf16.msra.mxu0 0
    %1279 = vmatprep.subr.bf16.mxu0 0
    %1280 = vmatpush1.bf16.msra.mxu0 0
    %1281 = vmatprep.subr.bf16.mxu0 0
    %1282 = vmatpush1.bf16.msra.mxu0 0
    %1283 = vmatprep.subr.bf16.mxu0 0
    %1284 = vmatpush1.bf16.msra.mxu0 0
    %1285 = vmatprep.subr.bf16.mxu0 0
    %1286 = vmatpush1.bf16.msra.mxu0 0
    %1287 = vmatprep.mubr.bf16.mxu0 0
    %1288 = vmatmul.mubr.bf16.gmra.mrb[0].mxu0 %v981
    %v1289 = vpop.f32.mrb[0].mxu0
    %v1290 = vadd.f32 0.0, %v1289
    %v1291 = vpop.f32.mrb[0].mxu0
    %v1292 = vadd.f32 0.0, %v1291
    %v1293 = vpop.f32.mrb[0].mxu0
    %v1294 = vadd.f32 0.0, %v1293
    %v1295 = vpop.f32.mrb[0].mxu0
    %v1296 = vadd.f32 0.0, %v1295
    %1297 = vdwg.mxu0
    %v1298 = vadd.f32 %v1200, %v1290
    %v1299 = vadd.f32 %v1202, %v1292
    %v1300 = vadd.f32 %v1204, %v1294
    %v1301 = vadd.f32 %v1206, %v1296
    %1302 = vmatprep.subr.bf16.mxu0 %v702
    %1303 = vmatpush1.bf16.msra.mxu0 %v701
    %1304 = vmatprep.subr.bf16.mxu0 %v704
    %1305 = vmatpush1.bf16.msra.mxu0 %v703
    %1306 = vmatprep.subr.bf16.mxu0 %v706
    %1307 = vmatpush1.bf16.msra.mxu0 %v705
    %1308 = vmatprep.subr.bf16.mxu0 %v708
    %1309 = vmatpush1.bf16.msra.mxu0 %v707
    %1310 = vmatprep.subr.bf16.mxu0 %v710
    %1311 = vmatpush1.bf16.msra.mxu0 %v709
    %1312 = vmatprep.subr.bf16.mxu0 %v712
    %1313 = vmatpush1.bf16.msra.mxu0 %v711
    %1314 = vmatprep.subr.bf16.mxu0 %v714
    %1315 = vmatpush1.bf16.msra.mxu0 %v713
    %1316 = vmatprep.subr.bf16.mxu0 %v716
    %1317 = vmatpush1.bf16.msra.mxu0 %v715
    %1318 = vmatprep.subr.bf16.mxu0 0
    %1319 = vmatpush1.bf16.msra.mxu0 0
    %1320 = vmatprep.subr.bf16.mxu0 0
    %1321 = vmatpush1.bf16.msra.mxu0 0
    %1322 = vmatprep.subr.bf16.mxu0 0
    %1323 = vmatpush1.bf16.msra.mxu0 0
    %1324 = vmatprep.subr.bf16.mxu0 0
    %1325 = vmatpush1.bf16.msra.mxu0 0
    %1326 = vmatprep.subr.bf16.mxu0 0
    %1327 = vmatpush1.bf16.msra.mxu0 0
    %1328 = vmatprep.subr.bf16.mxu0 0
    %1329 = vmatpush1.bf16.msra.mxu0 0
    %1330 = vmatprep.subr.bf16.mxu0 0
    %1331 = vmatpush1.bf16.msra.mxu0 0
    %1332 = vmatprep.subr.bf16.mxu0 0
    %1333 = vmatpush1.bf16.msra.mxu0 0
    %1334 = vmatprep.mubr.bf16.mxu0 0
    %1335 = vmatmul.mubr.bf16.gmra.mrb[0].mxu0 %v981
    %v1336 = vpop.f32.mrb[0].mxu0
    %v1337 = vadd.f32 0.0, %v1336
    %v1338 = vpop.f32.mrb[0].mxu0
    %v1339 = vadd.f32 0.0, %v1338
    %v1340 = vpop.f32.mrb[0].mxu0
    %v1341 = vadd.f32 0.0, %v1340
    %v1342 = vpop.f32.mrb[0].mxu0
    %v1343 = vadd.f32 0.0, %v1342
    %1344 = vdwg.mxu0
    %v1345 = vadd.f32 %v1251, %v1337
    %v1346 = vadd.f32 %v1252, %v1339
    %v1347 = vadd.f32 %v1253, %v1341
    %v1348 = vadd.f32 %v1254, %v1343
    %v1351 = vunpack.c.l.b16 %v52
    %v1352 = vunpack.c.l.b16 %v53
    %v1353 = vpack.c.b16 %v1352, %v1351
    %1355 = vmatprep.subr.bf16.mxu0 %v702
    %1356 = vmatpush1.bf16.msra.mxu0 %v701
    %1357 = vmatprep.subr.bf16.mxu0 %v704
    %1358 = vmatpush1.bf16.msra.mxu0 %v703
    %1359 = vmatprep.subr.bf16.mxu0 %v706
    %1360 = vmatpush1.bf16.msra.mxu0 %v705
    %1361 = vmatprep.subr.bf16.mxu0 %v708
    %1362 = vmatpush1.bf16.msra.mxu0 %v707
    %1363 = vmatprep.subr.bf16.mxu0 %v710
    %1364 = vmatpush1.bf16.msra.mxu0 %v709
    %1365 = vmatprep.subr.bf16.mxu0 %v712
    %1366 = vmatpush1.bf16.msra.mxu0 %v711
    %1367 = vmatprep.subr.bf16.mxu0 %v714
    %1368 = vmatpush1.bf16.msra.mxu0 %v713
    %1369 = vmatprep.subr.bf16.mxu0 %v716
    %1370 = vmatpush1.bf16.msra.mxu0 %v715
    %1371 = vmatprep.subr.bf16.mxu0 0
    %1372 = vmatpush1.bf16.msra.mxu0 0
    %1373 = vmatprep.subr.bf16.mxu0 0
    %1374 = vmatpush1.bf16.msra.mxu0 0
    %1375 = vmatprep.subr.bf16.mxu0 0
    %1376 = vmatpush1.bf16.msra.mxu0 0
    %1377 = vmatprep.subr.bf16.mxu0 0
    %1378 = vmatpush1.bf16.msra.mxu0 0
    %1379 = vmatprep.subr.bf16.mxu0 0
    %1380 = vmatpush1.bf16.msra.mxu0 0
    %1381 = vmatprep.subr.bf16.mxu0 0
    %1382 = vmatpush1.bf16.msra.mxu0 0
    %1383 = vmatprep.subr.bf16.mxu0 0
    %1384 = vmatpush1.bf16.msra.mxu0 0
    %1385 = vmatprep.subr.bf16.mxu0 0
    %1386 = vmatpush1.bf16.msra.mxu0 0
    %1387 = vmatprep.mubr.bf16.mxu0 0
    %1388 = vmatmul.mubr.bf16.gmra.mrb[0].mxu0 %v1353
    %v1389 = vpop.f32.mrb[0].mxu0
    %v1390 = vadd.f32 0.0, %v1389
    %v1391 = vpop.f32.mrb[0].mxu0
    %v1392 = vadd.f32 0.0, %v1391
    %v1393 = vpop.f32.mrb[0].mxu0
    %v1394 = vadd.f32 0.0, %v1393
    %v1395 = vpop.f32.mrb[0].mxu0
    %v1396 = vadd.f32 0.0, %v1395
    %1397 = vdwg.mxu0
    %v1398 = vadd.f32 %v1298, %v1390
    %v1399 = vadd.f32 %v1299, %v1392
    %v1400 = vadd.f32 %v1300, %v1394
    %v1401 = vadd.f32 %v1301, %v1396
    %1402 = vmatprep.subr.bf16.mxu0 %v899
    %1403 = vmatpush1.bf16.msra.mxu0 %v898
    %1404 = vmatprep.subr.bf16.mxu0 %v901
    %1405 = vmatpush1.bf16.msra.mxu0 %v900
    %1406 = vmatprep.subr.bf16.mxu0 %v903
    %1407 = vmatpush1.bf16.msra.mxu0 %v902
    %1408 = vmatprep.subr.bf16.mxu0 %v905
    %1409 = vmatpush1.bf16.msra.mxu0 %v904
    %1410 = vmatprep.subr.bf16.mxu0 %v907
    %1411 = vmatpush1.bf16.msra.mxu0 %v906
    %1412 = vmatprep.subr.bf16.mxu0 %v909
    %1413 = vmatpush1.bf16.msra.mxu0 %v908
    %1414 = vmatprep.subr.bf16.mxu0 %v911
    %1415 = vmatpush1.bf16.msra.mxu0 %v910
    %1416 = vmatprep.subr.bf16.mxu0 %v913
    %1417 = vmatpush1.bf16.msra.mxu0 %v912
    %1418 = vmatprep.subr.bf16.mxu0 0
    %1419 = vmatpush1.bf16.msra.mxu0 0
    %1420 = vmatprep.subr.bf16.mxu0 0
    %1421 = vmatpush1.bf16.msra.mxu0 0
    %1422 = vmatprep.subr.bf16.mxu0 0
    %1423 = vmatpush1.bf16.msra.mxu0 0
    %1424 = vmatprep.subr.bf16.mxu0 0
    %1425 = vmatpush1.bf16.msra.mxu0 0
    %1426 = vmatprep.subr.bf16.mxu0 0
    %1427 = vmatpush1.bf16.msra.mxu0 0
    %1428 = vmatprep.subr.bf16.mxu0 0
    %1429 = vmatpush1.bf16.msra.mxu0 0
    %1430 = vmatprep.subr.bf16.mxu0 0
    %1431 = vmatpush1.bf16.msra.mxu0 0
    %1432 = vmatprep.subr.bf16.mxu0 0
    %1433 = vmatpush1.bf16.msra.mxu0 0
    %1434 = vmatprep.mubr.bf16.mxu0 0
    %1435 = vmatmul.mubr.bf16.gmra.mrb[0].mxu0 %v1353
    %v1436 = vpop.f32.mrb[0].mxu0
    %v1437 = vadd.f32 0.0, %v1436
    %v1438 = vpop.f32.mrb[0].mxu0
    %v1439 = vadd.f32 0.0, %v1438
    %v1440 = vpop.f32.mrb[0].mxu0
    %v1441 = vadd.f32 0.0, %v1440
    %v1442 = vpop.f32.mrb[0].mxu0
    %v1443 = vadd.f32 0.0, %v1442
    %1444 = vdwg.mxu0
    %v1445 = vadd.f32 %v1345, %v1437
    %v1446 = vadd.f32 %v1346, %v1439
    %v1447 = vadd.f32 %v1347, %v1441
    %v1448 = vadd.f32 %v1348, %v1443
    %v1451 = vunpack.c.l.b16 %v54
    %v1452 = vunpack.c.l.b16 %v55
    %v1453 = vpack.c.b16 %v1452, %v1451
    %1455 = vmatprep.subr.bf16.mxu0 %v899
    %1456 = vmatpush1.bf16.msra.mxu0 %v898
    %1457 = vmatprep.subr.bf16.mxu0 %v901
    %1458 = vmatpush1.bf16.msra.mxu0 %v900
    %1459 = vmatprep.subr.bf16.mxu0 %v903
    %1460 = vmatpush1.bf16.msra.mxu0 %v902
    %1461 = vmatprep.subr.bf16.mxu0 %v905
    %1462 = vmatpush1.bf16.msra.mxu0 %v904
    %1463 = vmatprep.subr.bf16.mxu0 %v907
    %1464 = vmatpush1.bf16.msra.mxu0 %v906
    %1465 = vmatprep.subr.bf16.mxu0 %v909
    %1466 = vmatpush1.bf16.msra.mxu0 %v908
    %1467 = vmatprep.subr.bf16.mxu0 %v911
    %1468 = vmatpush1.bf16.msra.mxu0 %v910
    %1469 = vmatprep.subr.bf16.mxu0 %v913
    %1470 = vmatpush1.bf16.msra.mxu0 %v912
    %1471 = vmatprep.subr.bf16.mxu0 0
    %1472 = vmatpush1.bf16.msra.mxu0 0
    %1473 = vmatprep.subr.bf16.mxu0 0
    %1474 = vmatpush1.bf16.msra.mxu0 0
    %1475 = vmatprep.subr.bf16.mxu0 0
    %1476 = vmatpush1.bf16.msra.mxu0 0
    %1477 = vmatprep.subr.bf16.mxu0 0
    %1478 = vmatpush1.bf16.msra.mxu0 0
    %1479 = vmatprep.subr.bf16.mxu0 0
    %1480 = vmatpush1.bf16.msra.mxu0 0
    %1481 = vmatprep.subr.bf16.mxu0 0
    %1482 = vmatpush1.bf16.msra.mxu0 0
    %1483 = vmatprep.subr.bf16.mxu0 0
    %1484 = vmatpush1.bf16.msra.mxu0 0
    %1485 = vmatprep.subr.bf16.mxu0 0
    %1486 = vmatpush1.bf16.msra.mxu0 0
    %1487 = vmatprep.mubr.bf16.mxu0 0
    %1488 = vmatmul.mubr.bf16.gmra.mrb[0].mxu0 %v1453
    %v1489 = vpop.f32.mrb[0].mxu0
    %v1490 = vadd.f32 0.0, %v1489
    %v1491 = vpop.f32.mrb[0].mxu0
    %v1492 = vadd.f32 0.0, %v1491
    %v1493 = vpop.f32.mrb[0].mxu0
    %v1494 = vadd.f32 0.0, %v1493
    %v1495 = vpop.f32.mrb[0].mxu0
    %v1496 = vadd.f32 0.0, %v1495
    %1497 = vdwg.mxu0
    %v1498 = vadd.f32 %v1398, %v1490
    %v1499 = vadd.f32 %v1399, %v1492
    %v1500 = vadd.f32 %v1400, %v1494
    %v1501 = vadd.f32 %v1401, %v1496
    %v1502 = vmax.f32 %v1445, %v1498
    %v1503 = vmax.f32 %v1446, %v1499
    %v1504 = vmax.f32 %v1447, %v1500
    %v1505 = vmax.f32 %v1448, %v1501
    %v1506 = vmax.f32 %v1502, %v1503
    %v1507 = vmax.f32 %v1504, %v1505
    %v1508 = vld [vmem:[%s2] sm:$0x3]
    %v1510 = vlaneseq
    %v1511 = vshrl.u32 %v1510, 7
    %v1512 = vsub.s32 0, %v1511
    %v1513 = vrot.slane %v1508, %v1512
    %v1514 = vlaneseq
    %v1515 = vshrl.u32 %v1514, 7
    %v1516 = vsub.s32 1, %v1515
    %v1517 = vrot.slane %v1508, %v1516
    %v1520 = vadd.f32 %v1034, %v1513
    %v1521 = vadd.f32 %v1506, %v1517
    %v1522 = vadd.f32 %v1035, %v1513
    %v1523 = vadd.f32 %v1507, %v1517
    %v1524 = vmax.f32 %v1520, 0.0
    %v1525 = vmax.f32 %v1521, 0.0
    %v1526 = vmax.f32 %v1522, 0.0
    %v1527 = vmax.f32 %v1523, 0.0
    %v1528 = vpack.c.bf16 %v1526, %v1524
    %v1529 = vpack.c.bf16 %v1527, %v1525
    %v1532 = vrot.slane %v1528, 1
    %v1533 = vrot.slane %v1529, 1
    %vm1536 = vcmask 1042432
    %vm1537 = vsmask.f32 2304
    %vm1538 = vmand %vm1536, %vm1537
    %v1539 = vsel %vm1538, %v1528, %v1532
    %v1540 = vsel %vm1538, %v1529, %v1533
    %v1542 = vshrl.u32 %v1528, 16
    %v1544 = vshll.u32 %v1528, 16
    %v1546 = vrot.slane %v1544, 1
    %v1547 = vor.u32 %v1542, %v1546
    %v1549 = vshrl.u32 %v1529, 16
    %v1551 = vshll.u32 %v1529, 16
    %v1553 = vrot.slane %v1551, 1
    %v1554 = vor.u32 %v1549, %v1553
    %v1557 = vrot.slane %v1542, 1
    %v1558 = vrot.slane %v1544, 2
    %v1559 = vor.u32 %v1557, %v1558
    %v1560 = vrot.slane %v1549, 1
    %v1561 = vrot.slane %v1551, 2
    %v1562 = vor.u32 %v1560, %v1561
    %v1565 = vsel %vm1538, %v1547, %v1559
    %v1566 = vsel %vm1538, %v1554, %v1562
    %v1567 = vrot.slane %v1528, 2
    %v1568 = vrot.slane %v1529, 2
    %v1571 = vsel %vm1538, %v1532, %v1567
    %v1572 = vsel %vm1538, %v1533, %v1568
    %v1573 = vld [vmem:[%s3] sm:$0xff]
    %v1574 = vld [vmem:[%s3 + $0x8] sm:$0xff]
    %v1575 = vld [vmem:[%s3 + $0x10] sm:$0xff]
    %v1576 = vld [vmem:[%s3 + $0x18] sm:$0xff]
    %v1577 = vld [vmem:[%s3 + $0x20] sm:$0xff]
    %v1578 = vld [vmem:[%s3 + $0x28] sm:$0xff]
    %v1579 = vld [vmem:[%s3 + $0x30] sm:$0xff]
    %v1580 = vld [vmem:[%s3 + $0x38] sm:$0xff]
    %v1581 = vld [vmem:[%s3 + $0x40] sm:$0xff]
    %v1582 = vld [vmem:[%s3 + $0x48] sm:$0xff]
    %v1583 = vld [vmem:[%s3 + $0x50] sm:$0xff]
    %v1584 = vld [vmem:[%s3 + $0x58] sm:$0xff]
    %v1585 = vld [vmem:[%s3 + $0x60] sm:$0xff]
    %v1586 = vld [vmem:[%s3 + $0x68] sm:$0xff]
    %v1587 = vld [vmem:[%s3 + $0x70] sm:$0xff]
    %v1588 = vld [vmem:[%s3 + $0x78] sm:$0xff]
    %v1589 = vld [vmem:[%s3 + $0x80] sm:$0xff]
    %v1590 = vld [vmem:[%s3 + $0x88] sm:$0xff]
    %v1591 = vld [vmem:[%s3 + $0x90] sm:$0xff]
    %v1592 = vld [vmem:[%s3 + $0x98] sm:$0xff]
    %v1593 = vld [vmem:[%s3 + $0xa0] sm:$0xff]
    %v1594 = vld [vmem:[%s3 + $0xa8] sm:$0xff]
    %v1595 = vld [vmem:[%s3 + $0xb0] sm:$0xff]
    %v1596 = vld [vmem:[%s3 + $0xb8] sm:$0xff]
    %v1597 = vld [vmem:[%s3 + $0xc0] sm:$0xff]
    %v1598 = vld [vmem:[%s3 + $0xc8] sm:$0xff]
    %v1599 = vld [vmem:[%s3 + $0xd0] sm:$0xff]
    %v1600 = vld [vmem:[%s3 + $0xd8] sm:$0xff]
    %v1601 = vld [vmem:[%s3 + $0xe0] sm:$0xff]
    %v1602 = vld [vmem:[%s3 + $0xe8] sm:$0xff]
    %v1603 = vld [vmem:[%s3 + $0xf0] sm:$0xff]
    %v1604 = vld [vmem:[%s3 + $0xf8] sm:$0xff]
    %s1605 = scalar_lea.vmem %s3, 1280
    %v1606 = vld [vmem:[%s1605] sm:$0xff]
    %v1607 = vld [vmem:[%s1605 + $0x8] sm:$0xff]
    %v1608 = vld [vmem:[%s1605 + $0x10] sm:$0xff]
    %v1609 = vld [vmem:[%s1605 + $0x18] sm:$0xff]
    %v1610 = vld [vmem:[%s1605 + $0x20] sm:$0xff]
    %v1611 = vld [vmem:[%s1605 + $0x28] sm:$0xff]
    %v1612 = vld [vmem:[%s1605 + $0x30] sm:$0xff]
    %v1613 = vld [vmem:[%s1605 + $0x38] sm:$0xff]
    %v1614 = vld [vmem:[%s1605 + $0x40] sm:$0xff]
    %v1615 = vld [vmem:[%s1605 + $0x48] sm:$0xff]
    %v1616 = vld [vmem:[%s1605 + $0x50] sm:$0xff]
    %v1617 = vld [vmem:[%s1605 + $0x58] sm:$0xff]
    %v1618 = vld [vmem:[%s1605 + $0x60] sm:$0xff]
    %v1619 = vld [vmem:[%s1605 + $0x68] sm:$0xff]
    %v1620 = vld [vmem:[%s1605 + $0x70] sm:$0xff]
    %v1621 = vld [vmem:[%s1605 + $0x78] sm:$0xff]
    %v1622 = vld [vmem:[%s1605 + $0x80] sm:$0xff]
    %v1623 = vld [vmem:[%s1605 + $0x88] sm:$0xff]
    %v1624 = vld [vmem:[%s1605 + $0x90] sm:$0xff]
    %v1625 = vld [vmem:[%s1605 + $0x98] sm:$0xff]
    %v1626 = vld [vmem:[%s1605 + $0xa0] sm:$0xff]
    %v1627 = vld [vmem:[%s1605 + $0xa8] sm:$0xff]
    %v1628 = vld [vmem:[%s1605 + $0xb0] sm:$0xff]
    %v1629 = vld [vmem:[%s1605 + $0xb8] sm:$0xff]
    %v1630 = vld [vmem:[%s1605 + $0xc0] sm:$0xff]
    %v1631 = vld [vmem:[%s1605 + $0xc8] sm:$0xff]
    %v1632 = vld [vmem:[%s1605 + $0xd0] sm:$0xff]
    %v1633 = vld [vmem:[%s1605 + $0xd8] sm:$0xff]
    %v1634 = vld [vmem:[%s1605 + $0xe0] sm:$0xff]
    %v1635 = vld [vmem:[%s1605 + $0xe8] sm:$0xff]
    %v1636 = vld [vmem:[%s1605 + $0xf0] sm:$0xff]
    %v1637 = vld [vmem:[%s1605 + $0xf8] sm:$0xff]
    %s1638 = scalar_lea.vmem %s3, 1536
    %v1639 = vld [vmem:[%s1638] sm:$0xff]
    %v1640 = vld [vmem:[%s1638 + $0x8] sm:$0xff]
    %v1641 = vld [vmem:[%s1638 + $0x10] sm:$0xff]
    %v1642 = vld [vmem:[%s1638 + $0x18] sm:$0xff]
    %v1643 = vld [vmem:[%s1638 + $0x20] sm:$0xff]
    %v1644 = vld [vmem:[%s1638 + $0x28] sm:$0xff]
    %v1645 = vld [vmem:[%s1638 + $0x30] sm:$0xff]
    %v1646 = vld [vmem:[%s1638 + $0x38] sm:$0xff]
    %v1647 = vld [vmem:[%s1638 + $0x40] sm:$0xff]
    %v1648 = vld [vmem:[%s1638 + $0x48] sm:$0xff]
    %v1649 = vld [vmem:[%s1638 + $0x50] sm:$0xff]
    %v1650 = vld [vmem:[%s1638 + $0x58] sm:$0xff]
    %v1651 = vld [vmem:[%s1638 + $0x60] sm:$0xff]
    %v1652 = vld [vmem:[%s1638 + $0x68] sm:$0xff]
    %v1653 = vld [vmem:[%s1638 + $0x70] sm:$0xff]
    %v1654 = vld [vmem:[%s1638 + $0x78] sm:$0xff]
    %v1655 = vld [vmem:[%s1638 + $0x80] sm:$0xff]
    %v1656 = vld [vmem:[%s1638 + $0x88] sm:$0xff]
    %v1657 = vld [vmem:[%s1638 + $0x90] sm:$0xff]
    %v1658 = vld [vmem:[%s1638 + $0x98] sm:$0xff]
    %v1659 = vld [vmem:[%s1638 + $0xa0] sm:$0xff]
    %v1660 = vld [vmem:[%s1638 + $0xa8] sm:$0xff]
    %v1661 = vld [vmem:[%s1638 + $0xb0] sm:$0xff]
    %v1662 = vld [vmem:[%s1638 + $0xb8] sm:$0xff]
    %v1663 = vld [vmem:[%s1638 + $0xc0] sm:$0xff]
    %v1664 = vld [vmem:[%s1638 + $0xc8] sm:$0xff]
    %v1665 = vld [vmem:[%s1638 + $0xd0] sm:$0xff]
    %v1666 = vld [vmem:[%s1638 + $0xd8] sm:$0xff]
    %v1667 = vld [vmem:[%s1638 + $0xe0] sm:$0xff]
    %v1668 = vld [vmem:[%s1638 + $0xe8] sm:$0xff]
    %v1669 = vld [vmem:[%s1638 + $0xf0] sm:$0xff]
    %v1670 = vld [vmem:[%s1638 + $0xf8] sm:$0xff]
    %v1703 = vunpack.c.l.b16 %v1639
    %v1704 = vunpack.c.h.b16 %v1639
    %v1705 = vunpack.c.l.b16 %v1640
    %v1706 = vunpack.c.h.b16 %v1640
    %v1707 = vunpack.c.l.b16 %v1641
    %v1708 = vunpack.c.h.b16 %v1641
    %v1709 = vunpack.c.l.b16 %v1642
    %v1710 = vunpack.c.h.b16 %v1642
    %v1711 = vunpack.c.l.b16 %v1643
    %v1712 = vunpack.c.h.b16 %v1643
    %v1713 = vunpack.c.l.b16 %v1644
    %v1714 = vunpack.c.h.b16 %v1644
    %v1715 = vunpack.c.l.b16 %v1645
    %v1716 = vunpack.c.h.b16 %v1645
    %v1717 = vunpack.c.l.b16 %v1646
    %v1718 = vunpack.c.h.b16 %v1646
    %v1719 = vunpack.c.l.b16 %v1647
    %v1720 = vunpack.c.h.b16 %v1647
    %v1721 = vunpack.c.l.b16 %v1648
    %v1722 = vunpack.c.h.b16 %v1648
    %v1723 = vunpack.c.l.b16 %v1649
    %v1724 = vunpack.c.h.b16 %v1649
    %v1725 = vunpack.c.l.b16 %v1650
    %v1726 = vunpack.c.h.b16 %v1650
    %v1727 = vunpack.c.l.b16 %v1651
    %v1728 = vunpack.c.h.b16 %v1651
    %v1729 = vunpack.c.l.b16 %v1652
    %v1730 = vunpack.c.h.b16 %v1652
    %v1731 = vunpack.c.l.b16 %v1653
    %v1732 = vunpack.c.h.b16 %v1653
    %v1733 = vunpack.c.l.b16 %v1654
    %v1734 = vunpack.c.h.b16 %v1654
    %v1735 = vunpack.c.l.b16 %v1655
    %v1736 = vunpack.c.h.b16 %v1655
    %v1737 = vunpack.c.l.b16 %v1656
    %v1738 = vunpack.c.h.b16 %v1656
    %v1739 = vunpack.c.l.b16 %v1657
    %v1740 = vunpack.c.h.b16 %v1657
    %v1741 = vunpack.c.l.b16 %v1658
    %v1742 = vunpack.c.h.b16 %v1658
    %v1743 = vunpack.c.l.b16 %v1659
    %v1744 = vunpack.c.h.b16 %v1659
    %v1745 = vunpack.c.l.b16 %v1660
    %v1746 = vunpack.c.h.b16 %v1660
    %v1747 = vunpack.c.l.b16 %v1661
    %v1748 = vunpack.c.h.b16 %v1661
    %v1749 = vunpack.c.l.b16 %v1662
    %v1750 = vunpack.c.h.b16 %v1662
    %v1751 = vunpack.c.l.b16 %v1663
    %v1752 = vunpack.c.h.b16 %v1663
    %v1753 = vunpack.c.l.b16 %v1664
    %v1754 = vunpack.c.h.b16 %v1664
    %v1755 = vunpack.c.l.b16 %v1665
    %v1756 = vunpack.c.h.b16 %v1665
    %v1757 = vunpack.c.l.b16 %v1666
    %v1758 = vunpack.c.h.b16 %v1666
    %v1759 = vunpack.c.l.b16 %v1667
    %v1760 = vunpack.c.h.b16 %v1667
    %v1761 = vunpack.c.l.b16 %v1668
    %v1762 = vunpack.c.h.b16 %v1668
    %v1763 = vunpack.c.l.b16 %v1669
    %v1764 = vunpack.c.h.b16 %v1669
    %v1765 = vunpack.c.l.b16 %v1670
    %v1766 = vunpack.c.h.b16 %v1670
    %v1767 = vpack.c.b16 %v1705, %v1703
    %v1768 = vpack.c.b16 %v1706, %v1704
    %v1769 = vpack.c.b16 %v1709, %v1707
    %v1770 = vpack.c.b16 %v1710, %v1708
    %v1771 = vpack.c.b16 %v1713, %v1711
    %v1772 = vpack.c.b16 %v1714, %v1712
    %v1773 = vpack.c.b16 %v1717, %v1715
    %v1774 = vpack.c.b16 %v1718, %v1716
    %v1775 = vpack.c.b16 %v1721, %v1719
    %v1776 = vpack.c.b16 %v1722, %v1720
    %v1777 = vpack.c.b16 %v1725, %v1723
    %v1778 = vpack.c.b16 %v1726, %v1724
    %v1779 = vpack.c.b16 %v1729, %v1727
    %v1780 = vpack.c.b16 %v1730, %v1728
    %v1781 = vpack.c.b16 %v1733, %v1731
    %v1782 = vpack.c.b16 %v1734, %v1732
    %v1783 = vpack.c.b16 %v1737, %v1735
    %v1784 = vpack.c.b16 %v1738, %v1736
    %v1785 = vpack.c.b16 %v1741, %v1739
    %v1786 = vpack.c.b16 %v1742, %v1740
    %v1787 = vpack.c.b16 %v1745, %v1743
    %v1788 = vpack.c.b16 %v1746, %v1744
    %v1789 = vpack.c.b16 %v1749, %v1747
    %v1790 = vpack.c.b16 %v1750, %v1748
    %v1791 = vpack.c.b16 %v1753, %v1751
    %v1792 = vpack.c.b16 %v1754, %v1752
    %v1793 = vpack.c.b16 %v1757, %v1755
    %v1794 = vpack.c.b16 %v1758, %v1756
    %v1795 = vpack.c.b16 %v1761, %v1759
    %v1796 = vpack.c.b16 %v1762, %v1760
    %v1797 = vpack.c.b16 %v1765, %v1763
    %v1798 = vpack.c.b16 %v1766, %v1764
    %1831 = vmatprep.subr.bf16.mxu0 %v1768
    %1832 = vmatpush1.bf16.msra.mxu0 %v1767
    %1833 = vmatprep.subr.bf16.mxu0 %v1770
    %1834 = vmatpush1.bf16.msra.mxu0 %v1769
    %1835 = vmatprep.subr.bf16.mxu0 %v1772
    %1836 = vmatpush1.bf16.msra.mxu0 %v1771
    %1837 = vmatprep.subr.bf16.mxu0 %v1774
    %1838 = vmatpush1.bf16.msra.mxu0 %v1773
    %1839 = vmatprep.subr.bf16.mxu0 %v1776
    %1840 = vmatpush1.bf16.msra.mxu0 %v1775
    %1841 = vmatprep.subr.bf16.mxu0 %v1778
    %1842 = vmatpush1.bf16.msra.mxu0 %v1777
    %1843 = vmatprep.subr.bf16.mxu0 %v1780
    %1844 = vmatpush1.bf16.msra.mxu0 %v1779
    %1845 = vmatprep.subr.bf16.mxu0 %v1782
    %1846 = vmatpush1.bf16.msra.mxu0 %v1781
    %1847 = vmatprep.subr.bf16.mxu0 %v1784
    %1848 = vmatpush1.bf16.msra.mxu0 %v1783
    %1849 = vmatprep.subr.bf16.mxu0 %v1786
    %1850 = vmatpush1.bf16.msra.mxu0 %v1785
    %1851 = vmatprep.subr.bf16.mxu0 %v1788
    %1852 = vmatpush1.bf16.msra.mxu0 %v1787
    %1853 = vmatprep.subr.bf16.mxu0 %v1790
    %1854 = vmatpush1.bf16.msra.mxu0 %v1789
    %1855 = vmatprep.subr.bf16.mxu0 %v1792
    %1856 = vmatpush1.bf16.msra.mxu0 %v1791
    %1857 = vmatprep.subr.bf16.mxu0 %v1794
    %1858 = vmatpush1.bf16.msra.mxu0 %v1793
    %1859 = vmatprep.subr.bf16.mxu0 %v1796
    %1860 = vmatpush1.bf16.msra.mxu0 %v1795
    %1861 = vmatprep.subr.bf16.mxu0 %v1798
    %1862 = vmatpush1.bf16.msra.mxu0 %v1797
    %1863 = vmatprep.mubr.bf16.mxu0 %v1540
    %1864 = vmatmul.mubr.bf16.gmra.mrb[0].mxu0 %v1539
    %v1865 = vpop.f32.mrb[0].mxu0
    %v1866 = vadd.f32 0.0, %v1865
    %v1867 = vpop.f32.mrb[0].mxu0
    %v1868 = vadd.f32 0.0, %v1867
    %v1869 = vpop.f32.mrb[0].mxu0
    %v1870 = vadd.f32 0.0, %v1869
    %v1871 = vpop.f32.mrb[0].mxu0
    %v1872 = vadd.f32 0.0, %v1871
    %1873 = vdwg.mxu0
    %v1906 = vunpack.c.l.b16 %v1573
    %v1907 = vunpack.c.h.b16 %v1573
    %v1908 = vunpack.c.l.b16 %v1574
    %v1909 = vunpack.c.h.b16 %v1574
    %v1910 = vunpack.c.l.b16 %v1575
    %v1911 = vunpack.c.h.b16 %v1575
    %v1912 = vunpack.c.l.b16 %v1576
    %v1913 = vunpack.c.h.b16 %v1576
    %v1914 = vunpack.c.l.b16 %v1577
    %v1915 = vunpack.c.h.b16 %v1577
    %v1916 = vunpack.c.l.b16 %v1578
    %v1917 = vunpack.c.h.b16 %v1578
    %v1918 = vunpack.c.l.b16 %v1579
    %v1919 = vunpack.c.h.b16 %v1579
    %v1920 = vunpack.c.l.b16 %v1580
    %v1921 = vunpack.c.h.b16 %v1580
    %v1922 = vunpack.c.l.b16 %v1581
    %v1923 = vunpack.c.h.b16 %v1581
    %v1924 = vunpack.c.l.b16 %v1582
    %v1925 = vunpack.c.h.b16 %v1582
    %v1926 = vunpack.c.l.b16 %v1583
    %v1927 = vunpack.c.h.b16 %v1583
    %v1928 = vunpack.c.l.b16 %v1584
    %v1929 = vunpack.c.h.b16 %v1584
    %v1930 = vunpack.c.l.b16 %v1585
    %v1931 = vunpack.c.h.b16 %v1585
    %v1932 = vunpack.c.l.b16 %v1586
    %v1933 = vunpack.c.h.b16 %v1586
    %v1934 = vunpack.c.l.b16 %v1587
    %v1935 = vunpack.c.h.b16 %v1587
    %v1936 = vunpack.c.l.b16 %v1588
    %v1937 = vunpack.c.h.b16 %v1588
    %v1938 = vunpack.c.l.b16 %v1589
    %v1939 = vunpack.c.h.b16 %v1589
    %v1940 = vunpack.c.l.b16 %v1590
    %v1941 = vunpack.c.h.b16 %v1590
    %v1942 = vunpack.c.l.b16 %v1591
    %v1943 = vunpack.c.h.b16 %v1591
    %v1944 = vunpack.c.l.b16 %v1592
    %v1945 = vunpack.c.h.b16 %v1592
    %v1946 = vunpack.c.l.b16 %v1593
    %v1947 = vunpack.c.h.b16 %v1593
    %v1948 = vunpack.c.l.b16 %v1594
    %v1949 = vunpack.c.h.b16 %v1594
    %v1950 = vunpack.c.l.b16 %v1595
    %v1951 = vunpack.c.h.b16 %v1595
    %v1952 = vunpack.c.l.b16 %v1596
    %v1953 = vunpack.c.h.b16 %v1596
    %v1954 = vunpack.c.l.b16 %v1597
    %v1955 = vunpack.c.h.b16 %v1597
    %v1956 = vunpack.c.l.b16 %v1598
    %v1957 = vunpack.c.h.b16 %v1598
    %v1958 = vunpack.c.l.b16 %v1599
    %v1959 = vunpack.c.h.b16 %v1599
    %v1960 = vunpack.c.l.b16 %v1600
    %v1961 = vunpack.c.h.b16 %v1600
    %v1962 = vunpack.c.l.b16 %v1601
    %v1963 = vunpack.c.h.b16 %v1601
    %v1964 = vunpack.c.l.b16 %v1602
    %v1965 = vunpack.c.h.b16 %v1602
    %v1966 = vunpack.c.l.b16 %v1603
    %v1967 = vunpack.c.h.b16 %v1603
    %v1968 = vunpack.c.l.b16 %v1604
    %v1969 = vunpack.c.h.b16 %v1604
    %v1970 = vpack.c.b16 %v1908, %v1906
    %v1971 = vpack.c.b16 %v1909, %v1907
    %v1972 = vpack.c.b16 %v1912, %v1910
    %v1973 = vpack.c.b16 %v1913, %v1911
    %v1974 = vpack.c.b16 %v1916, %v1914
    %v1975 = vpack.c.b16 %v1917, %v1915
    %v1976 = vpack.c.b16 %v1920, %v1918
    %v1977 = vpack.c.b16 %v1921, %v1919
    %v1978 = vpack.c.b16 %v1924, %v1922
    %v1979 = vpack.c.b16 %v1925, %v1923
    %v1980 = vpack.c.b16 %v1928, %v1926
    %v1981 = vpack.c.b16 %v1929, %v1927
    %v1982 = vpack.c.b16 %v1932, %v1930
    %v1983 = vpack.c.b16 %v1933, %v1931
    %v1984 = vpack.c.b16 %v1936, %v1934
    %v1985 = vpack.c.b16 %v1937, %v1935
    %v1986 = vpack.c.b16 %v1940, %v1938
    %v1987 = vpack.c.b16 %v1941, %v1939
    %v1988 = vpack.c.b16 %v1944, %v1942
    %v1989 = vpack.c.b16 %v1945, %v1943
    %v1990 = vpack.c.b16 %v1948, %v1946
    %v1991 = vpack.c.b16 %v1949, %v1947
    %v1992 = vpack.c.b16 %v1952, %v1950
    %v1993 = vpack.c.b16 %v1953, %v1951
    %v1994 = vpack.c.b16 %v1956, %v1954
    %v1995 = vpack.c.b16 %v1957, %v1955
    %v1996 = vpack.c.b16 %v1960, %v1958
    %v1997 = vpack.c.b16 %v1961, %v1959
    %v1998 = vpack.c.b16 %v1964, %v1962
    %v1999 = vpack.c.b16 %v1965, %v1963
    %v2000 = vpack.c.b16 %v1968, %v1966
    %v2001 = vpack.c.b16 %v1969, %v1967
    %2034 = vmatprep.subr.bf16.mxu0 %v1971
    %2035 = vmatpush1.bf16.msra.mxu0 %v1970
    %2036 = vmatprep.subr.bf16.mxu0 %v1973
    %2037 = vmatpush1.bf16.msra.mxu0 %v1972
    %2038 = vmatprep.subr.bf16.mxu0 %v1975
    %2039 = vmatpush1.bf16.msra.mxu0 %v1974
    %2040 = vmatprep.subr.bf16.mxu0 %v1977
    %2041 = vmatpush1.bf16.msra.mxu0 %v1976
    %2042 = vmatprep.subr.bf16.mxu0 %v1979
    %2043 = vmatpush1.bf16.msra.mxu0 %v1978
    %2044 = vmatprep.subr.bf16.mxu0 %v1981
    %2045 = vmatpush1.bf16.msra.mxu0 %v1980
    %2046 = vmatprep.subr.bf16.mxu0 %v1983
    %2047 = vmatpush1.bf16.msra.mxu0 %v1982
    %2048 = vmatprep.subr.bf16.mxu0 %v1985
    %2049 = vmatpush1.bf16.msra.mxu0 %v1984
    %2050 = vmatprep.subr.bf16.mxu0 %v1987
    %2051 = vmatpush1.bf16.msra.mxu0 %v1986
    %2052 = vmatprep.subr.bf16.mxu0 %v1989
    %2053 = vmatpush1.bf16.msra.mxu0 %v1988
    %2054 = vmatprep.subr.bf16.mxu0 %v1991
    %2055 = vmatpush1.bf16.msra.mxu0 %v1990
    %2056 = vmatprep.subr.bf16.mxu0 %v1993
    %2057 = vmatpush1.bf16.msra.mxu0 %v1992
    %2058 = vmatprep.subr.bf16.mxu0 %v1995
    %2059 = vmatpush1.bf16.msra.mxu0 %v1994
    %2060 = vmatprep.subr.bf16.mxu0 %v1997
    %2061 = vmatpush1.bf16.msra.mxu0 %v1996
    %2062 = vmatprep.subr.bf16.mxu0 %v1999
    %2063 = vmatpush1.bf16.msra.mxu0 %v1998
    %2064 = vmatprep.subr.bf16.mxu0 %v2001
    %2065 = vmatpush1.bf16.msra.mxu0 %v2000
    %2066 = vmatprep.mubr.bf16.mxu0 %v1540
    %2067 = vmatmul.mubr.bf16.gmra.mrb[0].mxu0 %v1539
    %v2068 = vpop.f32.mrb[0].mxu0
    %v2069 = vadd.f32 %v1866, %v2068
    %v2070 = vpop.f32.mrb[0].mxu0
    %v2071 = vadd.f32 %v1868, %v2070
    %v2072 = vpop.f32.mrb[0].mxu0
    %v2073 = vadd.f32 %v1870, %v2072
    %v2074 = vpop.f32.mrb[0].mxu0
    %v2075 = vadd.f32 %v1872, %v2074
    %2076 = vdwg.mxu0
    %s2077 = scalar_lea.vmem %s3, 256
    %v2078 = vld [vmem:[%s2077] sm:$0xff]
    %v2079 = vld [vmem:[%s2077 + $0x8] sm:$0xff]
    %v2080 = vld [vmem:[%s2077 + $0x10] sm:$0xff]
    %v2081 = vld [vmem:[%s2077 + $0x18] sm:$0xff]
    %v2082 = vld [vmem:[%s2077 + $0x20] sm:$0xff]
    %v2083 = vld [vmem:[%s2077 + $0x28] sm:$0xff]
    %v2084 = vld [vmem:[%s2077 + $0x30] sm:$0xff]
    %v2085 = vld [vmem:[%s2077 + $0x38] sm:$0xff]
    %v2086 = vld [vmem:[%s2077 + $0x40] sm:$0xff]
    %v2087 = vld [vmem:[%s2077 + $0x48] sm:$0xff]
    %v2088 = vld [vmem:[%s2077 + $0x50] sm:$0xff]
    %v2089 = vld [vmem:[%s2077 + $0x58] sm:$0xff]
    %v2090 = vld [vmem:[%s2077 + $0x60] sm:$0xff]
    %v2091 = vld [vmem:[%s2077 + $0x68] sm:$0xff]
    %v2092 = vld [vmem:[%s2077 + $0x70] sm:$0xff]
    %v2093 = vld [vmem:[%s2077 + $0x78] sm:$0xff]
    %v2094 = vld [vmem:[%s2077 + $0x80] sm:$0xff]
    %v2095 = vld [vmem:[%s2077 + $0x88] sm:$0xff]
    %v2096 = vld [vmem:[%s2077 + $0x90] sm:$0xff]
    %v2097 = vld [vmem:[%s2077 + $0x98] sm:$0xff]
    %v2098 = vld [vmem:[%s2077 + $0xa0] sm:$0xff]
    %v2099 = vld [vmem:[%s2077 + $0xa8] sm:$0xff]
    %v2100 = vld [vmem:[%s2077 + $0xb0] sm:$0xff]
    %v2101 = vld [vmem:[%s2077 + $0xb8] sm:$0xff]
    %v2102 = vld [vmem:[%s2077 + $0xc0] sm:$0xff]
    %v2103 = vld [vmem:[%s2077 + $0xc8] sm:$0xff]
    %v2104 = vld [vmem:[%s2077 + $0xd0] sm:$0xff]
    %v2105 = vld [vmem:[%s2077 + $0xd8] sm:$0xff]
    %v2106 = vld [vmem:[%s2077 + $0xe0] sm:$0xff]
    %v2107 = vld [vmem:[%s2077 + $0xe8] sm:$0xff]
    %v2108 = vld [vmem:[%s2077 + $0xf0] sm:$0xff]
    %v2109 = vld [vmem:[%s2077 + $0xf8] sm:$0xff]
    %v2142 = vunpack.c.l.b16 %v2078
    %v2143 = vunpack.c.h.b16 %v2078
    %v2144 = vunpack.c.l.b16 %v2079
    %v2145 = vunpack.c.h.b16 %v2079
    %v2146 = vunpack.c.l.b16 %v2080
    %v2147 = vunpack.c.h.b16 %v2080
    %v2148 = vunpack.c.l.b16 %v2081
    %v2149 = vunpack.c.h.b16 %v2081
    %v2150 = vunpack.c.l.b16 %v2082
    %v2151 = vunpack.c.h.b16 %v2082
    %v2152 = vunpack.c.l.b16 %v2083
    %v2153 = vunpack.c.h.b16 %v2083
    %v2154 = vunpack.c.l.b16 %v2084
    %v2155 = vunpack.c.h.b16 %v2084
    %v2156 = vunpack.c.l.b16 %v2085
    %v2157 = vunpack.c.h.b16 %v2085
    %v2158 = vunpack.c.l.b16 %v2086
    %v2159 = vunpack.c.h.b16 %v2086
    %v2160 = vunpack.c.l.b16 %v2087
    %v2161 = vunpack.c.h.b16 %v2087
    %v2162 = vunpack.c.l.b16 %v2088
    %v2163 = vunpack.c.h.b16 %v2088
    %v2164 = vunpack.c.l.b16 %v2089
    %v2165 = vunpack.c.h.b16 %v2089
    %v2166 = vunpack.c.l.b16 %v2090
    %v2167 = vunpack.c.h.b16 %v2090
    %v2168 = vunpack.c.l.b16 %v2091
    %v2169 = vunpack.c.h.b16 %v2091
    %v2170 = vunpack.c.l.b16 %v2092
    %v2171 = vunpack.c.h.b16 %v2092
    %v2172 = vunpack.c.l.b16 %v2093
    %v2173 = vunpack.c.h.b16 %v2093
    %v2174 = vunpack.c.l.b16 %v2094
    %v2175 = vunpack.c.h.b16 %v2094
    %v2176 = vunpack.c.l.b16 %v2095
    %v2177 = vunpack.c.h.b16 %v2095
    %v2178 = vunpack.c.l.b16 %v2096
    %v2179 = vunpack.c.h.b16 %v2096
    %v2180 = vunpack.c.l.b16 %v2097
    %v2181 = vunpack.c.h.b16 %v2097
    %v2182 = vunpack.c.l.b16 %v2098
    %v2183 = vunpack.c.h.b16 %v2098
    %v2184 = vunpack.c.l.b16 %v2099
    %v2185 = vunpack.c.h.b16 %v2099
    %v2186 = vunpack.c.l.b16 %v2100
    %v2187 = vunpack.c.h.b16 %v2100
    %v2188 = vunpack.c.l.b16 %v2101
    %v2189 = vunpack.c.h.b16 %v2101
    %v2190 = vunpack.c.l.b16 %v2102
    %v2191 = vunpack.c.h.b16 %v2102
    %v2192 = vunpack.c.l.b16 %v2103
    %v2193 = vunpack.c.h.b16 %v2103
    %v2194 = vunpack.c.l.b16 %v2104
    %v2195 = vunpack.c.h.b16 %v2104
    %v2196 = vunpack.c.l.b16 %v2105
    %v2197 = vunpack.c.h.b16 %v2105
    %v2198 = vunpack.c.l.b16 %v2106
    %v2199 = vunpack.c.h.b16 %v2106
    %v2200 = vunpack.c.l.b16 %v2107
    %v2201 = vunpack.c.h.b16 %v2107
    %v2202 = vunpack.c.l.b16 %v2108
    %v2203 = vunpack.c.h.b16 %v2108
    %v2204 = vunpack.c.l.b16 %v2109
    %v2205 = vunpack.c.h.b16 %v2109
    %v2206 = vpack.c.b16 %v2144, %v2142
    %v2207 = vpack.c.b16 %v2145, %v2143
    %v2208 = vpack.c.b16 %v2148, %v2146
    %v2209 = vpack.c.b16 %v2149, %v2147
    %v2210 = vpack.c.b16 %v2152, %v2150
    %v2211 = vpack.c.b16 %v2153, %v2151
    %v2212 = vpack.c.b16 %v2156, %v2154
    %v2213 = vpack.c.b16 %v2157, %v2155
    %v2214 = vpack.c.b16 %v2160, %v2158
    %v2215 = vpack.c.b16 %v2161, %v2159
    %v2216 = vpack.c.b16 %v2164, %v2162
    %v2217 = vpack.c.b16 %v2165, %v2163
    %v2218 = vpack.c.b16 %v2168, %v2166
    %v2219 = vpack.c.b16 %v2169, %v2167
    %v2220 = vpack.c.b16 %v2172, %v2170
    %v2221 = vpack.c.b16 %v2173, %v2171
    %v2222 = vpack.c.b16 %v2176, %v2174
    %v2223 = vpack.c.b16 %v2177, %v2175
    %v2224 = vpack.c.b16 %v2180, %v2178
    %v2225 = vpack.c.b16 %v2181, %v2179
    %v2226 = vpack.c.b16 %v2184, %v2182
    %v2227 = vpack.c.b16 %v2185, %v2183
    %v2228 = vpack.c.b16 %v2188, %v2186
    %v2229 = vpack.c.b16 %v2189, %v2187
    %v2230 = vpack.c.b16 %v2192, %v2190
    %v2231 = vpack.c.b16 %v2193, %v2191
    %v2232 = vpack.c.b16 %v2196, %v2194
    %v2233 = vpack.c.b16 %v2197, %v2195
    %v2234 = vpack.c.b16 %v2200, %v2198
    %v2235 = vpack.c.b16 %v2201, %v2199
    %v2236 = vpack.c.b16 %v2204, %v2202
    %v2237 = vpack.c.b16 %v2205, %v2203
    %2270 = vmatprep.subr.bf16.mxu0 %v2207
    %2271 = vmatpush1.bf16.msra.mxu0 %v2206
    %2272 = vmatprep.subr.bf16.mxu0 %v2209
    %2273 = vmatpush1.bf16.msra.mxu0 %v2208
    %2274 = vmatprep.subr.bf16.mxu0 %v2211
    %2275 = vmatpush1.bf16.msra.mxu0 %v2210
    %2276 = vmatprep.subr.bf16.mxu0 %v2213
    %2277 = vmatpush1.bf16.msra.mxu0 %v2212
    %2278 = vmatprep.subr.bf16.mxu0 %v2215
    %2279 = vmatpush1.bf16.msra.mxu0 %v2214
    %2280 = vmatprep.subr.bf16.mxu0 %v2217
    %2281 = vmatpush1.bf16.msra.mxu0 %v2216
    %2282 = vmatprep.subr.bf16.mxu0 %v2219
    %2283 = vmatpush1.bf16.msra.mxu0 %v2218
    %2284 = vmatprep.subr.bf16.mxu0 %v2221
    %2285 = vmatpush1.bf16.msra.mxu0 %v2220
    %2286 = vmatprep.subr.bf16.mxu0 %v2223
    %2287 = vmatpush1.bf16.msra.mxu0 %v2222
    %2288 = vmatprep.subr.bf16.mxu0 %v2225
    %2289 = vmatpush1.bf16.msra.mxu0 %v2224
    %2290 = vmatprep.subr.bf16.mxu0 %v2227
    %2291 = vmatpush1.bf16.msra.mxu0 %v2226
    %2292 = vmatprep.subr.bf16.mxu0 %v2229
    %2293 = vmatpush1.bf16.msra.mxu0 %v2228
    %2294 = vmatprep.subr.bf16.mxu0 %v2231
    %2295 = vmatpush1.bf16.msra.mxu0 %v2230
    %2296 = vmatprep.subr.bf16.mxu0 %v2233
    %2297 = vmatpush1.bf16.msra.mxu0 %v2232
    %2298 = vmatprep.subr.bf16.mxu0 %v2235
    %2299 = vmatpush1.bf16.msra.mxu0 %v2234
    %2300 = vmatprep.subr.bf16.mxu0 %v2237
    %2301 = vmatpush1.bf16.msra.mxu0 %v2236
    %2302 = vmatprep.mubr.bf16.mxu0 %v1566
    %2303 = vmatmul.mubr.bf16.gmra.mrb[0].mxu0 %v1565
    %v2304 = vpop.f32.mrb[0].mxu0
    %v2305 = vadd.f32 0.0, %v2304
    %v2306 = vpop.f32.mrb[0].mxu0
    %v2307 = vadd.f32 0.0, %v2306
    %v2308 = vpop.f32.mrb[0].mxu0
    %v2309 = vadd.f32 0.0, %v2308
    %v2310 = vpop.f32.mrb[0].mxu0
    %v2311 = vadd.f32 0.0, %v2310
    %2312 = vdwg.mxu0
    %v2345 = vunpack.c.l.b16 %v1606
    %v2346 = vunpack.c.h.b16 %v1606
    %v2347 = vunpack.c.l.b16 %v1607
    %v2348 = vunpack.c.h.b16 %v1607
    %v2349 = vunpack.c.l.b16 %v1608
    %v2350 = vunpack.c.h.b16 %v1608
    %v2351 = vunpack.c.l.b16 %v1609
    %v2352 = vunpack.c.h.b16 %v1609
    %v2353 = vunpack.c.l.b16 %v1610
    %v2354 = vunpack.c.h.b16 %v1610
    %v2355 = vunpack.c.l.b16 %v1611
    %v2356 = vunpack.c.h.b16 %v1611
    %v2357 = vunpack.c.l.b16 %v1612
    %v2358 = vunpack.c.h.b16 %v1612
    %v2359 = vunpack.c.l.b16 %v1613
    %v2360 = vunpack.c.h.b16 %v1613
    %v2361 = vunpack.c.l.b16 %v1614
    %v2362 = vunpack.c.h.b16 %v1614
    %v2363 = vunpack.c.l.b16 %v1615
    %v2364 = vunpack.c.h.b16 %v1615
    %v2365 = vunpack.c.l.b16 %v1616
    %v2366 = vunpack.c.h.b16 %v1616
    %v2367 = vunpack.c.l.b16 %v1617
    %v2368 = vunpack.c.h.b16 %v1617
    %v2369 = vunpack.c.l.b16 %v1618
    %v2370 = vunpack.c.h.b16 %v1618
    %v2371 = vunpack.c.l.b16 %v1619
    %v2372 = vunpack.c.h.b16 %v1619
    %v2373 = vunpack.c.l.b16 %v1620
    %v2374 = vunpack.c.h.b16 %v1620
    %v2375 = vunpack.c.l.b16 %v1621
    %v2376 = vunpack.c.h.b16 %v1621
    %v2377 = vunpack.c.l.b16 %v1622
    %v2378 = vunpack.c.h.b16 %v1622
    %v2379 = vunpack.c.l.b16 %v1623
    %v2380 = vunpack.c.h.b16 %v1623
    %v2381 = vunpack.c.l.b16 %v1624
    %v2382 = vunpack.c.h.b16 %v1624
    %v2383 = vunpack.c.l.b16 %v1625
    %v2384 = vunpack.c.h.b16 %v1625
    %v2385 = vunpack.c.l.b16 %v1626
    %v2386 = vunpack.c.h.b16 %v1626
    %v2387 = vunpack.c.l.b16 %v1627
    %v2388 = vunpack.c.h.b16 %v1627
    %v2389 = vunpack.c.l.b16 %v1628
    %v2390 = vunpack.c.h.b16 %v1628
    %v2391 = vunpack.c.l.b16 %v1629
    %v2392 = vunpack.c.h.b16 %v1629
    %v2393 = vunpack.c.l.b16 %v1630
    %v2394 = vunpack.c.h.b16 %v1630
    %v2395 = vunpack.c.l.b16 %v1631
    %v2396 = vunpack.c.h.b16 %v1631
    %v2397 = vunpack.c.l.b16 %v1632
    %v2398 = vunpack.c.h.b16 %v1632
    %v2399 = vunpack.c.l.b16 %v1633
    %v2400 = vunpack.c.h.b16 %v1633
    %v2401 = vunpack.c.l.b16 %v1634
    %v2402 = vunpack.c.h.b16 %v1634
    %v2403 = vunpack.c.l.b16 %v1635
    %v2404 = vunpack.c.h.b16 %v1635
    %v2405 = vunpack.c.l.b16 %v1636
    %v2406 = vunpack.c.h.b16 %v1636
    %v2407 = vunpack.c.l.b16 %v1637
    %v2408 = vunpack.c.h.b16 %v1637
    %v2409 = vpack.c.b16 %v2347, %v2345
    %v2410 = vpack.c.b16 %v2348, %v2346
    %v2411 = vpack.c.b16 %v2351, %v2349
    %v2412 = vpack.c.b16 %v2352, %v2350
    %v2413 = vpack.c.b16 %v2355, %v2353
    %v2414 = vpack.c.b16 %v2356, %v2354
    %v2415 = vpack.c.b16 %v2359, %v2357
    %v2416 = vpack.c.b16 %v2360, %v2358
    %v2417 = vpack.c.b16 %v2363, %v2361
    %v2418 = vpack.c.b16 %v2364, %v2362
    %v2419 = vpack.c.b16 %v2367, %v2365
    %v2420 = vpack.c.b16 %v2368, %v2366
    %v2421 = vpack.c.b16 %v2371, %v2369
    %v2422 = vpack.c.b16 %v2372, %v2370
    %v2423 = vpack.c.b16 %v2375, %v2373
    %v2424 = vpack.c.b16 %v2376, %v2374
    %v2425 = vpack.c.b16 %v2379, %v2377
    %v2426 = vpack.c.b16 %v2380, %v2378
    %v2427 = vpack.c.b16 %v2383, %v2381
    %v2428 = vpack.c.b16 %v2384, %v2382
    %v2429 = vpack.c.b16 %v2387, %v2385
    %v2430 = vpack.c.b16 %v2388, %v2386
    %v2431 = vpack.c.b16 %v2391, %v2389
    %v2432 = vpack.c.b16 %v2392, %v2390
    %v2433 = vpack.c.b16 %v2395, %v2393
    %v2434 = vpack.c.b16 %v2396, %v2394
    %v2435 = vpack.c.b16 %v2399, %v2397
    %v2436 = vpack.c.b16 %v2400, %v2398
    %v2437 = vpack.c.b16 %v2403, %v2401
    %v2438 = vpack.c.b16 %v2404, %v2402
    %v2439 = vpack.c.b16 %v2407, %v2405
    %v2440 = vpack.c.b16 %v2408, %v2406
    %2473 = vmatprep.subr.bf16.mxu0 %v2410
    %2474 = vmatpush1.bf16.msra.mxu0 %v2409
    %2475 = vmatprep.subr.bf16.mxu0 %v2412
    %2476 = vmatpush1.bf16.msra.mxu0 %v2411
    %2477 = vmatprep.subr.bf16.mxu0 %v2414
    %2478 = vmatpush1.bf16.msra.mxu0 %v2413
    %2479 = vmatprep.subr.bf16.mxu0 %v2416
    %2480 = vmatpush1.bf16.msra.mxu0 %v2415
    %2481 = vmatprep.subr.bf16.mxu0 %v2418
    %2482 = vmatpush1.bf16.msra.mxu0 %v2417
    %2483 = vmatprep.subr.bf16.mxu0 %v2420
    %2484 = vmatpush1.bf16.msra.mxu0 %v2419
    %2485 = vmatprep.subr.bf16.mxu0 %v2422
    %2486 = vmatpush1.bf16.msra.mxu0 %v2421
    %2487 = vmatprep.subr.bf16.mxu0 %v2424
    %2488 = vmatpush1.bf16.msra.mxu0 %v2423
    %2489 = vmatprep.subr.bf16.mxu0 %v2426
    %2490 = vmatpush1.bf16.msra.mxu0 %v2425
    %2491 = vmatprep.subr.bf16.mxu0 %v2428
    %2492 = vmatpush1.bf16.msra.mxu0 %v2427
    %2493 = vmatprep.subr.bf16.mxu0 %v2430
    %2494 = vmatpush1.bf16.msra.mxu0 %v2429
    %2495 = vmatprep.subr.bf16.mxu0 %v2432
    %2496 = vmatpush1.bf16.msra.mxu0 %v2431
    %2497 = vmatprep.subr.bf16.mxu0 %v2434
    %2498 = vmatpush1.bf16.msra.mxu0 %v2433
    %2499 = vmatprep.subr.bf16.mxu0 %v2436
    %2500 = vmatpush1.bf16.msra.mxu0 %v2435
    %2501 = vmatprep.subr.bf16.mxu0 %v2438
    %2502 = vmatpush1.bf16.msra.mxu0 %v2437
    %2503 = vmatprep.subr.bf16.mxu0 %v2440
    %2504 = vmatpush1.bf16.msra.mxu0 %v2439
    %2505 = vmatprep.mubr.bf16.mxu0 %v1540
    %2506 = vmatmul.mubr.bf16.gmra.mrb[0].mxu0 %v1539
    %v2507 = vpop.f32.mrb[0].mxu0
    %v2508 = vadd.f32 %v2305, %v2507
    %v2509 = vpop.f32.mrb[0].mxu0
    %v2510 = vadd.f32 %v2307, %v2509
    %v2511 = vpop.f32.mrb[0].mxu0
    %v2512 = vadd.f32 %v2309, %v2511
    %v2513 = vpop.f32.mrb[0].mxu0
    %v2514 = vadd.f32 %v2311, %v2513
    %2515 = vdwg.mxu0
    %s2516 = scalar_lea.vmem %s3, 512
    %v2517 = vld [vmem:[%s2516] sm:$0xff]
    %v2518 = vld [vmem:[%s2516 + $0x8] sm:$0xff]
    %v2519 = vld [vmem:[%s2516 + $0x10] sm:$0xff]
    %v2520 = vld [vmem:[%s2516 + $0x18] sm:$0xff]
    %v2521 = vld [vmem:[%s2516 + $0x20] sm:$0xff]
    %v2522 = vld [vmem:[%s2516 + $0x28] sm:$0xff]
    %v2523 = vld [vmem:[%s2516 + $0x30] sm:$0xff]
    %v2524 = vld [vmem:[%s2516 + $0x38] sm:$0xff]
    %v2525 = vld [vmem:[%s2516 + $0x40] sm:$0xff]
    %v2526 = vld [vmem:[%s2516 + $0x48] sm:$0xff]
    %v2527 = vld [vmem:[%s2516 + $0x50] sm:$0xff]
    %v2528 = vld [vmem:[%s2516 + $0x58] sm:$0xff]
    %v2529 = vld [vmem:[%s2516 + $0x60] sm:$0xff]
    %v2530 = vld [vmem:[%s2516 + $0x68] sm:$0xff]
    %v2531 = vld [vmem:[%s2516 + $0x70] sm:$0xff]
    %v2532 = vld [vmem:[%s2516 + $0x78] sm:$0xff]
    %v2533 = vld [vmem:[%s2516 + $0x80] sm:$0xff]
    %v2534 = vld [vmem:[%s2516 + $0x88] sm:$0xff]
    %v2535 = vld [vmem:[%s2516 + $0x90] sm:$0xff]
    %v2536 = vld [vmem:[%s2516 + $0x98] sm:$0xff]
    %v2537 = vld [vmem:[%s2516 + $0xa0] sm:$0xff]
    %v2538 = vld [vmem:[%s2516 + $0xa8] sm:$0xff]
    %v2539 = vld [vmem:[%s2516 + $0xb0] sm:$0xff]
    %v2540 = vld [vmem:[%s2516 + $0xb8] sm:$0xff]
    %v2541 = vld [vmem:[%s2516 + $0xc0] sm:$0xff]
    %v2542 = vld [vmem:[%s2516 + $0xc8] sm:$0xff]
    %v2543 = vld [vmem:[%s2516 + $0xd0] sm:$0xff]
    %v2544 = vld [vmem:[%s2516 + $0xd8] sm:$0xff]
    %v2545 = vld [vmem:[%s2516 + $0xe0] sm:$0xff]
    %v2546 = vld [vmem:[%s2516 + $0xe8] sm:$0xff]
    %v2547 = vld [vmem:[%s2516 + $0xf0] sm:$0xff]
    %v2548 = vld [vmem:[%s2516 + $0xf8] sm:$0xff]
    %v2581 = vunpack.c.l.b16 %v2517
    %v2582 = vunpack.c.h.b16 %v2517
    %v2583 = vunpack.c.l.b16 %v2518
    %v2584 = vunpack.c.h.b16 %v2518
    %v2585 = vunpack.c.l.b16 %v2519
    %v2586 = vunpack.c.h.b16 %v2519
    %v2587 = vunpack.c.l.b16 %v2520
    %v2588 = vunpack.c.h.b16 %v2520
    %v2589 = vunpack.c.l.b16 %v2521
    %v2590 = vunpack.c.h.b16 %v2521
    %v2591 = vunpack.c.l.b16 %v2522
    %v2592 = vunpack.c.h.b16 %v2522
    %v2593 = vunpack.c.l.b16 %v2523
    %v2594 = vunpack.c.h.b16 %v2523
    %v2595 = vunpack.c.l.b16 %v2524
    %v2596 = vunpack.c.h.b16 %v2524
    %v2597 = vunpack.c.l.b16 %v2525
    %v2598 = vunpack.c.h.b16 %v2525
    %v2599 = vunpack.c.l.b16 %v2526
    %v2600 = vunpack.c.h.b16 %v2526
    %v2601 = vunpack.c.l.b16 %v2527
    %v2602 = vunpack.c.h.b16 %v2527
    %v2603 = vunpack.c.l.b16 %v2528
    %v2604 = vunpack.c.h.b16 %v2528
    %v2605 = vunpack.c.l.b16 %v2529
    %v2606 = vunpack.c.h.b16 %v2529
    %v2607 = vunpack.c.l.b16 %v2530
    %v2608 = vunpack.c.h.b16 %v2530
    %v2609 = vunpack.c.l.b16 %v2531
    %v2610 = vunpack.c.h.b16 %v2531
    %v2611 = vunpack.c.l.b16 %v2532
    %v2612 = vunpack.c.h.b16 %v2532
    %v2613 = vunpack.c.l.b16 %v2533
    %v2614 = vunpack.c.h.b16 %v2533
    %v2615 = vunpack.c.l.b16 %v2534
    %v2616 = vunpack.c.h.b16 %v2534
    %v2617 = vunpack.c.l.b16 %v2535
    %v2618 = vunpack.c.h.b16 %v2535
    %v2619 = vunpack.c.l.b16 %v2536
    %v2620 = vunpack.c.h.b16 %v2536
    %v2621 = vunpack.c.l.b16 %v2537
    %v2622 = vunpack.c.h.b16 %v2537
    %v2623 = vunpack.c.l.b16 %v2538
    %v2624 = vunpack.c.h.b16 %v2538
    %v2625 = vunpack.c.l.b16 %v2539
    %v2626 = vunpack.c.h.b16 %v2539
    %v2627 = vunpack.c.l.b16 %v2540
    %v2628 = vunpack.c.h.b16 %v2540
    %v2629 = vunpack.c.l.b16 %v2541
    %v2630 = vunpack.c.h.b16 %v2541
    %v2631 = vunpack.c.l.b16 %v2542
    %v2632 = vunpack.c.h.b16 %v2542
    %v2633 = vunpack.c.l.b16 %v2543
    %v2634 = vunpack.c.h.b16 %v2543
    %v2635 = vunpack.c.l.b16 %v2544
    %v2636 = vunpack.c.h.b16 %v2544
    %v2637 = vunpack.c.l.b16 %v2545
    %v2638 = vunpack.c.h.b16 %v2545
    %v2639 = vunpack.c.l.b16 %v2546
    %v2640 = vunpack.c.h.b16 %v2546
    %v2641 = vunpack.c.l.b16 %v2547
    %v2642 = vunpack.c.h.b16 %v2547
    %v2643 = vunpack.c.l.b16 %v2548
    %v2644 = vunpack.c.h.b16 %v2548
    %v2645 = vpack.c.b16 %v2583, %v2581
    %v2646 = vpack.c.b16 %v2584, %v2582
    %v2647 = vpack.c.b16 %v2587, %v2585
    %v2648 = vpack.c.b16 %v2588, %v2586
    %v2649 = vpack.c.b16 %v2591, %v2589
    %v2650 = vpack.c.b16 %v2592, %v2590
    %v2651 = vpack.c.b16 %v2595, %v2593
    %v2652 = vpack.c.b16 %v2596, %v2594
    %v2653 = vpack.c.b16 %v2599, %v2597
    %v2654 = vpack.c.b16 %v2600, %v2598
    %v2655 = vpack.c.b16 %v2603, %v2601
    %v2656 = vpack.c.b16 %v2604, %v2602
    %v2657 = vpack.c.b16 %v2607, %v2605
    %v2658 = vpack.c.b16 %v2608, %v2606
    %v2659 = vpack.c.b16 %v2611, %v2609
    %v2660 = vpack.c.b16 %v2612, %v2610
    %v2661 = vpack.c.b16 %v2615, %v2613
    %v2662 = vpack.c.b16 %v2616, %v2614
    %v2663 = vpack.c.b16 %v2619, %v2617
    %v2664 = vpack.c.b16 %v2620, %v2618
    %v2665 = vpack.c.b16 %v2623, %v2621
    %v2666 = vpack.c.b16 %v2624, %v2622
    %v2667 = vpack.c.b16 %v2627, %v2625
    %v2668 = vpack.c.b16 %v2628, %v2626
    %v2669 = vpack.c.b16 %v2631, %v2629
    %v2670 = vpack.c.b16 %v2632, %v2630
    %v2671 = vpack.c.b16 %v2635, %v2633
    %v2672 = vpack.c.b16 %v2636, %v2634
    %v2673 = vpack.c.b16 %v2639, %v2637
    %v2674 = vpack.c.b16 %v2640, %v2638
    %v2675 = vpack.c.b16 %v2643, %v2641
    %v2676 = vpack.c.b16 %v2644, %v2642
    %2709 = vmatprep.subr.bf16.mxu0 %v2646
    %2710 = vmatpush1.bf16.msra.mxu0 %v2645
    %2711 = vmatprep.subr.bf16.mxu0 %v2648
    %2712 = vmatpush1.bf16.msra.mxu0 %v2647
    %2713 = vmatprep.subr.bf16.mxu0 %v2650
    %2714 = vmatpush1.bf16.msra.mxu0 %v2649
    %2715 = vmatprep.subr.bf16.mxu0 %v2652
    %2716 = vmatpush1.bf16.msra.mxu0 %v2651
    %2717 = vmatprep.subr.bf16.mxu0 %v2654
    %2718 = vmatpush1.bf16.msra.mxu0 %v2653
    %2719 = vmatprep.subr.bf16.mxu0 %v2656
    %2720 = vmatpush1.bf16.msra.mxu0 %v2655
    %2721 = vmatprep.subr.bf16.mxu0 %v2658
    %2722 = vmatpush1.bf16.msra.mxu0 %v2657
    %2723 = vmatprep.subr.bf16.mxu0 %v2660
    %2724 = vmatpush1.bf16.msra.mxu0 %v2659
    %2725 = vmatprep.subr.bf16.mxu0 %v2662
    %2726 = vmatpush1.bf16.msra.mxu0 %v2661
    %2727 = vmatprep.subr.bf16.mxu0 %v2664
    %2728 = vmatpush1.bf16.msra.mxu0 %v2663
    %2729 = vmatprep.subr.bf16.mxu0 %v2666
    %2730 = vmatpush1.bf16.msra.mxu0 %v2665
    %2731 = vmatprep.subr.bf16.mxu0 %v2668
    %2732 = vmatpush1.bf16.msra.mxu0 %v2667
    %2733 = vmatprep.subr.bf16.mxu0 %v2670
    %2734 = vmatpush1.bf16.msra.mxu0 %v2669
    %2735 = vmatprep.subr.bf16.mxu0 %v2672
    %2736 = vmatpush1.bf16.msra.mxu0 %v2671
    %2737 = vmatprep.subr.bf16.mxu0 %v2674
    %2738 = vmatpush1.bf16.msra.mxu0 %v2673
    %2739 = vmatprep.subr.bf16.mxu0 %v2676
    %2740 = vmatpush1.bf16.msra.mxu0 %v2675
    %2741 = vmatprep.mubr.bf16.mxu0 %v1566
    %2742 = vmatmul.mubr.bf16.gmra.mrb[0].mxu0 %v1565
    %v2743 = vpop.f32.mrb[0].mxu0
    %v2744 = vadd.f32 0.0, %v2743
    %v2745 = vpop.f32.mrb[0].mxu0
    %v2746 = vadd.f32 0.0, %v2745
    %v2747 = vpop.f32.mrb[0].mxu0
    %v2748 = vadd.f32 0.0, %v2747
    %v2749 = vpop.f32.mrb[0].mxu0
    %v2750 = vadd.f32 0.0, %v2749
    %2751 = vdwg.mxu0
    %v2752 = vadd.f32 %v2069, %v2744
    %v2753 = vadd.f32 %v2071, %v2746
    %v2754 = vadd.f32 %v2073, %v2748
    %v2755 = vadd.f32 %v2075, %v2750
    %s2756 = scalar_lea.vmem %s3, 1792
    %v2757 = vld [vmem:[%s2756] sm:$0xff]
    %v2758 = vld [vmem:[%s2756 + $0x8] sm:$0xff]
    %v2759 = vld [vmem:[%s2756 + $0x10] sm:$0xff]
    %v2760 = vld [vmem:[%s2756 + $0x18] sm:$0xff]
    %v2761 = vld [vmem:[%s2756 + $0x20] sm:$0xff]
    %v2762 = vld [vmem:[%s2756 + $0x28] sm:$0xff]
    %v2763 = vld [vmem:[%s2756 + $0x30] sm:$0xff]
    %v2764 = vld [vmem:[%s2756 + $0x38] sm:$0xff]
    %v2765 = vld [vmem:[%s2756 + $0x40] sm:$0xff]
    %v2766 = vld [vmem:[%s2756 + $0x48] sm:$0xff]
    %v2767 = vld [vmem:[%s2756 + $0x50] sm:$0xff]
    %v2768 = vld [vmem:[%s2756 + $0x58] sm:$0xff]
    %v2769 = vld [vmem:[%s2756 + $0x60] sm:$0xff]
    %v2770 = vld [vmem:[%s2756 + $0x68] sm:$0xff]
    %v2771 = vld [vmem:[%s2756 + $0x70] sm:$0xff]
    %v2772 = vld [vmem:[%s2756 + $0x78] sm:$0xff]
    %v2773 = vld [vmem:[%s2756 + $0x80] sm:$0xff]
    %v2774 = vld [vmem:[%s2756 + $0x88] sm:$0xff]
    %v2775 = vld [vmem:[%s2756 + $0x90] sm:$0xff]
    %v2776 = vld [vmem:[%s2756 + $0x98] sm:$0xff]
    %v2777 = vld [vmem:[%s2756 + $0xa0] sm:$0xff]
    %v2778 = vld [vmem:[%s2756 + $0xa8] sm:$0xff]
    %v2779 = vld [vmem:[%s2756 + $0xb0] sm:$0xff]
    %v2780 = vld [vmem:[%s2756 + $0xb8] sm:$0xff]
    %v2781 = vld [vmem:[%s2756 + $0xc0] sm:$0xff]
    %v2782 = vld [vmem:[%s2756 + $0xc8] sm:$0xff]
    %v2783 = vld [vmem:[%s2756 + $0xd0] sm:$0xff]
    %v2784 = vld [vmem:[%s2756 + $0xd8] sm:$0xff]
    %v2785 = vld [vmem:[%s2756 + $0xe0] sm:$0xff]
    %v2786 = vld [vmem:[%s2756 + $0xe8] sm:$0xff]
    %v2787 = vld [vmem:[%s2756 + $0xf0] sm:$0xff]
    %v2788 = vld [vmem:[%s2756 + $0xf8] sm:$0xff]
    %v2821 = vunpack.c.l.b16 %v2757
    %v2822 = vunpack.c.h.b16 %v2757
    %v2823 = vunpack.c.l.b16 %v2758
    %v2824 = vunpack.c.h.b16 %v2758
    %v2825 = vunpack.c.l.b16 %v2759
    %v2826 = vunpack.c.h.b16 %v2759
    %v2827 = vunpack.c.l.b16 %v2760
    %v2828 = vunpack.c.h.b16 %v2760
    %v2829 = vunpack.c.l.b16 %v2761
    %v2830 = vunpack.c.h.b16 %v2761
    %v2831 = vunpack.c.l.b16 %v2762
    %v2832 = vunpack.c.h.b16 %v2762
    %v2833 = vunpack.c.l.b16 %v2763
    %v2834 = vunpack.c.h.b16 %v2763
    %v2835 = vunpack.c.l.b16 %v2764
    %v2836 = vunpack.c.h.b16 %v2764
    %v2837 = vunpack.c.l.b16 %v2765
    %v2838 = vunpack.c.h.b16 %v2765
    %v2839 = vunpack.c.l.b16 %v2766
    %v2840 = vunpack.c.h.b16 %v2766
    %v2841 = vunpack.c.l.b16 %v2767
    %v2842 = vunpack.c.h.b16 %v2767
    %v2843 = vunpack.c.l.b16 %v2768
    %v2844 = vunpack.c.h.b16 %v2768
    %v2845 = vunpack.c.l.b16 %v2769
    %v2846 = vunpack.c.h.b16 %v2769
    %v2847 = vunpack.c.l.b16 %v2770
    %v2848 = vunpack.c.h.b16 %v2770
    %v2849 = vunpack.c.l.b16 %v2771
    %v2850 = vunpack.c.h.b16 %v2771
    %v2851 = vunpack.c.l.b16 %v2772
    %v2852 = vunpack.c.h.b16 %v2772
    %v2853 = vunpack.c.l.b16 %v2773
    %v2854 = vunpack.c.h.b16 %v2773
    %v2855 = vunpack.c.l.b16 %v2774
    %v2856 = vunpack.c.h.b16 %v2774
    %v2857 = vunpack.c.l.b16 %v2775
    %v2858 = vunpack.c.h.b16 %v2775
    %v2859 = vunpack.c.l.b16 %v2776
    %v2860 = vunpack.c.h.b16 %v2776
    %v2861 = vunpack.c.l.b16 %v2777
    %v2862 = vunpack.c.h.b16 %v2777
    %v2863 = vunpack.c.l.b16 %v2778
    %v2864 = vunpack.c.h.b16 %v2778
    %v2865 = vunpack.c.l.b16 %v2779
    %v2866 = vunpack.c.h.b16 %v2779
    %v2867 = vunpack.c.l.b16 %v2780
    %v2868 = vunpack.c.h.b16 %v2780
    %v2869 = vunpack.c.l.b16 %v2781
    %v2870 = vunpack.c.h.b16 %v2781
    %v2871 = vunpack.c.l.b16 %v2782
    %v2872 = vunpack.c.h.b16 %v2782
    %v2873 = vunpack.c.l.b16 %v2783
    %v2874 = vunpack.c.h.b16 %v2783
    %v2875 = vunpack.c.l.b16 %v2784
    %v2876 = vunpack.c.h.b16 %v2784
    %v2877 = vunpack.c.l.b16 %v2785
    %v2878 = vunpack.c.h.b16 %v2785
    %v2879 = vunpack.c.l.b16 %v2786
    %v2880 = vunpack.c.h.b16 %v2786
    %v2881 = vunpack.c.l.b16 %v2787
    %v2882 = vunpack.c.h.b16 %v2787
    %v2883 = vunpack.c.l.b16 %v2788
    %v2884 = vunpack.c.h.b16 %v2788
    %v2885 = vpack.c.b16 %v2823, %v2821
    %v2886 = vpack.c.b16 %v2824, %v2822
    %v2887 = vpack.c.b16 %v2827, %v2825
    %v2888 = vpack.c.b16 %v2828, %v2826
    %v2889 = vpack.c.b16 %v2831, %v2829
    %v2890 = vpack.c.b16 %v2832, %v2830
    %v2891 = vpack.c.b16 %v2835, %v2833
    %v2892 = vpack.c.b16 %v2836, %v2834
    %v2893 = vpack.c.b16 %v2839, %v2837
    %v2894 = vpack.c.b16 %v2840, %v2838
    %v2895 = vpack.c.b16 %v2843, %v2841
    %v2896 = vpack.c.b16 %v2844, %v2842
    %v2897 = vpack.c.b16 %v2847, %v2845
    %v2898 = vpack.c.b16 %v2848, %v2846
    %v2899 = vpack.c.b16 %v2851, %v2849
    %v2900 = vpack.c.b16 %v2852, %v2850
    %v2901 = vpack.c.b16 %v2855, %v2853
    %v2902 = vpack.c.b16 %v2856, %v2854
    %v2903 = vpack.c.b16 %v2859, %v2857
    %v2904 = vpack.c.b16 %v2860, %v2858
    %v2905 = vpack.c.b16 %v2863, %v2861
    %v2906 = vpack.c.b16 %v2864, %v2862
    %v2907 = vpack.c.b16 %v2867, %v2865
    %v2908 = vpack.c.b16 %v2868, %v2866
    %v2909 = vpack.c.b16 %v2871, %v2869
    %v2910 = vpack.c.b16 %v2872, %v2870
    %v2911 = vpack.c.b16 %v2875, %v2873
    %v2912 = vpack.c.b16 %v2876, %v2874
    %v2913 = vpack.c.b16 %v2879, %v2877
    %v2914 = vpack.c.b16 %v2880, %v2878
    %v2915 = vpack.c.b16 %v2883, %v2881
    %v2916 = vpack.c.b16 %v2884, %v2882
    %2949 = vmatprep.subr.bf16.mxu0 %v2886
    %2950 = vmatpush1.bf16.msra.mxu0 %v2885
    %2951 = vmatprep.subr.bf16.mxu0 %v2888
    %2952 = vmatpush1.bf16.msra.mxu0 %v2887
    %2953 = vmatprep.subr.bf16.mxu0 %v2890
    %2954 = vmatpush1.bf16.msra.mxu0 %v2889
    %2955 = vmatprep.subr.bf16.mxu0 %v2892
    %2956 = vmatpush1.bf16.msra.mxu0 %v2891
    %2957 = vmatprep.subr.bf16.mxu0 %v2894
    %2958 = vmatpush1.bf16.msra.mxu0 %v2893
    %2959 = vmatprep.subr.bf16.mxu0 %v2896
    %2960 = vmatpush1.bf16.msra.mxu0 %v2895
    %2961 = vmatprep.subr.bf16.mxu0 %v2898
    %2962 = vmatpush1.bf16.msra.mxu0 %v2897
    %2963 = vmatprep.subr.bf16.mxu0 %v2900
    %2964 = vmatpush1.bf16.msra.mxu0 %v2899
    %2965 = vmatprep.subr.bf16.mxu0 %v2902
    %2966 = vmatpush1.bf16.msra.mxu0 %v2901
    %2967 = vmatprep.subr.bf16.mxu0 %v2904
    %2968 = vmatpush1.bf16.msra.mxu0 %v2903
    %2969 = vmatprep.subr.bf16.mxu0 %v2906
    %2970 = vmatpush1.bf16.msra.mxu0 %v2905
    %2971 = vmatprep.subr.bf16.mxu0 %v2908
    %2972 = vmatpush1.bf16.msra.mxu0 %v2907
    %2973 = vmatprep.subr.bf16.mxu0 %v2910
    %2974 = vmatpush1.bf16.msra.mxu0 %v2909
    %2975 = vmatprep.subr.bf16.mxu0 %v2912
    %2976 = vmatpush1.bf16.msra.mxu0 %v2911
    %2977 = vmatprep.subr.bf16.mxu0 %v2914
    %2978 = vmatpush1.bf16.msra.mxu0 %v2913
    %2979 = vmatprep.subr.bf16.mxu0 %v2916
    %2980 = vmatpush1.bf16.msra.mxu0 %v2915
    %2981 = vmatprep.mubr.bf16.mxu0 %v1566
    %2982 = vmatmul.mubr.bf16.gmra.mrb[0].mxu0 %v1565
    %v2983 = vpop.f32.mrb[0].mxu0
    %v2984 = vadd.f32 0.0, %v2983
    %v2985 = vpop.f32.mrb[0].mxu0
    %v2986 = vadd.f32 0.0, %v2985
    %v2987 = vpop.f32.mrb[0].mxu0
    %v2988 = vadd.f32 0.0, %v2987
    %v2989 = vpop.f32.mrb[0].mxu0
    %v2990 = vadd.f32 0.0, %v2989
    %2991 = vdwg.mxu0
    %v2992 = vadd.f32 %v2508, %v2984
    %v2993 = vadd.f32 %v2510, %v2986
    %v2994 = vadd.f32 %v2512, %v2988
    %v2995 = vadd.f32 %v2514, %v2990
    %s2996 = scalar_lea.vmem %s3, 2048
    %v2997 = vld [vmem:[%s2996] sm:$0xff]
    %v2998 = vld [vmem:[%s2996 + $0x8] sm:$0xff]
    %v2999 = vld [vmem:[%s2996 + $0x10] sm:$0xff]
    %v3000 = vld [vmem:[%s2996 + $0x18] sm:$0xff]
    %v3001 = vld [vmem:[%s2996 + $0x20] sm:$0xff]
    %v3002 = vld [vmem:[%s2996 + $0x28] sm:$0xff]
    %v3003 = vld [vmem:[%s2996 + $0x30] sm:$0xff]
    %v3004 = vld [vmem:[%s2996 + $0x38] sm:$0xff]
    %v3005 = vld [vmem:[%s2996 + $0x40] sm:$0xff]
    %v3006 = vld [vmem:[%s2996 + $0x48] sm:$0xff]
    %v3007 = vld [vmem:[%s2996 + $0x50] sm:$0xff]
    %v3008 = vld [vmem:[%s2996 + $0x58] sm:$0xff]
    %v3009 = vld [vmem:[%s2996 + $0x60] sm:$0xff]
    %v3010 = vld [vmem:[%s2996 + $0x68] sm:$0xff]
    %v3011 = vld [vmem:[%s2996 + $0x70] sm:$0xff]
    %v3012 = vld [vmem:[%s2996 + $0x78] sm:$0xff]
    %v3013 = vld [vmem:[%s2996 + $0x80] sm:$0xff]
    %v3014 = vld [vmem:[%s2996 + $0x88] sm:$0xff]
    %v3015 = vld [vmem:[%s2996 + $0x90] sm:$0xff]
    %v3016 = vld [vmem:[%s2996 + $0x98] sm:$0xff]
    %v3017 = vld [vmem:[%s2996 + $0xa0] sm:$0xff]
    %v3018 = vld [vmem:[%s2996 + $0xa8] sm:$0xff]
    %v3019 = vld [vmem:[%s2996 + $0xb0] sm:$0xff]
    %v3020 = vld [vmem:[%s2996 + $0xb8] sm:$0xff]
    %v3021 = vld [vmem:[%s2996 + $0xc0] sm:$0xff]
    %v3022 = vld [vmem:[%s2996 + $0xc8] sm:$0xff]
    %v3023 = vld [vmem:[%s2996 + $0xd0] sm:$0xff]
    %v3024 = vld [vmem:[%s2996 + $0xd8] sm:$0xff]
    %v3025 = vld [vmem:[%s2996 + $0xe0] sm:$0xff]
    %v3026 = vld [vmem:[%s2996 + $0xe8] sm:$0xff]
    %v3027 = vld [vmem:[%s2996 + $0xf0] sm:$0xff]
    %v3028 = vld [vmem:[%s2996 + $0xf8] sm:$0xff]
    %v3061 = vunpack.c.l.b16 %v2997
    %v3062 = vunpack.c.h.b16 %v2997
    %v3063 = vunpack.c.l.b16 %v2998
    %v3064 = vunpack.c.h.b16 %v2998
    %v3065 = vunpack.c.l.b16 %v2999
    %v3066 = vunpack.c.h.b16 %v2999
    %v3067 = vunpack.c.l.b16 %v3000
    %v3068 = vunpack.c.h.b16 %v3000
    %v3069 = vunpack.c.l.b16 %v3001
    %v3070 = vunpack.c.h.b16 %v3001
    %v3071 = vunpack.c.l.b16 %v3002
    %v3072 = vunpack.c.h.b16 %v3002
    %v3073 = vunpack.c.l.b16 %v3003
    %v3074 = vunpack.c.h.b16 %v3003
    %v3075 = vunpack.c.l.b16 %v3004
    %v3076 = vunpack.c.h.b16 %v3004
    %v3077 = vunpack.c.l.b16 %v3005
    %v3078 = vunpack.c.h.b16 %v3005
    %v3079 = vunpack.c.l.b16 %v3006
    %v3080 = vunpack.c.h.b16 %v3006
    %v3081 = vunpack.c.l.b16 %v3007
    %v3082 = vunpack.c.h.b16 %v3007
    %v3083 = vunpack.c.l.b16 %v3008
    %v3084 = vunpack.c.h.b16 %v3008
    %v3085 = vunpack.c.l.b16 %v3009
    %v3086 = vunpack.c.h.b16 %v3009
    %v3087 = vunpack.c.l.b16 %v3010
    %v3088 = vunpack.c.h.b16 %v3010
    %v3089 = vunpack.c.l.b16 %v3011
    %v3090 = vunpack.c.h.b16 %v3011
    %v3091 = vunpack.c.l.b16 %v3012
    %v3092 = vunpack.c.h.b16 %v3012
    %v3093 = vunpack.c.l.b16 %v3013
    %v3094 = vunpack.c.h.b16 %v3013
    %v3095 = vunpack.c.l.b16 %v3014
    %v3096 = vunpack.c.h.b16 %v3014
    %v3097 = vunpack.c.l.b16 %v3015
    %v3098 = vunpack.c.h.b16 %v3015
    %v3099 = vunpack.c.l.b16 %v3016
    %v3100 = vunpack.c.h.b16 %v3016
    %v3101 = vunpack.c.l.b16 %v3017
    %v3102 = vunpack.c.h.b16 %v3017
    %v3103 = vunpack.c.l.b16 %v3018
    %v3104 = vunpack.c.h.b16 %v3018
    %v3105 = vunpack.c.l.b16 %v3019
    %v3106 = vunpack.c.h.b16 %v3019
    %v3107 = vunpack.c.l.b16 %v3020
    %v3108 = vunpack.c.h.b16 %v3020
    %v3109 = vunpack.c.l.b16 %v3021
    %v3110 = vunpack.c.h.b16 %v3021
    %v3111 = vunpack.c.l.b16 %v3022
    %v3112 = vunpack.c.h.b16 %v3022
    %v3113 = vunpack.c.l.b16 %v3023
    %v3114 = vunpack.c.h.b16 %v3023
    %v3115 = vunpack.c.l.b16 %v3024
    %v3116 = vunpack.c.h.b16 %v3024
    %v3117 = vunpack.c.l.b16 %v3025
    %v3118 = vunpack.c.h.b16 %v3025
    %v3119 = vunpack.c.l.b16 %v3026
    %v3120 = vunpack.c.h.b16 %v3026
    %v3121 = vunpack.c.l.b16 %v3027
    %v3122 = vunpack.c.h.b16 %v3027
    %v3123 = vunpack.c.l.b16 %v3028
    %v3124 = vunpack.c.h.b16 %v3028
    %v3125 = vpack.c.b16 %v3063, %v3061
    %v3126 = vpack.c.b16 %v3064, %v3062
    %v3127 = vpack.c.b16 %v3067, %v3065
    %v3128 = vpack.c.b16 %v3068, %v3066
    %v3129 = vpack.c.b16 %v3071, %v3069
    %v3130 = vpack.c.b16 %v3072, %v3070
    %v3131 = vpack.c.b16 %v3075, %v3073
    %v3132 = vpack.c.b16 %v3076, %v3074
    %v3133 = vpack.c.b16 %v3079, %v3077
    %v3134 = vpack.c.b16 %v3080, %v3078
    %v3135 = vpack.c.b16 %v3083, %v3081
    %v3136 = vpack.c.b16 %v3084, %v3082
    %v3137 = vpack.c.b16 %v3087, %v3085
    %v3138 = vpack.c.b16 %v3088, %v3086
    %v3139 = vpack.c.b16 %v3091, %v3089
    %v3140 = vpack.c.b16 %v3092, %v3090
    %v3141 = vpack.c.b16 %v3095, %v3093
    %v3142 = vpack.c.b16 %v3096, %v3094
    %v3143 = vpack.c.b16 %v3099, %v3097
    %v3144 = vpack.c.b16 %v3100, %v3098
    %v3145 = vpack.c.b16 %v3103, %v3101
    %v3146 = vpack.c.b16 %v3104, %v3102
    %v3147 = vpack.c.b16 %v3107, %v3105
    %v3148 = vpack.c.b16 %v3108, %v3106
    %v3149 = vpack.c.b16 %v3111, %v3109
    %v3150 = vpack.c.b16 %v3112, %v3110
    %v3151 = vpack.c.b16 %v3115, %v3113
    %v3152 = vpack.c.b16 %v3116, %v3114
    %v3153 = vpack.c.b16 %v3119, %v3117
    %v3154 = vpack.c.b16 %v3120, %v3118
    %v3155 = vpack.c.b16 %v3123, %v3121
    %v3156 = vpack.c.b16 %v3124, %v3122
    %3189 = vmatprep.subr.bf16.mxu0 %v3126
    %3190 = vmatpush1.bf16.msra.mxu0 %v3125
    %3191 = vmatprep.subr.bf16.mxu0 %v3128
    %3192 = vmatpush1.bf16.msra.mxu0 %v3127
    %3193 = vmatprep.subr.bf16.mxu0 %v3130
    %3194 = vmatpush1.bf16.msra.mxu0 %v3129
    %3195 = vmatprep.subr.bf16.mxu0 %v3132
    %3196 = vmatpush1.bf16.msra.mxu0 %v3131
    %3197 = vmatprep.subr.bf16.mxu0 %v3134
    %3198 = vmatpush1.bf16.msra.mxu0 %v3133
    %3199 = vmatprep.subr.bf16.mxu0 %v3136
    %3200 = vmatpush1.bf16.msra.mxu0 %v3135
    %3201 = vmatprep.subr.bf16.mxu0 %v3138
    %3202 = vmatpush1.bf16.msra.mxu0 %v3137
    %3203 = vmatprep.subr.bf16.mxu0 %v3140
    %3204 = vmatpush1.bf16.msra.mxu0 %v3139
    %3205 = vmatprep.subr.bf16.mxu0 %v3142
    %3206 = vmatpush1.bf16.msra.mxu0 %v3141
    %3207 = vmatprep.subr.bf16.mxu0 %v3144
    %3208 = vmatpush1.bf16.msra.mxu0 %v3143
    %3209 = vmatprep.subr.bf16.mxu0 %v3146
    %3210 = vmatpush1.bf16.msra.mxu0 %v3145
    %3211 = vmatprep.subr.bf16.mxu0 %v3148
    %3212 = vmatpush1.bf16.msra.mxu0 %v3147
    %3213 = vmatprep.subr.bf16.mxu0 %v3150
    %3214 = vmatpush1.bf16.msra.mxu0 %v3149
    %3215 = vmatprep.subr.bf16.mxu0 %v3152
    %3216 = vmatpush1.bf16.msra.mxu0 %v3151
    %3217 = vmatprep.subr.bf16.mxu0 %v3154
    %3218 = vmatpush1.bf16.msra.mxu0 %v3153
    %3219 = vmatprep.subr.bf16.mxu0 %v3156
    %3220 = vmatpush1.bf16.msra.mxu0 %v3155
    %3221 = vmatprep.mubr.bf16.mxu0 %v1566
    %3222 = vmatmul.mubr.bf16.gmra.mrb[0].mxu0 %v1565
    %v3223 = vpop.f32.mrb[0].mxu0
    %v3224 = vadd.f32 0.0, %v3223
    %v3225 = vpop.f32.mrb[0].mxu0
    %v3226 = vadd.f32 0.0, %v3225
    %v3227 = vpop.f32.mrb[0].mxu0
    %v3228 = vadd.f32 0.0, %v3227
    %v3229 = vpop.f32.mrb[0].mxu0
    %v3230 = vadd.f32 0.0, %v3229
    %3231 = vdwg.mxu0
    %v3232 = vadd.f32 %v2752, %v3224
    %v3233 = vadd.f32 %v2753, %v3226
    %v3234 = vadd.f32 %v2754, %v3228
    %v3235 = vadd.f32 %v2755, %v3230
    %s3236 = scalar_lea.vmem %s3, 768
    %v3237 = vld [vmem:[%s3236] sm:$0xff]
    %v3238 = vld [vmem:[%s3236 + $0x8] sm:$0xff]
    %v3239 = vld [vmem:[%s3236 + $0x10] sm:$0xff]
    %v3240 = vld [vmem:[%s3236 + $0x18] sm:$0xff]
    %v3241 = vld [vmem:[%s3236 + $0x20] sm:$0xff]
    %v3242 = vld [vmem:[%s3236 + $0x28] sm:$0xff]
    %v3243 = vld [vmem:[%s3236 + $0x30] sm:$0xff]
    %v3244 = vld [vmem:[%s3236 + $0x38] sm:$0xff]
    %v3245 = vld [vmem:[%s3236 + $0x40] sm:$0xff]
    %v3246 = vld [vmem:[%s3236 + $0x48] sm:$0xff]
    %v3247 = vld [vmem:[%s3236 + $0x50] sm:$0xff]
    %v3248 = vld [vmem:[%s3236 + $0x58] sm:$0xff]
    %v3249 = vld [vmem:[%s3236 + $0x60] sm:$0xff]
    %v3250 = vld [vmem:[%s3236 + $0x68] sm:$0xff]
    %v3251 = vld [vmem:[%s3236 + $0x70] sm:$0xff]
    %v3252 = vld [vmem:[%s3236 + $0x78] sm:$0xff]
    %v3253 = vld [vmem:[%s3236 + $0x80] sm:$0xff]
    %v3254 = vld [vmem:[%s3236 + $0x88] sm:$0xff]
    %v3255 = vld [vmem:[%s3236 + $0x90] sm:$0xff]
    %v3256 = vld [vmem:[%s3236 + $0x98] sm:$0xff]
    %v3257 = vld [vmem:[%s3236 + $0xa0] sm:$0xff]
    %v3258 = vld [vmem:[%s3236 + $0xa8] sm:$0xff]
    %v3259 = vld [vmem:[%s3236 + $0xb0] sm:$0xff]
    %v3260 = vld [vmem:[%s3236 + $0xb8] sm:$0xff]
    %v3261 = vld [vmem:[%s3236 + $0xc0] sm:$0xff]
    %v3262 = vld [vmem:[%s3236 + $0xc8] sm:$0xff]
    %v3263 = vld [vmem:[%s3236 + $0xd0] sm:$0xff]
    %v3264 = vld [vmem:[%s3236 + $0xd8] sm:$0xff]
    %v3265 = vld [vmem:[%s3236 + $0xe0] sm:$0xff]
    %v3266 = vld [vmem:[%s3236 + $0xe8] sm:$0xff]
    %v3267 = vld [vmem:[%s3236 + $0xf0] sm:$0xff]
    %v3268 = vld [vmem:[%s3236 + $0xf8] sm:$0xff]
    %v3301 = vunpack.c.l.b16 %v3237
    %v3302 = vunpack.c.h.b16 %v3237
    %v3303 = vunpack.c.l.b16 %v3238
    %v3304 = vunpack.c.h.b16 %v3238
    %v3305 = vunpack.c.l.b16 %v3239
    %v3306 = vunpack.c.h.b16 %v3239
    %v3307 = vunpack.c.l.b16 %v3240
    %v3308 = vunpack.c.h.b16 %v3240
    %v3309 = vunpack.c.l.b16 %v3241
    %v3310 = vunpack.c.h.b16 %v3241
    %v3311 = vunpack.c.l.b16 %v3242
    %v3312 = vunpack.c.h.b16 %v3242
    %v3313 = vunpack.c.l.b16 %v3243
    %v3314 = vunpack.c.h.b16 %v3243
    %v3315 = vunpack.c.l.b16 %v3244
    %v3316 = vunpack.c.h.b16 %v3244
    %v3317 = vunpack.c.l.b16 %v3245
    %v3318 = vunpack.c.h.b16 %v3245
    %v3319 = vunpack.c.l.b16 %v3246
    %v3320 = vunpack.c.h.b16 %v3246
    %v3321 = vunpack.c.l.b16 %v3247
    %v3322 = vunpack.c.h.b16 %v3247
    %v3323 = vunpack.c.l.b16 %v3248
    %v3324 = vunpack.c.h.b16 %v3248
    %v3325 = vunpack.c.l.b16 %v3249
    %v3326 = vunpack.c.h.b16 %v3249
    %v3327 = vunpack.c.l.b16 %v3250
    %v3328 = vunpack.c.h.b16 %v3250
    %v3329 = vunpack.c.l.b16 %v3251
    %v3330 = vunpack.c.h.b16 %v3251
    %v3331 = vunpack.c.l.b16 %v3252
    %v3332 = vunpack.c.h.b16 %v3252
    %v3333 = vunpack.c.l.b16 %v3253
    %v3334 = vunpack.c.h.b16 %v3253
    %v3335 = vunpack.c.l.b16 %v3254
    %v3336 = vunpack.c.h.b16 %v3254
    %v3337 = vunpack.c.l.b16 %v3255
    %v3338 = vunpack.c.h.b16 %v3255
    %v3339 = vunpack.c.l.b16 %v3256
    %v3340 = vunpack.c.h.b16 %v3256
    %v3341 = vunpack.c.l.b16 %v3257
    %v3342 = vunpack.c.h.b16 %v3257
    %v3343 = vunpack.c.l.b16 %v3258
    %v3344 = vunpack.c.h.b16 %v3258
    %v3345 = vunpack.c.l.b16 %v3259
    %v3346 = vunpack.c.h.b16 %v3259
    %v3347 = vunpack.c.l.b16 %v3260
    %v3348 = vunpack.c.h.b16 %v3260
    %v3349 = vunpack.c.l.b16 %v3261
    %v3350 = vunpack.c.h.b16 %v3261
    %v3351 = vunpack.c.l.b16 %v3262
    %v3352 = vunpack.c.h.b16 %v3262
    %v3353 = vunpack.c.l.b16 %v3263
    %v3354 = vunpack.c.h.b16 %v3263
    %v3355 = vunpack.c.l.b16 %v3264
    %v3356 = vunpack.c.h.b16 %v3264
    %v3357 = vunpack.c.l.b16 %v3265
    %v3358 = vunpack.c.h.b16 %v3265
    %v3359 = vunpack.c.l.b16 %v3266
    %v3360 = vunpack.c.h.b16 %v3266
    %v3361 = vunpack.c.l.b16 %v3267
    %v3362 = vunpack.c.h.b16 %v3267
    %v3363 = vunpack.c.l.b16 %v3268
    %v3364 = vunpack.c.h.b16 %v3268
    %v3365 = vpack.c.b16 %v3303, %v3301
    %v3366 = vpack.c.b16 %v3304, %v3302
    %v3367 = vpack.c.b16 %v3307, %v3305
    %v3368 = vpack.c.b16 %v3308, %v3306
    %v3369 = vpack.c.b16 %v3311, %v3309
    %v3370 = vpack.c.b16 %v3312, %v3310
    %v3371 = vpack.c.b16 %v3315, %v3313
    %v3372 = vpack.c.b16 %v3316, %v3314
    %v3373 = vpack.c.b16 %v3319, %v3317
    %v3374 = vpack.c.b16 %v3320, %v3318
    %v3375 = vpack.c.b16 %v3323, %v3321
    %v3376 = vpack.c.b16 %v3324, %v3322
    %v3377 = vpack.c.b16 %v3327, %v3325
    %v3378 = vpack.c.b16 %v3328, %v3326
    %v3379 = vpack.c.b16 %v3331, %v3329
    %v3380 = vpack.c.b16 %v3332, %v3330
    %v3381 = vpack.c.b16 %v3335, %v3333
    %v3382 = vpack.c.b16 %v3336, %v3334
    %v3383 = vpack.c.b16 %v3339, %v3337
    %v3384 = vpack.c.b16 %v3340, %v3338
    %v3385 = vpack.c.b16 %v3343, %v3341
    %v3386 = vpack.c.b16 %v3344, %v3342
    %v3387 = vpack.c.b16 %v3347, %v3345
    %v3388 = vpack.c.b16 %v3348, %v3346
    %v3389 = vpack.c.b16 %v3351, %v3349
    %v3390 = vpack.c.b16 %v3352, %v3350
    %v3391 = vpack.c.b16 %v3355, %v3353
    %v3392 = vpack.c.b16 %v3356, %v3354
    %v3393 = vpack.c.b16 %v3359, %v3357
    %v3394 = vpack.c.b16 %v3360, %v3358
    %v3395 = vpack.c.b16 %v3363, %v3361
    %v3396 = vpack.c.b16 %v3364, %v3362
    %3429 = vmatprep.subr.bf16.mxu0 %v3366
    %3430 = vmatpush1.bf16.msra.mxu0 %v3365
    %3431 = vmatprep.subr.bf16.mxu0 %v3368
    %3432 = vmatpush1.bf16.msra.mxu0 %v3367
    %3433 = vmatprep.subr.bf16.mxu0 %v3370
    %3434 = vmatpush1.bf16.msra.mxu0 %v3369
    %3435 = vmatprep.subr.bf16.mxu0 %v3372
    %3436 = vmatpush1.bf16.msra.mxu0 %v3371
    %3437 = vmatprep.subr.bf16.mxu0 %v3374
    %3438 = vmatpush1.bf16.msra.mxu0 %v3373
    %3439 = vmatprep.subr.bf16.mxu0 %v3376
    %3440 = vmatpush1.bf16.msra.mxu0 %v3375
    %3441 = vmatprep.subr.bf16.mxu0 %v3378
    %3442 = vmatpush1.bf16.msra.mxu0 %v3377
    %3443 = vmatprep.subr.bf16.mxu0 %v3380
    %3444 = vmatpush1.bf16.msra.mxu0 %v3379
    %3445 = vmatprep.subr.bf16.mxu0 %v3382
    %3446 = vmatpush1.bf16.msra.mxu0 %v3381
    %3447 = vmatprep.subr.bf16.mxu0 %v3384
    %3448 = vmatpush1.bf16.msra.mxu0 %v3383
    %3449 = vmatprep.subr.bf16.mxu0 %v3386
    %3450 = vmatpush1.bf16.msra.mxu0 %v3385
    %3451 = vmatprep.subr.bf16.mxu0 %v3388
    %3452 = vmatpush1.bf16.msra.mxu0 %v3387
    %3453 = vmatprep.subr.bf16.mxu0 %v3390
    %3454 = vmatpush1.bf16.msra.mxu0 %v3389
    %3455 = vmatprep.subr.bf16.mxu0 %v3392
    %3456 = vmatpush1.bf16.msra.mxu0 %v3391
    %3457 = vmatprep.subr.bf16.mxu0 %v3394
    %3458 = vmatpush1.bf16.msra.mxu0 %v3393
    %3459 = vmatprep.subr.bf16.mxu0 %v3396
    %3460 = vmatpush1.bf16.msra.mxu0 %v3395
    %3461 = vmatprep.mubr.bf16.mxu0 %v1572
    %3462 = vmatmul.mubr.bf16.gmra.mrb[0].mxu0 %v1571
    %v3463 = vpop.f32.mrb[0].mxu0
    %v3464 = vadd.f32 0.0, %v3463
    %v3465 = vpop.f32.mrb[0].mxu0
    %v3466 = vadd.f32 0.0, %v3465
    %v3467 = vpop.f32.mrb[0].mxu0
    %v3468 = vadd.f32 0.0, %v3467
    %v3469 = vpop.f32.mrb[0].mxu0
    %v3470 = vadd.f32 0.0, %v3469
    %3471 = vdwg.mxu0
    %v3472 = vadd.f32 %v2992, %v3464
    %v3473 = vadd.f32 %v2993, %v3466
    %v3474 = vadd.f32 %v2994, %v3468
    %v3475 = vadd.f32 %v2995, %v3470
    %s3476 = scalar_lea.vmem %s3, 1024
    %v3477 = vld [vmem:[%s3476] sm:$0xff]
    %v3478 = vld [vmem:[%s3476 + $0x8] sm:$0xff]
    %v3479 = vld [vmem:[%s3476 + $0x10] sm:$0xff]
    %v3480 = vld [vmem:[%s3476 + $0x18] sm:$0xff]
    %v3481 = vld [vmem:[%s3476 + $0x20] sm:$0xff]
    %v3482 = vld [vmem:[%s3476 + $0x28] sm:$0xff]
    %v3483 = vld [vmem:[%s3476 + $0x30] sm:$0xff]
    %v3484 = vld [vmem:[%s3476 + $0x38] sm:$0xff]
    %v3485 = vld [vmem:[%s3476 + $0x40] sm:$0xff]
    %v3486 = vld [vmem:[%s3476 + $0x48] sm:$0xff]
    %v3487 = vld [vmem:[%s3476 + $0x50] sm:$0xff]
    %v3488 = vld [vmem:[%s3476 + $0x58] sm:$0xff]
    %v3489 = vld [vmem:[%s3476 + $0x60] sm:$0xff]
    %v3490 = vld [vmem:[%s3476 + $0x68] sm:$0xff]
    %v3491 = vld [vmem:[%s3476 + $0x70] sm:$0xff]
    %v3492 = vld [vmem:[%s3476 + $0x78] sm:$0xff]
    %v3493 = vld [vmem:[%s3476 + $0x80] sm:$0xff]
    %v3494 = vld [vmem:[%s3476 + $0x88] sm:$0xff]
    %v3495 = vld [vmem:[%s3476 + $0x90] sm:$0xff]
    %v3496 = vld [vmem:[%s3476 + $0x98] sm:$0xff]
    %v3497 = vld [vmem:[%s3476 + $0xa0] sm:$0xff]
    %v3498 = vld [vmem:[%s3476 + $0xa8] sm:$0xff]
    %v3499 = vld [vmem:[%s3476 + $0xb0] sm:$0xff]
    %v3500 = vld [vmem:[%s3476 + $0xb8] sm:$0xff]
    %v3501 = vld [vmem:[%s3476 + $0xc0] sm:$0xff]
    %v3502 = vld [vmem:[%s3476 + $0xc8] sm:$0xff]
    %v3503 = vld [vmem:[%s3476 + $0xd0] sm:$0xff]
    %v3504 = vld [vmem:[%s3476 + $0xd8] sm:$0xff]
    %v3505 = vld [vmem:[%s3476 + $0xe0] sm:$0xff]
    %v3506 = vld [vmem:[%s3476 + $0xe8] sm:$0xff]
    %v3507 = vld [vmem:[%s3476 + $0xf0] sm:$0xff]
    %v3508 = vld [vmem:[%s3476 + $0xf8] sm:$0xff]
    %v3541 = vunpack.c.l.b16 %v3477
    %v3542 = vunpack.c.h.b16 %v3477
    %v3543 = vunpack.c.l.b16 %v3478
    %v3544 = vunpack.c.h.b16 %v3478
    %v3545 = vunpack.c.l.b16 %v3479
    %v3546 = vunpack.c.h.b16 %v3479
    %v3547 = vunpack.c.l.b16 %v3480
    %v3548 = vunpack.c.h.b16 %v3480
    %v3549 = vunpack.c.l.b16 %v3481
    %v3550 = vunpack.c.h.b16 %v3481
    %v3551 = vunpack.c.l.b16 %v3482
    %v3552 = vunpack.c.h.b16 %v3482
    %v3553 = vunpack.c.l.b16 %v3483
    %v3554 = vunpack.c.h.b16 %v3483
    %v3555 = vunpack.c.l.b16 %v3484
    %v3556 = vunpack.c.h.b16 %v3484
    %v3557 = vunpack.c.l.b16 %v3485
    %v3558 = vunpack.c.h.b16 %v3485
    %v3559 = vunpack.c.l.b16 %v3486
    %v3560 = vunpack.c.h.b16 %v3486
    %v3561 = vunpack.c.l.b16 %v3487
    %v3562 = vunpack.c.h.b16 %v3487
    %v3563 = vunpack.c.l.b16 %v3488
    %v3564 = vunpack.c.h.b16 %v3488
    %v3565 = vunpack.c.l.b16 %v3489
    %v3566 = vunpack.c.h.b16 %v3489
    %v3567 = vunpack.c.l.b16 %v3490
    %v3568 = vunpack.c.h.b16 %v3490
    %v3569 = vunpack.c.l.b16 %v3491
    %v3570 = vunpack.c.h.b16 %v3491
    %v3571 = vunpack.c.l.b16 %v3492
    %v3572 = vunpack.c.h.b16 %v3492
    %v3573 = vunpack.c.l.b16 %v3493
    %v3574 = vunpack.c.h.b16 %v3493
    %v3575 = vunpack.c.l.b16 %v3494
    %v3576 = vunpack.c.h.b16 %v3494
    %v3577 = vunpack.c.l.b16 %v3495
    %v3578 = vunpack.c.h.b16 %v3495
    %v3579 = vunpack.c.l.b16 %v3496
    %v3580 = vunpack.c.h.b16 %v3496
    %v3581 = vunpack.c.l.b16 %v3497
    %v3582 = vunpack.c.h.b16 %v3497
    %v3583 = vunpack.c.l.b16 %v3498
    %v3584 = vunpack.c.h.b16 %v3498
    %v3585 = vunpack.c.l.b16 %v3499
    %v3586 = vunpack.c.h.b16 %v3499
    %v3587 = vunpack.c.l.b16 %v3500
    %v3588 = vunpack.c.h.b16 %v3500
    %v3589 = vunpack.c.l.b16 %v3501
    %v3590 = vunpack.c.h.b16 %v3501
    %v3591 = vunpack.c.l.b16 %v3502
    %v3592 = vunpack.c.h.b16 %v3502
    %v3593 = vunpack.c.l.b16 %v3503
    %v3594 = vunpack.c.h.b16 %v3503
    %v3595 = vunpack.c.l.b16 %v3504
    %v3596 = vunpack.c.h.b16 %v3504
    %v3597 = vunpack.c.l.b16 %v3505
    %v3598 = vunpack.c.h.b16 %v3505
    %v3599 = vunpack.c.l.b16 %v3506
    %v3600 = vunpack.c.h.b16 %v3506
    %v3601 = vunpack.c.l.b16 %v3507
    %v3602 = vunpack.c.h.b16 %v3507
    %v3603 = vunpack.c.l.b16 %v3508
    %v3604 = vunpack.c.h.b16 %v3508
    %v3605 = vpack.c.b16 %v3543, %v3541
    %v3606 = vpack.c.b16 %v3544, %v3542
    %v3607 = vpack.c.b16 %v3547, %v3545
    %v3608 = vpack.c.b16 %v3548, %v3546
    %v3609 = vpack.c.b16 %v3551, %v3549
    %v3610 = vpack.c.b16 %v3552, %v3550
    %v3611 = vpack.c.b16 %v3555, %v3553
    %v3612 = vpack.c.b16 %v3556, %v3554
    %v3613 = vpack.c.b16 %v3559, %v3557
    %v3614 = vpack.c.b16 %v3560, %v3558
    %v3615 = vpack.c.b16 %v3563, %v3561
    %v3616 = vpack.c.b16 %v3564, %v3562
    %v3617 = vpack.c.b16 %v3567, %v3565
    %v3618 = vpack.c.b16 %v3568, %v3566
    %v3619 = vpack.c.b16 %v3571, %v3569
    %v3620 = vpack.c.b16 %v3572, %v3570
    %v3621 = vpack.c.b16 %v3575, %v3573
    %v3622 = vpack.c.b16 %v3576, %v3574
    %v3623 = vpack.c.b16 %v3579, %v3577
    %v3624 = vpack.c.b16 %v3580, %v3578
    %v3625 = vpack.c.b16 %v3583, %v3581
    %v3626 = vpack.c.b16 %v3584, %v3582
    %v3627 = vpack.c.b16 %v3587, %v3585
    %v3628 = vpack.c.b16 %v3588, %v3586
    %v3629 = vpack.c.b16 %v3591, %v3589
    %v3630 = vpack.c.b16 %v3592, %v3590
    %v3631 = vpack.c.b16 %v3595, %v3593
    %v3632 = vpack.c.b16 %v3596, %v3594
    %v3633 = vpack.c.b16 %v3599, %v3597
    %v3634 = vpack.c.b16 %v3600, %v3598
    %v3635 = vpack.c.b16 %v3603, %v3601
    %v3636 = vpack.c.b16 %v3604, %v3602
    %3669 = vmatprep.subr.bf16.mxu0 %v3606
    %3670 = vmatpush1.bf16.msra.mxu0 %v3605
    %3671 = vmatprep.subr.bf16.mxu0 %v3608
    %3672 = vmatpush1.bf16.msra.mxu0 %v3607
    %3673 = vmatprep.subr.bf16.mxu0 %v3610
    %3674 = vmatpush1.bf16.msra.mxu0 %v3609
    %3675 = vmatprep.subr.bf16.mxu0 %v3612
    %3676 = vmatpush1.bf16.msra.mxu0 %v3611
    %3677 = vmatprep.subr.bf16.mxu0 %v3614
    %3678 = vmatpush1.bf16.msra.mxu0 %v3613
    %3679 = vmatprep.subr.bf16.mxu0 %v3616
    %3680 = vmatpush1.bf16.msra.mxu0 %v3615
    %3681 = vmatprep.subr.bf16.mxu0 %v3618
    %3682 = vmatpush1.bf16.msra.mxu0 %v3617
    %3683 = vmatprep.subr.bf16.mxu0 %v3620
    %3684 = vmatpush1.bf16.msra.mxu0 %v3619
    %3685 = vmatprep.subr.bf16.mxu0 %v3622
    %3686 = vmatpush1.bf16.msra.mxu0 %v3621
    %3687 = vmatprep.subr.bf16.mxu0 %v3624
    %3688 = vmatpush1.bf16.msra.mxu0 %v3623
    %3689 = vmatprep.subr.bf16.mxu0 %v3626
    %3690 = vmatpush1.bf16.msra.mxu0 %v3625
    %3691 = vmatprep.subr.bf16.mxu0 %v3628
    %3692 = vmatpush1.bf16.msra.mxu0 %v3627
    %3693 = vmatprep.subr.bf16.mxu0 %v3630
    %3694 = vmatpush1.bf16.msra.mxu0 %v3629
    %3695 = vmatprep.subr.bf16.mxu0 %v3632
    %3696 = vmatpush1.bf16.msra.mxu0 %v3631
    %3697 = vmatprep.subr.bf16.mxu0 %v3634
    %3698 = vmatpush1.bf16.msra.mxu0 %v3633
    %3699 = vmatprep.subr.bf16.mxu0 %v3636
    %3700 = vmatpush1.bf16.msra.mxu0 %v3635
    %3701 = vmatprep.mubr.bf16.mxu0 %v1572
    %3702 = vmatmul.mubr.bf16.gmra.mrb[0].mxu0 %v1571
    %v3703 = vpop.f32.mrb[0].mxu0
    %v3704 = vadd.f32 0.0, %v3703
    %v3705 = vpop.f32.mrb[0].mxu0
    %v3706 = vadd.f32 0.0, %v3705
    %v3707 = vpop.f32.mrb[0].mxu0
    %v3708 = vadd.f32 0.0, %v3707
    %v3709 = vpop.f32.mrb[0].mxu0
    %v3710 = vadd.f32 0.0, %v3709
    %3711 = vdwg.mxu0
    %v3712 = vadd.f32 %v3232, %v3704
    %v3713 = vadd.f32 %v3233, %v3706
    %v3714 = vadd.f32 %v3234, %v3708
    %v3715 = vadd.f32 %v3235, %v3710
    %s3716 = scalar_lea.vmem %s3, 2304
    %v3717 = vld [vmem:[%s3716] sm:$0xff]
    %v3718 = vld [vmem:[%s3716 + $0x8] sm:$0xff]
    %v3719 = vld [vmem:[%s3716 + $0x10] sm:$0xff]
    %v3720 = vld [vmem:[%s3716 + $0x18] sm:$0xff]
    %v3721 = vld [vmem:[%s3716 + $0x20] sm:$0xff]
    %v3722 = vld [vmem:[%s3716 + $0x28] sm:$0xff]
    %v3723 = vld [vmem:[%s3716 + $0x30] sm:$0xff]
    %v3724 = vld [vmem:[%s3716 + $0x38] sm:$0xff]
    %v3725 = vld [vmem:[%s3716 + $0x40] sm:$0xff]
    %v3726 = vld [vmem:[%s3716 + $0x48] sm:$0xff]
    %v3727 = vld [vmem:[%s3716 + $0x50] sm:$0xff]
    %v3728 = vld [vmem:[%s3716 + $0x58] sm:$0xff]
    %v3729 = vld [vmem:[%s3716 + $0x60] sm:$0xff]
    %v3730 = vld [vmem:[%s3716 + $0x68] sm:$0xff]
    %v3731 = vld [vmem:[%s3716 + $0x70] sm:$0xff]
    %v3732 = vld [vmem:[%s3716 + $0x78] sm:$0xff]
    %v3733 = vld [vmem:[%s3716 + $0x80] sm:$0xff]
    %v3734 = vld [vmem:[%s3716 + $0x88] sm:$0xff]
    %v3735 = vld [vmem:[%s3716 + $0x90] sm:$0xff]
    %v3736 = vld [vmem:[%s3716 + $0x98] sm:$0xff]
    %v3737 = vld [vmem:[%s3716 + $0xa0] sm:$0xff]
    %v3738 = vld [vmem:[%s3716 + $0xa8] sm:$0xff]
    %v3739 = vld [vmem:[%s3716 + $0xb0] sm:$0xff]
    %v3740 = vld [vmem:[%s3716 + $0xb8] sm:$0xff]
    %v3741 = vld [vmem:[%s3716 + $0xc0] sm:$0xff]
    %v3742 = vld [vmem:[%s3716 + $0xc8] sm:$0xff]
    %v3743 = vld [vmem:[%s3716 + $0xd0] sm:$0xff]
    %v3744 = vld [vmem:[%s3716 + $0xd8] sm:$0xff]
    %v3745 = vld [vmem:[%s3716 + $0xe0] sm:$0xff]
    %v3746 = vld [vmem:[%s3716 + $0xe8] sm:$0xff]
    %v3747 = vld [vmem:[%s3716 + $0xf0] sm:$0xff]
    %v3748 = vld [vmem:[%s3716 + $0xf8] sm:$0xff]
    %v3781 = vunpack.c.l.b16 %v3717
    %v3782 = vunpack.c.h.b16 %v3717
    %v3783 = vunpack.c.l.b16 %v3718
    %v3784 = vunpack.c.h.b16 %v3718
    %v3785 = vunpack.c.l.b16 %v3719
    %v3786 = vunpack.c.h.b16 %v3719
    %v3787 = vunpack.c.l.b16 %v3720
    %v3788 = vunpack.c.h.b16 %v3720
    %v3789 = vunpack.c.l.b16 %v3721
    %v3790 = vunpack.c.h.b16 %v3721
    %v3791 = vunpack.c.l.b16 %v3722
    %v3792 = vunpack.c.h.b16 %v3722
    %v3793 = vunpack.c.l.b16 %v3723
    %v3794 = vunpack.c.h.b16 %v3723
    %v3795 = vunpack.c.l.b16 %v3724
    %v3796 = vunpack.c.h.b16 %v3724
    %v3797 = vunpack.c.l.b16 %v3725
    %v3798 = vunpack.c.h.b16 %v3725
    %v3799 = vunpack.c.l.b16 %v3726
    %v3800 = vunpack.c.h.b16 %v3726
    %v3801 = vunpack.c.l.b16 %v3727
    %v3802 = vunpack.c.h.b16 %v3727
    %v3803 = vunpack.c.l.b16 %v3728
    %v3804 = vunpack.c.h.b16 %v3728
    %v3805 = vunpack.c.l.b16 %v3729
    %v3806 = vunpack.c.h.b16 %v3729
    %v3807 = vunpack.c.l.b16 %v3730
    %v3808 = vunpack.c.h.b16 %v3730
    %v3809 = vunpack.c.l.b16 %v3731
    %v3810 = vunpack.c.h.b16 %v3731
    %v3811 = vunpack.c.l.b16 %v3732
    %v3812 = vunpack.c.h.b16 %v3732
    %v3813 = vunpack.c.l.b16 %v3733
    %v3814 = vunpack.c.h.b16 %v3733
    %v3815 = vunpack.c.l.b16 %v3734
    %v3816 = vunpack.c.h.b16 %v3734
    %v3817 = vunpack.c.l.b16 %v3735
    %v3818 = vunpack.c.h.b16 %v3735
    %v3819 = vunpack.c.l.b16 %v3736
    %v3820 = vunpack.c.h.b16 %v3736
    %v3821 = vunpack.c.l.b16 %v3737
    %v3822 = vunpack.c.h.b16 %v3737
    %v3823 = vunpack.c.l.b16 %v3738
    %v3824 = vunpack.c.h.b16 %v3738
    %v3825 = vunpack.c.l.b16 %v3739
    %v3826 = vunpack.c.h.b16 %v3739
    %v3827 = vunpack.c.l.b16 %v3740
    %v3828 = vunpack.c.h.b16 %v3740
    %v3829 = vunpack.c.l.b16 %v3741
    %v3830 = vunpack.c.h.b16 %v3741
    %v3831 = vunpack.c.l.b16 %v3742
    %v3832 = vunpack.c.h.b16 %v3742
    %v3833 = vunpack.c.l.b16 %v3743
    %v3834 = vunpack.c.h.b16 %v3743
    %v3835 = vunpack.c.l.b16 %v3744
    %v3836 = vunpack.c.h.b16 %v3744
    %v3837 = vunpack.c.l.b16 %v3745
    %v3838 = vunpack.c.h.b16 %v3745
    %v3839 = vunpack.c.l.b16 %v3746
    %v3840 = vunpack.c.h.b16 %v3746
    %v3841 = vunpack.c.l.b16 %v3747
    %v3842 = vunpack.c.h.b16 %v3747
    %v3843 = vunpack.c.l.b16 %v3748
    %v3844 = vunpack.c.h.b16 %v3748
    %v3845 = vpack.c.b16 %v3783, %v3781
    %v3846 = vpack.c.b16 %v3784, %v3782
    %v3847 = vpack.c.b16 %v3787, %v3785
    %v3848 = vpack.c.b16 %v3788, %v3786
    %v3849 = vpack.c.b16 %v3791, %v3789
    %v3850 = vpack.c.b16 %v3792, %v3790
    %v3851 = vpack.c.b16 %v3795, %v3793
    %v3852 = vpack.c.b16 %v3796, %v3794
    %v3853 = vpack.c.b16 %v3799, %v3797
    %v3854 = vpack.c.b16 %v3800, %v3798
    %v3855 = vpack.c.b16 %v3803, %v3801
    %v3856 = vpack.c.b16 %v3804, %v3802
    %v3857 = vpack.c.b16 %v3807, %v3805
    %v3858 = vpack.c.b16 %v3808, %v3806
    %v3859 = vpack.c.b16 %v3811, %v3809
    %v3860 = vpack.c.b16 %v3812, %v3810
    %v3861 = vpack.c.b16 %v3815, %v3813
    %v3862 = vpack.c.b16 %v3816, %v3814
    %v3863 = vpack.c.b16 %v3819, %v3817
    %v3864 = vpack.c.b16 %v3820, %v3818
    %v3865 = vpack.c.b16 %v3823, %v3821
    %v3866 = vpack.c.b16 %v3824, %v3822
    %v3867 = vpack.c.b16 %v3827, %v3825
    %v3868 = vpack.c.b16 %v3828, %v3826
    %v3869 = vpack.c.b16 %v3831, %v3829
    %v3870 = vpack.c.b16 %v3832, %v3830
    %v3871 = vpack.c.b16 %v3835, %v3833
    %v3872 = vpack.c.b16 %v3836, %v3834
    %v3873 = vpack.c.b16 %v3839, %v3837
    %v3874 = vpack.c.b16 %v3840, %v3838
    %v3875 = vpack.c.b16 %v3843, %v3841
    %v3876 = vpack.c.b16 %v3844, %v3842
    %3909 = vmatprep.subr.bf16.mxu0 %v3846
    %3910 = vmatpush1.bf16.msra.mxu0 %v3845
    %3911 = vmatprep.subr.bf16.mxu0 %v3848
    %3912 = vmatpush1.bf16.msra.mxu0 %v3847
    %3913 = vmatprep.subr.bf16.mxu0 %v3850
    %3914 = vmatpush1.bf16.msra.mxu0 %v3849
    %3915 = vmatprep.subr.bf16.mxu0 %v3852
    %3916 = vmatpush1.bf16.msra.mxu0 %v3851
    %3917 = vmatprep.subr.bf16.mxu0 %v3854
    %3918 = vmatpush1.bf16.msra.mxu0 %v3853
    %3919 = vmatprep.subr.bf16.mxu0 %v3856
    %3920 = vmatpush1.bf16.msra.mxu0 %v3855
    %3921 = vmatprep.subr.bf16.mxu0 %v3858
    %3922 = vmatpush1.bf16.msra.mxu0 %v3857
    %3923 = vmatprep.subr.bf16.mxu0 %v3860
    %3924 = vmatpush1.bf16.msra.mxu0 %v3859
    %3925 = vmatprep.subr.bf16.mxu0 %v3862
    %3926 = vmatpush1.bf16.msra.mxu0 %v3861
    %3927 = vmatprep.subr.bf16.mxu0 %v3864
    %3928 = vmatpush1.bf16.msra.mxu0 %v3863
    %3929 = vmatprep.subr.bf16.mxu0 %v3866
    %3930 = vmatpush1.bf16.msra.mxu0 %v3865
    %3931 = vmatprep.subr.bf16.mxu0 %v3868
    %3932 = vmatpush1.bf16.msra.mxu0 %v3867
    %3933 = vmatprep.subr.bf16.mxu0 %v3870
    %3934 = vmatpush1.bf16.msra.mxu0 %v3869
    %3935 = vmatprep.subr.bf16.mxu0 %v3872
    %3936 = vmatpush1.bf16.msra.mxu0 %v3871
    %3937 = vmatprep.subr.bf16.mxu0 %v3874
    %3938 = vmatpush1.bf16.msra.mxu0 %v3873
    %3939 = vmatprep.subr.bf16.mxu0 %v3876
    %3940 = vmatpush1.bf16.msra.mxu0 %v3875
    %3941 = vmatprep.mubr.bf16.mxu0 %v1572
    %3942 = vmatmul.mubr.bf16.gmra.mrb[0].mxu0 %v1571
    %v3943 = vpop.f32.mrb[0].mxu0
    %v3944 = vadd.f32 0.0, %v3943
    %v3945 = vpop.f32.mrb[0].mxu0
    %v3946 = vadd.f32 0.0, %v3945
    %v3947 = vpop.f32.mrb[0].mxu0
    %v3948 = vadd.f32 0.0, %v3947
    %v3949 = vpop.f32.mrb[0].mxu0
    %v3950 = vadd.f32 0.0, %v3949
    %3951 = vdwg.mxu0
    %v3952 = vadd.f32 %v3472, %v3944
    %v3953 = vadd.f32 %v3473, %v3946
    %v3954 = vadd.f32 %v3474, %v3948
    %v3955 = vadd.f32 %v3475, %v3950
    %v3956 = vmax.f32 %v3712, %v3952
    %v3957 = vmax.f32 %v3713, %v3953
    %v3958 = vmax.f32 %v3714, %v3954
    %v3959 = vmax.f32 %v3715, %v3955
    %v3960 = vmax.f32 %v3956, %v3957
    %v3961 = vmax.f32 %v3958, %v3959
    %v3962 = vld [vmem:[%s4] sm:$0x1]
    %v3964 = vlaneseq
    %v3965 = vshrl.u32 %v3964, 7
    %v3966 = vsub.s32 0, %v3965
    %v3967 = vrot.slane %v3962, %v3966
    %v3969 = vadd.f32 %v3960, %v3967
    %v3970 = vadd.f32 %v3961, %v3967
    %v3971 = vmax.f32 %v3969, 0.0
    %v3972 = vmax.f32 %v3970, 0.0
    %v3974 = vrot.slane %v3971, 1
    %v3976 = vrot.slane %v3971, 2
    %v3978 = vrot.slane %v3971, 3
    %v3980 = vrot.slane %v3971, 4
    %v3983 = vrot.slane %v3972, 3
    %v3984 = vrot.slane %v3972, 4
    %v3985 = vrot.slane %v3974, 4
    %v3986 = vrot.slane %v3976, 4
    %v3987 = vrot.slane %v3983, 4
    %v3988 = vrot.slane %v3984, 4
    %vm3993 = vcmask 1040384
    %v3994 = vsel %vm3993, %v3971, %v3980
    %v3995 = vsel %vm3993, %v3974, %v3985
    %v3996 = vsel %vm3993, %v3976, %v3986
    %v3997 = vsel %vm3993, %v3978, %v3987
    %v3998 = vsel %vm3993, %v3980, %v3988
    %v3999 = vpack.c.bf16 %v3994, %v3994
    %v4000 = vpack.c.bf16 %v3995, %v3995
    %v4001 = vpack.c.bf16 %v3996, %v3996
    %v4002 = vpack.c.bf16 %v3997, %v3997
    %v4003 = vpack.c.bf16 %v3998, %v3998
    %v4004 = vld [vmem:[%s5] sm:$0xf]
    %v4005 = vld [vmem:[%s5 + $0x4] sm:$0xf]
    %v4006 = vld [vmem:[%s5 + $0x8] sm:$0xf]
    %v4007 = vld [vmem:[%s5 + $0xc] sm:$0xf]
    %v4008 = vld [vmem:[%s5 + $0x10] sm:$0xf]
    %v4009 = vld [vmem:[%s5 + $0x14] sm:$0xf]
    %v4010 = vld [vmem:[%s5 + $0x18] sm:$0xf]
    %v4011 = vld [vmem:[%s5 + $0x1c] sm:$0xf]
    %v4012 = vld [vmem:[%s5 + $0x20] sm:$0xf]
    %v4013 = vld [vmem:[%s5 + $0x24] sm:$0xf]
    %v4014 = vld [vmem:[%s5 + $0x28] sm:$0xf]
    %v4015 = vld [vmem:[%s5 + $0x2c] sm:$0xf]
    %v4016 = vld [vmem:[%s5 + $0x30] sm:$0xf]
    %v4017 = vld [vmem:[%s5 + $0x34] sm:$0xf]
    %v4018 = vld [vmem:[%s5 + $0x38] sm:$0xf]
    %v4019 = vld [vmem:[%s5 + $0x3c] sm:$0xf]
    %v4020 = vld [vmem:[%s5 + $0x40] sm:$0xf]
    %v4021 = vld [vmem:[%s5 + $0x44] sm:$0xf]
    %v4022 = vld [vmem:[%s5 + $0x48] sm:$0xf]
    %v4023 = vld [vmem:[%s5 + $0x4c] sm:$0xf]
    %v4024 = vld [vmem:[%s5 + $0x50] sm:$0xf]
    %v4025 = vld [vmem:[%s5 + $0x54] sm:$0xf]
    %v4026 = vld [vmem:[%s5 + $0x58] sm:$0xf]
    %v4027 = vld [vmem:[%s5 + $0x5c] sm:$0xf]
    %v4028 = vld [vmem:[%s5 + $0x60] sm:$0xf]
    %v4029 = vld [vmem:[%s5 + $0x64] sm:$0xf]
    %v4030 = vld [vmem:[%s5 + $0x68] sm:$0xf]
    %v4031 = vld [vmem:[%s5 + $0x6c] sm:$0xf]
    %v4032 = vld [vmem:[%s5 + $0x70] sm:$0xf]
    %v4033 = vld [vmem:[%s5 + $0x74] sm:$0xf]
    %v4034 = vld [vmem:[%s5 + $0x78] sm:$0xf]
    %v4035 = vld [vmem:[%s5 + $0x7c] sm:$0xf]
    %v4036 = vld [vmem:[%s5 + $0x80] sm:$0xf]
    %v4037 = vld [vmem:[%s5 + $0x84] sm:$0xf]
    %v4038 = vld [vmem:[%s5 + $0x88] sm:$0xf]
    %v4039 = vld [vmem:[%s5 + $0x8c] sm:$0xf]
    %v4040 = vld [vmem:[%s5 + $0x90] sm:$0xf]
    %v4041 = vld [vmem:[%s5 + $0x94] sm:$0xf]
    %v4042 = vld [vmem:[%s5 + $0x98] sm:$0xf]
    %v4043 = vld [vmem:[%s5 + $0x9c] sm:$0xf]
    %v4044 = vld [vmem:[%s5 + $0xa0] sm:$0xf]
    %v4045 = vld [vmem:[%s5 + $0xa4] sm:$0xf]
    %v4046 = vld [vmem:[%s5 + $0xa8] sm:$0xf]
    %v4047 = vld [vmem:[%s5 + $0xac] sm:$0xf]
    %v4048 = vld [vmem:[%s5 + $0xb0] sm:$0xf]
    %v4049 = vld [vmem:[%s5 + $0xb4] sm:$0xf]
    %v4050 = vld [vmem:[%s5 + $0xb8] sm:$0xf]
    %v4051 = vld [vmem:[%s5 + $0xbc] sm:$0xf]
    %v4052 = vld [vmem:[%s5 + $0xc0] sm:$0xf]
    %v4053 = vld [vmem:[%s5 + $0xc4] sm:$0xf]
    %v4054 = vld [vmem:[%s5 + $0xc8] sm:$0xf]
    %v4055 = vld [vmem:[%s5 + $0xcc] sm:$0xf]
    %v4056 = vld [vmem:[%s5 + $0xd0] sm:$0xf]
    %v4057 = vld [vmem:[%s5 + $0xd4] sm:$0xf]
    %v4058 = vld [vmem:[%s5 + $0xd8] sm:$0xf]
    %v4059 = vld [vmem:[%s5 + $0xdc] sm:$0xf]
    %v4060 = vld [vmem:[%s5 + $0xe0] sm:$0xf]
    %v4061 = vld [vmem:[%s5 + $0xe4] sm:$0xf]
    %v4062 = vld [vmem:[%s5 + $0xe8] sm:$0xf]
    %v4063 = vld [vmem:[%s5 + $0xec] sm:$0xf]
    %v4064 = vld [vmem:[%s5 + $0xf0] sm:$0xf]
    %v4065 = vld [vmem:[%s5 + $0xf4] sm:$0xf]
    %v4066 = vld [vmem:[%s5 + $0xf8] sm:$0xf]
    %v4067 = vld [vmem:[%s5 + $0xfc] sm:$0xf]
    %v4068 = vld [vmem:[%s5 + $0x100] sm:$0xf]
    %v4069 = vld [vmem:[%s5 + $0x104] sm:$0xf]
    %v4070 = vld [vmem:[%s5 + $0x108] sm:$0xf]
    %v4071 = vld [vmem:[%s5 + $0x10c] sm:$0xf]
    %v4072 = vld [vmem:[%s5 + $0x110] sm:$0xf]
    %v4073 = vld [vmem:[%s5 + $0x114] sm:$0xf]
    %v4074 = vld [vmem:[%s5 + $0x118] sm:$0xf]
    %v4075 = vld [vmem:[%s5 + $0x11c] sm:$0xf]
    %v4076 = vld [vmem:[%s5 + $0x120] sm:$0xf]
    %v4077 = vld [vmem:[%s5 + $0x124] sm:$0xf]
    %v4078 = vld [vmem:[%s5 + $0x128] sm:$0xf]
    %v4079 = vld [vmem:[%s5 + $0x12c] sm:$0xf]
    %v4080 = vld [vmem:[%s5 + $0x130] sm:$0xf]
    %v4081 = vld [vmem:[%s5 + $0x134] sm:$0xf]
    %v4082 = vld [vmem:[%s5 + $0x138] sm:$0xf]
    %v4083 = vld [vmem:[%s5 + $0x13c] sm:$0xf]
    %v4084 = vld [vmem:[%s6] sm:$0x1]
    %v4086 = vlaneseq
    %v4087 = vshrl.u32 %v4086, 7
    %v4088 = vsub.s32 0, %v4087
    %v4089 = vrot.slane %v4084, %v4088
    %v4171 = vunpack.c.l.b16 %v4004
    %v4172 = vunpack.c.l.b16 %v4005
    %v4173 = vunpack.c.l.b16 %v4006
    %v4174 = vunpack.c.l.b16 %v4007
    %v4175 = vunpack.c.l.b16 %v4008
    %v4176 = vunpack.c.l.b16 %v4009
    %v4177 = vunpack.c.l.b16 %v4010
    %v4178 = vunpack.c.l.b16 %v4011
    %v4179 = vunpack.c.l.b16 %v4012
    %v4180 = vunpack.c.l.b16 %v4013
    %v4181 = vunpack.c.l.b16 %v4014
    %v4182 = vunpack.c.l.b16 %v4015
    %v4183 = vunpack.c.l.b16 %v4016
    %v4184 = vunpack.c.l.b16 %v4017
    %v4185 = vunpack.c.l.b16 %v4018
    %v4186 = vunpack.c.l.b16 %v4019
    %v4187 = vunpack.c.l.b16 %v4020
    %v4188 = vunpack.c.l.b16 %v4021
    %v4189 = vunpack.c.l.b16 %v4022
    %v4190 = vunpack.c.l.b16 %v4023
    %v4191 = vunpack.c.l.b16 %v4024
    %v4192 = vunpack.c.l.b16 %v4025
    %v4193 = vunpack.c.l.b16 %v4026
    %v4194 = vunpack.c.l.b16 %v4027
    %v4195 = vunpack.c.l.b16 %v4028
    %v4196 = vunpack.c.l.b16 %v4029
    %v4197 = vunpack.c.l.b16 %v4030
    %v4198 = vunpack.c.l.b16 %v4031
    %v4199 = vunpack.c.l.b16 %v4032
    %v4200 = vunpack.c.l.b16 %v4033
    %v4201 = vunpack.c.l.b16 %v4034
    %v4202 = vunpack.c.l.b16 %v4035
    %v4203 = vunpack.c.l.b16 %v4036
    %v4204 = vunpack.c.l.b16 %v4037
    %v4205 = vunpack.c.l.b16 %v4038
    %v4206 = vunpack.c.l.b16 %v4039
    %v4207 = vunpack.c.l.b16 %v4040
    %v4208 = vunpack.c.l.b16 %v4041
    %v4209 = vunpack.c.l.b16 %v4042
    %v4210 = vunpack.c.l.b16 %v4043
    %v4211 = vunpack.c.l.b16 %v4044
    %v4212 = vunpack.c.l.b16 %v4045
    %v4213 = vunpack.c.l.b16 %v4046
    %v4214 = vunpack.c.l.b16 %v4047
    %v4215 = vunpack.c.l.b16 %v4048
    %v4216 = vunpack.c.l.b16 %v4049
    %v4217 = vunpack.c.l.b16 %v4050
    %v4218 = vunpack.c.l.b16 %v4051
    %v4219 = vunpack.c.l.b16 %v4052
    %v4220 = vunpack.c.l.b16 %v4053
    %v4221 = vunpack.c.l.b16 %v4054
    %v4222 = vunpack.c.l.b16 %v4055
    %v4223 = vunpack.c.l.b16 %v4056
    %v4224 = vunpack.c.l.b16 %v4057
    %v4225 = vunpack.c.l.b16 %v4058
    %v4226 = vunpack.c.l.b16 %v4059
    %v4227 = vunpack.c.l.b16 %v4060
    %v4228 = vunpack.c.l.b16 %v4061
    %v4229 = vunpack.c.l.b16 %v4062
    %v4230 = vunpack.c.l.b16 %v4063
    %v4231 = vunpack.c.l.b16 %v4064
    %v4232 = vunpack.c.l.b16 %v4065
    %v4233 = vunpack.c.l.b16 %v4066
    %v4234 = vunpack.c.l.b16 %v4067
    %v4235 = vunpack.c.l.b16 %v4068
    %v4236 = vunpack.c.l.b16 %v4069
    %v4237 = vunpack.c.l.b16 %v4070
    %v4238 = vunpack.c.l.b16 %v4071
    %v4239 = vunpack.c.l.b16 %v4072
    %v4240 = vunpack.c.l.b16 %v4073
    %v4241 = vunpack.c.l.b16 %v4074
    %v4242 = vunpack.c.l.b16 %v4075
    %v4243 = vunpack.c.l.b16 %v4076
    %v4244 = vunpack.c.l.b16 %v4077
    %v4245 = vunpack.c.l.b16 %v4078
    %v4246 = vunpack.c.l.b16 %v4079
    %v4247 = vunpack.c.l.b16 %v4080
    %v4248 = vunpack.c.l.b16 %v4081
    %v4249 = vunpack.c.l.b16 %v4082
    %v4250 = vunpack.c.l.b16 %v4083
    %v4251 = vpack.c.b16 %v4172, %v4171
    %v4252 = vpack.c.b16 %v4174, %v4173
    %v4253 = vpack.c.b16 %v4176, %v4175
    %v4254 = vpack.c.b16 %v4178, %v4177
    %v4255 = vpack.c.b16 %v4180, %v4179
    %v4256 = vpack.c.b16 %v4182, %v4181
    %v4257 = vpack.c.b16 %v4184, %v4183
    %v4258 = vpack.c.b16 %v4186, %v4185
    %v4259 = vpack.c.b16 %v4188, %v4187
    %v4260 = vpack.c.b16 %v4190, %v4189
    %v4261 = vpack.c.b16 %v4192, %v4191
    %v4262 = vpack.c.b16 %v4194, %v4193
    %v4263 = vpack.c.b16 %v4196, %v4195
    %v4264 = vpack.c.b16 %v4198, %v4197
    %v4265 = vpack.c.b16 %v4200, %v4199
    %v4266 = vpack.c.b16 %v4202, %v4201
    %v4267 = vpack.c.b16 %v4204, %v4203
    %v4268 = vpack.c.b16 %v4206, %v4205
    %v4269 = vpack.c.b16 %v4208, %v4207
    %v4270 = vpack.c.b16 %v4210, %v4209
    %v4271 = vpack.c.b16 %v4212, %v4211
    %v4272 = vpack.c.b16 %v4214, %v4213
    %v4273 = vpack.c.b16 %v4216, %v4215
    %v4274 = vpack.c.b16 %v4218, %v4217
    %v4275 = vpack.c.b16 %v4220, %v4219
    %v4276 = vpack.c.b16 %v4222, %v4221
    %v4277 = vpack.c.b16 %v4224, %v4223
    %v4278 = vpack.c.b16 %v4226, %v4225
    %v4279 = vpack.c.b16 %v4228, %v4227
    %v4280 = vpack.c.b16 %v4230, %v4229
    %v4281 = vpack.c.b16 %v4232, %v4231
    %v4282 = vpack.c.b16 %v4234, %v4233
    %v4283 = vpack.c.b16 %v4236, %v4235
    %v4284 = vpack.c.b16 %v4238, %v4237
    %v4285 = vpack.c.b16 %v4240, %v4239
    %v4286 = vpack.c.b16 %v4242, %v4241
    %v4287 = vpack.c.b16 %v4244, %v4243
    %v4288 = vpack.c.b16 %v4246, %v4245
    %v4289 = vpack.c.b16 %v4248, %v4247
    %v4290 = vpack.c.b16 %v4250, %v4249
    %4331 = vmatprep.subr.bf16.mxu0 0
    %4332 = vmatpush1.bf16.msra.mxu0 %v4251
    %4333 = vmatprep.subr.bf16.mxu0 0
    %4334 = vmatpush1.bf16.msra.mxu0 %v4252
    %4335 = vmatprep.subr.bf16.mxu0 0
    %4336 = vmatpush1.bf16.msra.mxu0 %v4253
    %4337 = vmatprep.subr.bf16.mxu0 0
    %4338 = vmatpush1.bf16.msra.mxu0 %v4254
    %4339 = vmatprep.subr.bf16.mxu0 0
    %4340 = vmatpush1.bf16.msra.mxu0 %v4255
    %4341 = vmatprep.subr.bf16.mxu0 0
    %4342 = vmatpush1.bf16.msra.mxu0 %v4256
    %4343 = vmatprep.subr.bf16.mxu0 0
    %4344 = vmatpush1.bf16.msra.mxu0 %v4257
    %4345 = vmatprep.subr.bf16.mxu0 0
    %4346 = vmatpush1.bf16.msra.mxu0 %v4258
    %4347 = vmatprep.subr.bf16.mxu0 0
    %4348 = vmatpush1.bf16.msra.mxu0 %v4259
    %4349 = vmatprep.subr.bf16.mxu0 0
    %4350 = vmatpush1.bf16.msra.mxu0 %v4260
    %4351 = vmatprep.subr.bf16.mxu0 0
    %4352 = vmatpush1.bf16.msra.mxu0 %v4261
    %4353 = vmatprep.subr.bf16.mxu0 0
    %4354 = vmatpush1.bf16.msra.mxu0 %v4262
    %4355 = vmatprep.subr.bf16.mxu0 0
    %4356 = vmatpush1.bf16.msra.mxu0 %v4263
    %4357 = vmatprep.subr.bf16.mxu0 0
    %4358 = vmatpush1.bf16.msra.mxu0 %v4264
    %4359 = vmatprep.subr.bf16.mxu0 0
    %4360 = vmatpush1.bf16.msra.mxu0 %v4265
    %4361 = vmatprep.subr.bf16.mxu0 0
    %4362 = vmatpush1.bf16.msra.mxu0 %v4266
    %4363 = vmatprep.mubr.bf16.mxu0 %v4000
    %4364 = vmatmul.mubr.bf16.gmra.mrb[0].mxu0 %v3999
    %v4365 = vpop.f32.mrb[0].mxu0
    %v4366 = vadd.f32 %v4089, %v4365
    %v4367 = vpop.f32.mrb[0].mxu0
    %v4368 = vpop.f32.mrb[0].mxu0
    %v4369 = vpop.f32.mrb[0].mxu0
    %4370 = vdwg.mxu0
    %4371 = vmatprep.subr.bf16.mxu0 0
    %4372 = vmatpush1.bf16.msra.mxu0 %v4267
    %4373 = vmatprep.subr.bf16.mxu0 0
    %4374 = vmatpush1.bf16.msra.mxu0 %v4268
    %4375 = vmatprep.subr.bf16.mxu0 0
    %4376 = vmatpush1.bf16.msra.mxu0 %v4269
    %4377 = vmatprep.subr.bf16.mxu0 0
    %4378 = vmatpush1.bf16.msra.mxu0 %v4270
    %4379 = vmatprep.subr.bf16.mxu0 0
    %4380 = vmatpush1.bf16.msra.mxu0 %v4271
    %4381 = vmatprep.subr.bf16.mxu0 0
    %4382 = vmatpush1.bf16.msra.mxu0 %v4272
    %4383 = vmatprep.subr.bf16.mxu0 0
    %4384 = vmatpush1.bf16.msra.mxu0 %v4273
    %4385 = vmatprep.subr.bf16.mxu0 0
    %4386 = vmatpush1.bf16.msra.mxu0 %v4274
    %4387 = vmatprep.subr.bf16.mxu0 0
    %4388 = vmatpush1.bf16.msra.mxu0 %v4275
    %4389 = vmatprep.subr.bf16.mxu0 0
    %4390 = vmatpush1.bf16.msra.mxu0 %v4276
    %4391 = vmatprep.subr.bf16.mxu0 0
    %4392 = vmatpush1.bf16.msra.mxu0 %v4277
    %4393 = vmatprep.subr.bf16.mxu0 0
    %4394 = vmatpush1.bf16.msra.mxu0 %v4278
    %4395 = vmatprep.subr.bf16.mxu0 0
    %4396 = vmatpush1.bf16.msra.mxu0 %v4279
    %4397 = vmatprep.subr.bf16.mxu0 0
    %4398 = vmatpush1.bf16.msra.mxu0 %v4280
    %4399 = vmatprep.subr.bf16.mxu0 0
    %4400 = vmatpush1.bf16.msra.mxu0 %v4281
    %4401 = vmatprep.subr.bf16.mxu0 0
    %4402 = vmatpush1.bf16.msra.mxu0 %v4282
    %4403 = vmatprep.mubr.bf16.mxu0 %v4002
    %4404 = vmatmul.mubr.bf16.gmra.mrb[0].mxu0 %v4001
    %v4405 = vpop.f32.mrb[0].mxu0
    %v4406 = vadd.f32 %v4366, %v4405
    %v4407 = vpop.f32.mrb[0].mxu0
    %v4408 = vpop.f32.mrb[0].mxu0
    %v4409 = vpop.f32.mrb[0].mxu0
    %4410 = vdwg.mxu0
    %4411 = vmatprep.subr.bf16.mxu0 0
    %4412 = vmatpush1.bf16.msra.mxu0 %v4283
    %4413 = vmatprep.subr.bf16.mxu0 0
    %4414 = vmatpush1.bf16.msra.mxu0 %v4284
    %4415 = vmatprep.subr.bf16.mxu0 0
    %4416 = vmatpush1.bf16.msra.mxu0 %v4285
    %4417 = vmatprep.subr.bf16.mxu0 0
    %4418 = vmatpush1.bf16.msra.mxu0 %v4286
    %4419 = vmatprep.subr.bf16.mxu0 0
    %4420 = vmatpush1.bf16.msra.mxu0 %v4287
    %4421 = vmatprep.subr.bf16.mxu0 0
    %4422 = vmatpush1.bf16.msra.mxu0 %v4288
    %4423 = vmatprep.subr.bf16.mxu0 0
    %4424 = vmatpush1.bf16.msra.mxu0 %v4289
    %4425 = vmatprep.subr.bf16.mxu0 0
    %4426 = vmatpush1.bf16.msra.mxu0 %v4290
    %4427 = vmatprep.subr.bf16.mxu0 0
    %4428 = vmatpush1.bf16.msra.mxu0 0
    %4429 = vmatprep.subr.bf16.mxu0 0
    %4430 = vmatpush1.bf16.msra.mxu0 0
    %4431 = vmatprep.subr.bf16.mxu0 0
    %4432 = vmatpush1.bf16.msra.mxu0 0
    %4433 = vmatprep.subr.bf16.mxu0 0
    %4434 = vmatpush1.bf16.msra.mxu0 0
    %4435 = vmatprep.subr.bf16.mxu0 0
    %4436 = vmatpush1.bf16.msra.mxu0 0
    %4437 = vmatprep.subr.bf16.mxu0 0
    %4438 = vmatpush1.bf16.msra.mxu0 0
    %4439 = vmatprep.subr.bf16.mxu0 0
    %4440 = vmatpush1.bf16.msra.mxu0 0
    %4441 = vmatprep.subr.bf16.mxu0 0
    %4442 = vmatpush1.bf16.msra.mxu0 0
    %4443 = vmatprep.mubr.bf16.mxu0 0
    %4444 = vmatmul.mubr.bf16.gmra.mrb[0].mxu0 %v4003
    %v4445 = vpop.f32.mrb[0].mxu0
    %v4446 = vadd.f32 %v4406, %v4445
    %v4447 = vpop.f32.mrb[0].mxu0
    %v4448 = vpop.f32.mrb[0].mxu0
    %v4449 = vpop.f32.mrb[0].mxu0
    %4450 = vdwg.mxu0
    %v4451 = vmax.f32 %v4446, 0.0
    %v4452 = vpack.c.bf16 %v4451, %v4451
    %v4453 = vld [vmem:[%s7] sm:$0xf]
    %v4454 = vld [vmem:[%s8] sm:$0x1]
    %v4456 = vlaneseq
    %v4457 = vshrl.u32 %v4456, 7
    %v4458 = vsub.s32 0, %v4457
    %v4459 = vrot.slane %v4454, %v4458
    %vm4461 = vcmask 64512
    %v4463 = vsel %vm4461, %v4452, 0
    %vm4465 = vcmask 1043456
    %v4467 = vsel %vm4465, %v4453, 0
    %4469 = vmatprep.subr.bf16.mxu0 0
    %4470 = vmatpush1.bf16.msra.mxu0 %v4467
    %4471 = vmatprep.subr.bf16.mxu0 0
    %4472 = vmatpush1.bf16.msra.mxu0 0
    %4473 = vmatprep.subr.bf16.mxu0 0
    %4474 = vmatpush1.bf16.msra.mxu0 0
    %4475 = vmatprep.subr.bf16.mxu0 0
    %4476 = vmatpush1.bf16.msra.mxu0 0
    %4477 = vmatprep.subr.bf16.mxu0 0
    %4478 = vmatpush1.bf16.msra.mxu0 0
    %4479 = vmatprep.subr.bf16.mxu0 0
    %4480 = vmatpush1.bf16.msra.mxu0 0
    %4481 = vmatprep.subr.bf16.mxu0 0
    %4482 = vmatpush1.bf16.msra.mxu0 0
    %4483 = vmatprep.subr.bf16.mxu0 0
    %4484 = vmatpush1.bf16.msra.mxu0 0
    %4485 = vmatprep.subr.bf16.mxu0 0
    %4486 = vmatpush1.bf16.msra.mxu0 0
    %4487 = vmatprep.subr.bf16.mxu0 0
    %4488 = vmatpush1.bf16.msra.mxu0 0
    %4489 = vmatprep.subr.bf16.mxu0 0
    %4490 = vmatpush1.bf16.msra.mxu0 0
    %4491 = vmatprep.subr.bf16.mxu0 0
    %4492 = vmatpush1.bf16.msra.mxu0 0
    %4493 = vmatprep.subr.bf16.mxu0 0
    %4494 = vmatpush1.bf16.msra.mxu0 0
    %4495 = vmatprep.subr.bf16.mxu0 0
    %4496 = vmatpush1.bf16.msra.mxu0 0
    %4497 = vmatprep.subr.bf16.mxu0 0
    %4498 = vmatpush1.bf16.msra.mxu0 0
    %4499 = vmatprep.subr.bf16.mxu0 0
    %4500 = vmatpush1.bf16.msra.mxu0 0
    %4501 = vmatprep.mubr.bf16.mxu0 0
    %4502 = vmatmul.mubr.bf16.gmra.mrb[0].mxu0 %v4463
    %v4503 = vpop.f32.mrb[0].mxu0
    %v4504 = vadd.f32 %v4459, %v4503
    %v4505 = vpop.f32.mrb[0].mxu0
    %v4506 = vpop.f32.mrb[0].mxu0
    %v4507 = vpop.f32.mrb[0].mxu0
    %4508 = vdwg.mxu0
    %v4509 = vmax.f32 %v4504, 0.0
    %v4510 = vpack.c.bf16 %v4509, %v4509
    %v4511 = vld [vmem:[%s9] sm:$0xf]
    %v4512 = vld [vmem:[%s9 + $0x4] sm:$0xf]
    %v4513 = vld [vmem:[%s10] sm:$0x1]
    %v4515 = vlaneseq
    %v4516 = vshrl.u32 %v4515, 7
    %v4517 = vsub.s32 0, %v4516
    %v4518 = vrot.slane %v4513, %v4517
    %v4522 = vunpack.c.l.b16 %v4511
    %v4523 = vunpack.c.l.b16 %v4512
    %v4524 = vpack.c.b16 %v4523, %v4522
    %vm4526 = vcmask 130048
    %v4528 = vsel %vm4526, %v4510, 0
    %4530 = vmatprep.subr.bf16.mxu0 0
    %4531 = vmatpush1.bf16.msra.mxu0 %v4524
    %4532 = vmatprep.subr.bf16.mxu0 0
    %4533 = vmatpush1.bf16.msra.mxu0 0
    %4534 = vmatprep.subr.bf16.mxu0 0
    %4535 = vmatpush1.bf16.msra.mxu0 0
    %4536 = vmatprep.subr.bf16.mxu0 0
    %4537 = vmatpush1.bf16.msra.mxu0 0
    %4538 = vmatprep.subr.bf16.mxu0 0
    %4539 = vmatpush1.bf16.msra.mxu0 0
    %4540 = vmatprep.subr.bf16.mxu0 0
    %4541 = vmatpush1.bf16.msra.mxu0 0
    %4542 = vmatprep.subr.bf16.mxu0 0
    %4543 = vmatpush1.bf16.msra.mxu0 0
    %4544 = vmatprep.subr.bf16.mxu0 0
    %4545 = vmatpush1.bf16.msra.mxu0 0
    %4546 = vmatprep.subr.bf16.mxu0 0
    %4547 = vmatpush1.bf16.msra.mxu0 0
    %4548 = vmatprep.subr.bf16.mxu0 0
    %4549 = vmatpush1.bf16.msra.mxu0 0
    %4550 = vmatprep.subr.bf16.mxu0 0
    %4551 = vmatpush1.bf16.msra.mxu0 0
    %4552 = vmatprep.subr.bf16.mxu0 0
    %4553 = vmatpush1.bf16.msra.mxu0 0
    %4554 = vmatprep.subr.bf16.mxu0 0
    %4555 = vmatpush1.bf16.msra.mxu0 0
    %4556 = vmatprep.subr.bf16.mxu0 0
    %4557 = vmatpush1.bf16.msra.mxu0 0
    %4558 = vmatprep.subr.bf16.mxu0 0
    %4559 = vmatpush1.bf16.msra.mxu0 0
    %4560 = vmatprep.subr.bf16.mxu0 0
    %4561 = vmatpush1.bf16.msra.mxu0 0
    %4562 = vmatprep.mubr.bf16.mxu0 0
    %4563 = vmatmul.mubr.bf16.gmra.mrb[0].mxu0 %v4528
    %v4564 = vpop.f32.mrb[0].mxu0
    %v4565 = vadd.f32 %v4518, %v4564
    %v4566 = vpop.f32.mrb[0].mxu0
    %v4567 = vpop.f32.mrb[0].mxu0
    %v4568 = vpop.f32.mrb[0].mxu0
    %4569 = vdwg.mxu0
    %vm4570 = vcmask 74752
    %4571 = vst.msk [vmem:[#allocation2] sm:$0x3] %vm4570, %v4565
    // Predicated region
    $region46: #{net_forward.1} parent=1 // pred_check
      _
    $region47: #{net_forward.1} parent=1 // pred_check_branch
      %4573 = sbr.rel (0) target = $region49
    $region48: #{net_forward.1} parent=1 // pred_region
      %s4575 = ssub.s32 32, 32
      %4576 = vsyncadd [#allocation3], %s4575
      %s4578 = sshll.u32 [#allocation2], 4
      %s4579 = int_to_ptr.vmem [resolvable:$true] %s4578
      %4581 = dma.vmem_to_hbm [thread:$0]  %s4579, 32, %s11, [#allocation3]
    $region49: #{net_forward.1} parent=1 // pred_fallthru
      _
    // Predicated region
    $region50: #{net_forward.1} parent=1 // pred_check
      _
    $region51: #{net_forward.1} parent=1 // pred_check_branch
      %4583 = sbr.rel (0) target = $region53
    $region52: #{net_forward.1} parent=1 // pred_region
      %4584 = dma.done [#allocation3], 32
    $region53: #{net_forward.1} parent=1 // pred_fallthru
      _
    %4585 = vsyncpa [#allocation3], 1

</llo_original>
